<compile_context>
chip_gen: v5e
topology: v5e:2x2
jax: 0.10.0
libtpu: 0.0.40
codegen_flags: <defaults>
</compile_context>

<pallas_src>
import functools

import numpy as np

import jax
import jax.numpy as jnp
from jax.experimental import pallas as pl
from jax.experimental.pallas import tpu as pltpu


# ----------------------------------------------------------------------------
# Kernel 1: fused CNN stack (per-image grid step, everything stays in VMEM)
# ----------------------------------------------------------------------------

def _cnn_kernel(n_tap2, n_tap3, pad,
                p1_ref, w1_ref, s1_ref, sh1_ref,
                g2_ref, w2_ref, s2_ref, sh2_ref,
                g3_ref, w3_ref, s3_ref, sh3_ref,
                out_ref):
    f32 = jnp.float32
    bf16 = jnp.bfloat16

    # conv1: im2col patches (precomputed outside) -> one MXU matmul + BN + ReLU.
    y1 = jnp.dot(p1_ref[0], w1_ref[...], preferred_element_type=f32)
    x1 = jnp.maximum(y1 * s1_ref[...] + sh1_ref[...], 0.0).astype(bf16)   # (64, 16)

    # conv2: constant 0/1 gather matrix builds tap-major, position-padded
    # im2col rows of x1 entirely in VMEM; then one small matmul per tap.
    cols2 = jnp.dot(g2_ref[...], x1, preferred_element_type=f32).astype(bf16)
    o2 = w2_ref.shape[-1]
    y2 = jnp.zeros((pad, o2), f32)
    for t in range(n_tap2):
        y2 = y2 + jnp.dot(cols2[t * pad:(t + 1) * pad, :], w2_ref[t],
                          preferred_element_type=f32)
    x2 = jnp.maximum(y2 * s2_ref[...] + sh2_ref[...], 0.0).astype(bf16)   # (pad, 32)

    # conv3: output spatial is 1x1; padded gather rows are exact zeros, so a
    # sublane-sum recovers row 0 without any unaligned value slicing.
    cols3 = jnp.dot(g3_ref[...], x2, preferred_element_type=f32).astype(bf16)
    o3 = w3_ref.shape[-1]
    y3 = jnp.zeros((pad, o3), f32)
    for t in range(n_tap3):
        y3 = y3 + jnp.dot(cols3[t * pad:(t + 1) * pad, :], w3_ref[t],
                          preferred_element_type=f32)
    y3 = jnp.sum(y3, axis=0, keepdims=True)                               # (1, 64)
    x3 = jnp.maximum(y3 * s3_ref[...] + sh3_ref[...], 0.0)
    out_ref[0] = x3.astype(out_ref.dtype)


def cnn_apply(cnn, patches):
    """patches: (N, P1, K1) bf16 -> (N, n_flatten) bf16."""
    N, P1, K1 = patches.shape
    assert P1 == cnn["g2"].shape[1]
    n_tap2 = cnn["w2"].shape[0]
    n_tap3 = cnn["w3"].shape[0]
    pad = cnn["pad"]
    O3 = cnn["w3"].shape[-1]

    zero2 = lambda n: (0, 0)
    zero3 = lambda n: (0, 0, 0)

    out = pl.pallas_call(
        functools.partial(_cnn_kernel, n_tap2, n_tap3, pad),
        out_shape=jax.ShapeDtypeStruct((N, 1, O3), jnp.bfloat16),
        grid=(N,),
        in_specs=[
            pl.BlockSpec((1, P1, K1), lambda n: (n, 0, 0)),
            pl.BlockSpec(cnn["w1"].shape, zero2),
            pl.BlockSpec(cnn["s1"].shape, zero2),
            pl.BlockSpec(cnn["sh1"].shape, zero2),
            pl.BlockSpec(cnn["g2"].shape, zero2),
            pl.BlockSpec(cnn["w2"].shape, zero3),
            pl.BlockSpec(cnn["s2"].shape, zero2),
            pl.BlockSpec(cnn["sh2"].shape, zero2),
            pl.BlockSpec(cnn["g3"].shape, zero2),
            pl.BlockSpec(cnn["w3"].shape, zero3),
            pl.BlockSpec(cnn["s3"].shape, zero2),
            pl.BlockSpec(cnn["sh3"].shape, zero2),
        ],
        out_specs=pl.BlockSpec((1, 1, O3), lambda n: (n, 0, 0)),
        compiler_params=pltpu.CompilerParams(
            dimension_semantics=("parallel",)),
    )(patches, cnn["w1"], cnn["s1"], cnn["sh1"],
      cnn["g2"], cnn["w2"], cnn["s2"], cnn["sh2"],
      cnn["g3"], cnn["w3"], cnn["s3"], cnn["sh3"])
    return out.reshape(N, O3)


# ----------------------------------------------------------------------------
# Kernel 2: 2-layer LSTM (fused gates, hoisted input projection) + fused head
# ----------------------------------------------------------------------------

def _lstm_head_kernel(T, H,
                      xT_ref, wih1_ref, whh1_ref, b1_ref,
                      wih2_ref, whh2_ref, b2_ref,
                      aT_ref, wx_ref, wa_ref, bh_ref, out_ref):
    f32 = jnp.float32
    bf16 = jnp.bfloat16
    B = xT_ref.shape[-1]

    whh1 = whh1_ref[...]
    whh2 = whh2_ref[...]

    def cell(xp_t, whh, h, c):
        # xp_t already holds the input projection + (b_ih + b_hh).
        gates = xp_t + jnp.dot(whh, h.astype(bf16), preferred_element_type=f32)  # (4H, B)
        i = jax.nn.sigmoid(gates[0 * H:1 * H, :])
        f = jax.nn.sigmoid(gates[1 * H:2 * H, :])
        g = jnp.tanh(gates[2 * H:3 * H, :])
        o = jax.nn.sigmoid(gates[3 * H:4 * H, :])
        c_new = f * c + i * g
        h_new = o * jnp.tanh(c_new)
        return h_new, c_new

    # Layer 1: input projection has no recurrence dependence -> hoisted.
    xp1 = [jnp.dot(wih1_ref[...], xT_ref[t], preferred_element_type=f32) + b1_ref[...]
           for t in range(T)]
    h = jnp.zeros((H, B), f32)
    c = jnp.zeros((H, B), f32)
    h1 = []
    for t in range(T):
        h, c = cell(xp1[t], whh1, h, c)
        h1.append(h)

    # TODO(synk): inter-layer LSTM dropout (p=0.1) is identity here (eval mode).
    xp2 = [jnp.dot(wih2_ref[...], h1[t].astype(bf16), preferred_element_type=f32)
           + b2_ref[...] for t in range(T)]
    h = jnp.zeros((H, B), f32)
    c = jnp.zeros((H, B), f32)
    for t in range(T):
        h, c = cell(xp2[t], whh2, h, c)
        # Fused head: relu -> dropout(identity) -> concat(action) -> Linear(.,1).
        feat = jnp.sum(jnp.maximum(h, 0.0) * wx_ref[...], axis=0, keepdims=True)  # (1, B)
        act = jnp.sum(aT_ref[t] * wa_ref[...], axis=0, keepdims=True)             # (1, B)
        out_ref[t] = feat + act + bh_ref[...]


def lstm_head_apply(params, xT, aT):
    T, _, B = xT.shape
    H = params["whh1"].shape[-1]
    return pl.pallas_call(
        functools.partial(_lstm_head_kernel, T, H),
        out_shape=jax.ShapeDtypeStruct((T, 1, B), jnp.float32),
    )(xT, params["wih1"], params["whh1"], params["b1"],
      params["wih2"], params["whh2"], params["b2"],
      aT, params["wx"], params["wa"], params["bh"])


# ----------------------------------------------------------------------------
# Plain-JAX glue
# ----------------------------------------------------------------------------

def forward(params, seq_observation, seq_action):
    """seq_observation: (batch, seq, C, H, W); seq_action: (batch, seq, n_action)."""
    batch, seq, C, H, W = seq_observation.shape
    N = batch * seq
    kh, kw, st = params["conv1_geom"]

    x = seq_observation.reshape(N, C, H, W).astype(jnp.bfloat16)
    # Single XLA op instead of a python loop of 64 strided slices.
    patches = jax.lax.conv_general_dilated_patches(
        x, filter_shape=(kh, kw), window_strides=(st, st), padding="VALID",
        dimension_numbers=("NCHW", "OIHW", "NCHW"))
    _, K1, Ho, Wo = patches.shape
    patches = jnp.transpose(patches, (0, 2, 3, 1)).reshape(N, Ho * Wo, K1)

    feats = cnn_apply(params["cnn"], patches)                # (N, 64) bf16

    # nn.LSTM(batch_first=False) fed a (batch, seq, feat) tensor: the time
    # recurrence runs over the *batch* axis, exactly as in the PyTorch module.
    T, B = batch, seq
    I = feats.shape[-1]
    xT = feats.reshape(T, B, I).transpose(0, 2, 1)           # (T, I, B) bf16
    aT = seq_action.astype(jnp.float32).transpose(0, 2, 1)   # (T, A, B) f32

    out = lstm_head_apply(params, xT, aT)                    # (T, 1, B)
    return out.reshape(T, B)[..., None]                      # (batch, seq, 1)


# ----------------------------------------------------------------------------
# Deterministic parameter construction
# ----------------------------------------------------------------------------

def _gather_matrix(in_h, in_w, in_rows, kh, kw, stride, pad):
    """0/1 matrix (kh*kw*pad, in_rows): row t*pad+p selects the row-major source
    row of the input activation feeding output position p through tap t."""
    oh = (in_h - kh) // stride + 1
    ow = (in_w - kw) // stride + 1
    assert oh * ow <= pad
    G = np.zeros((kh * kw * pad, in_rows), np.float32)
    for ky in range(kh):
        for kx in range(kw):
            t = ky * kw + kx
            for oy in range(oh):
                for ox in range(ow):
                    p = oy * ow + ox
                    r = (oy * stride + ky) * in_w + (ox * stride + kx)
                    G[t * pad + p, r] = 1.0
    return G


def init_params(key, observation_shape, n_action, features_dim):
    C, H, W = observation_shape
    conv_cfg = [
        dict(cin=C, cout=16, k=8, s=4),
        dict(cin=16, cout=32, k=4, s=2),
        dict(cin=32, cout=64, k=3, s=1),
    ]
    eps = 1e-5
    keys = jax.random.split(key, 24)
    ki = iter(range(24))

    def normal(shape, scale):
        return scale * jax.random.normal(keys[next(ki)], shape, dtype=jnp.float32)

    def bn_fold(conv_bias, cout):
        # BatchNorm eval stats: gamma=1, beta=0, running_mean=0, running_var=1.
        s = jnp.ones((cout,), jnp.float32) / jnp.sqrt(jnp.ones((cout,)) + eps)
        return s.reshape(1, cout), (conv_bias * s).reshape(1, cout)

    # conv weights in PyTorch (O, C, KH, KW) layout + spatial bookkeeping.
    spatial = [(H, W)]
    wraw, braw = [], []
    for cfg in conv_cfg:
        k, cin, cout = cfg["k"], cfg["cin"], cfg["cout"]
        fan_in = cin * k * k
        wraw.append(normal((cout, cin, k, k), 1.0 / float(np.sqrt(fan_in))))
        braw.append(normal((cout,), 1.0 / float(np.sqrt(fan_in))))
        h, w = spatial[-1]
        spatial.append(((h - k) // cfg["s"] + 1, (w - k) // cfg["s"] + 1))
    (H1, W1), (H2, W2), (H3, W3) = spatial[1], spatial[2], spatial[3]
    assert (H3, W3) == (1, 1), "fused CNN kernel assumes conv3 output is 1x1"

    PAD = 16                      # padded conv2 position count (bf16 sublane tile)
    assert H2 * W2 <= PAD and PAD % 16 == 0

    # conv1: im2col matmul weight, rows ordered (c, ky, kx) to match
    # lax.conv_general_dilated_patches output.
    w1_mat = wraw[0].reshape(conv_cfg[0]["cout"], -1).T.astype(jnp.bfloat16)
    s1, sh1 = bn_fold(braw[0], conv_cfg[0]["cout"])

    # conv2 / conv3: per-tap weight stacks (taps, Cin, Cout) + gather matrices.
    w2_stack = jnp.transpose(wraw[1], (2, 3, 1, 0)).reshape(
        conv_cfg[1]["k"] ** 2, conv_cfg[1]["cin"], conv_cfg[1]["cout"]).astype(jnp.bfloat16)
    s2, sh2 = bn_fold(braw[1], conv_cfg[1]["cout"])
    g2 = jnp.asarray(_gather_matrix(H1, W1, H1 * W1, conv_cfg[1]["k"],
                                    conv_cfg[1]["k"], conv_cfg[1]["s"], PAD),
                     dtype=jnp.bfloat16)

    w3_stack = jnp.transpose(wraw[2], (2, 3, 1, 0)).reshape(
        conv_cfg[2]["k"] ** 2, conv_cfg[2]["cin"], conv_cfg[2]["cout"]).astype(jnp.bfloat16)
    s3, sh3 = bn_fold(braw[2], conv_cfg[2]["cout"])
    g3 = jnp.asarray(_gather_matrix(H2, W2, PAD, conv_cfg[2]["k"],
                                    conv_cfg[2]["k"], conv_cfg[2]["s"], PAD),
                     dtype=jnp.bfloat16)

    cnn = dict(w1=w1_mat, s1=s1, sh1=sh1,
               g2=g2, w2=w2_stack, s2=s2, sh2=sh2,
               g3=g3, w3=w3_stack, s3=s3, sh3=sh3, pad=PAD)
    n_flatten = conv_cfg[2]["cout"] * H3 * W3

    # 2-layer LSTM (PyTorch gate order i, f, g, o), fused (4H, .) gate weights.
    Hd = features_dim
    lstm = {}
    in_dim = n_flatten
    for layer in (1, 2):
        sc = 1.0 / float(np.sqrt(Hd))
        w_ih = normal((4 * Hd, in_dim), sc)
        w_hh = normal((4 * Hd, Hd), sc)
        b_ih = normal((4 * Hd,), sc)
        b_hh = normal((4 * Hd,), sc)
        lstm[f"wih{layer}"] = w_ih.astype(jnp.bfloat16)       # (4H, I)
        lstm[f"whh{layer}"] = w_hh.astype(jnp.bfloat16)       # (4H, H)
        lstm[f"b{layer}"] = (b_ih + b_hh).reshape(4 * Hd, 1)  # (4H, 1) f32
        in_dim = Hd

    # Output Linear(features_dim + n_action, 1), fused into the LSTM kernel.
    fan = features_dim + n_action
    w_out = normal((1, fan), 1.0 / float(np.sqrt(fan)))
    b_out = normal((1, 1), 1.0 / float(np.sqrt(fan)))

    params = dict(cnn=cnn,
                  conv1_geom=(conv_cfg[0]["k"], conv_cfg[0]["k"], conv_cfg[0]["s"]),
                  wx=w_out[:, :features_dim].T,    # (H, 1)
                  wa=w_out[:, features_dim:].T,    # (n_action, 1)
                  bh=b_out,                        # (1, 1)
                  **lstm)
    return params, n_flatten


# ----------------------------------------------------------------------------
# Main
# ----------------------------------------------------------------------------

if __name__ == "__main__":
    observation_shape = (4, 36, 36)   # (C, H, W): 36x36 -> 8x8 -> 3x3 -> 1x1
    n_action = 6
    features_dim = 32                 # 4H = 128 = one lane-tile of fused gates
    batch, seq = 2, 4

    key = jax.random.PRNGKey(0)
    kp, kobs, kact = jax.random.split(key, 3)

    params, n_flatten = init_params(kp, observation_shape, n_action, features_dim)

    seq_observation = jax.random.normal(
        kobs, (batch, seq) + observation_shape, dtype=jnp.float32)
    seq_action = jax.random.normal(
        kact, (batch, seq, n_action), dtype=jnp.float32)

    fwd = jax.jit(functools.partial(forward, params))
    out = fwd(seq_observation, seq_action)
    out = jax.block_until_ready(out)

    assert out.shape == (batch, seq, 1), out.shape
    assert bool(jnp.all(jnp.isfinite(out)))
    print("KERNEL_OK")
</pallas_src>

<mosaic_0001>
module attributes {stable_mosaic.version = 11 : i64} {
  func.func @_lstm_head_kernel(%arg0: memref<2x64x4xbf16, #tpu.memory_space<vmem>>, %arg1: memref<128x64xbf16, #tpu.memory_space<vmem>>, %arg2: memref<128x32xbf16, #tpu.memory_space<vmem>>, %arg3: memref<128x1xf32, #tpu.memory_space<vmem>>, %arg4: memref<128x32xbf16, #tpu.memory_space<vmem>>, %arg5: memref<128x32xbf16, #tpu.memory_space<vmem>>, %arg6: memref<128x1xf32, #tpu.memory_space<vmem>>, %arg7: memref<2x6x4xf32, #tpu.memory_space<vmem>>, %arg8: memref<32x1xf32, #tpu.memory_space<vmem>>, %arg9: memref<6x1xf32, #tpu.memory_space<vmem>>, %arg10: memref<1x1xf32, #tpu.memory_space<vmem>>, %arg11: memref<2x1x4xf32, #tpu.memory_space<vmem>>) attributes {dimension_semantics = [], scalar_prefetch = 0 : i64, scratch_operands = 0 : i64, tpu.core_type = #tpu.core_type<tc>} {
    %c0 = arith.constant 0 : index
    %c0_0 = arith.constant 0 : index
    %0 = vector.load %arg2[%c0, %c0_0] : memref<128x32xbf16, #tpu.memory_space<vmem>>, vector<128x32xbf16>
    %c0_1 = arith.constant 0 : index
    %c0_2 = arith.constant 0 : index
    %1 = vector.load %arg5[%c0_1, %c0_2] : memref<128x32xbf16, #tpu.memory_space<vmem>>, vector<128x32xbf16>
    %c0_3 = arith.constant 0 : index
    %c0_4 = arith.constant 0 : index
    %2 = vector.load %arg1[%c0_3, %c0_4] : memref<128x64xbf16, #tpu.memory_space<vmem>>, vector<128x64xbf16>
    %c0_5 = arith.constant 0 : index
    %c0_6 = arith.constant 0 : index
    %c0_7 = arith.constant 0 : index
    %3 = vector.load %arg0[%c0_5, %c0_6, %c0_7] : memref<2x64x4xbf16, #tpu.memory_space<vmem>>, vector<1x64x4xbf16>
    %4 = vector.shape_cast %3 : vector<1x64x4xbf16> to vector<64x4xbf16>
    %cst = arith.constant dense<0.000000e+00> : vector<128x4xf32>
    %5 = tpu.matmul %2, %4, %cst {dimension_numbers = #tpu.dot_dimension_numbers<[1], [0], [0], [1], [0, 0, 1, 1], [], []>} : vector<128x64xbf16>, vector<64x4xbf16>, vector<128x4xf32> -> vector<128x4xf32>
    %c0_8 = arith.constant 0 : index
    %c0_9 = arith.constant 0 : index
    %6 = vector.load %arg3[%c0_8, %c0_9] : memref<128x1xf32, #tpu.memory_space<vmem>>, vector<128x1xf32>
    %7 = vector.broadcast %6 : vector<128x1xf32> to vector<128x4xf32>
    %8 = arith.addf %5, %7 : vector<128x4xf32>
    %c0_10 = arith.constant 0 : index
    %c0_11 = arith.constant 0 : index
    %9 = vector.load %arg1[%c0_10, %c0_11] : memref<128x64xbf16, #tpu.memory_space<vmem>>, vector<128x64xbf16>
    %c1 = arith.constant 1 : index
    %c0_12 = arith.constant 0 : index
    %c0_13 = arith.constant 0 : index
    %10 = vector.load %arg0[%c1, %c0_12, %c0_13] : memref<2x64x4xbf16, #tpu.memory_space<vmem>>, vector<1x64x4xbf16>
    %11 = vector.shape_cast %10 : vector<1x64x4xbf16> to vector<64x4xbf16>
    %cst_14 = arith.constant dense<0.000000e+00> : vector<128x4xf32>
    %12 = tpu.matmul %9, %11, %cst_14 {dimension_numbers = #tpu.dot_dimension_numbers<[1], [0], [0], [1], [0, 0, 1, 1], [], []>} : vector<128x64xbf16>, vector<64x4xbf16>, vector<128x4xf32> -> vector<128x4xf32>
    %c0_15 = arith.constant 0 : index
    %c0_16 = arith.constant 0 : index
    %13 = vector.load %arg3[%c0_15, %c0_16] : memref<128x1xf32, #tpu.memory_space<vmem>>, vector<128x1xf32>
    %14 = vector.broadcast %13 : vector<128x1xf32> to vector<128x4xf32>
    %15 = arith.addf %12, %14 : vector<128x4xf32>
    %cst_17 = arith.constant 0.000000e+00 : f32
    %16 = vector.broadcast %cst_17 : f32 to vector<32x4xf32>
    %cst_18 = arith.constant 0.000000e+00 : f32
    %17 = vector.broadcast %cst_18 : f32 to vector<32x4xf32>
    %18 = arith.truncf %16 : vector<32x4xf32> to vector<32x4xbf16>
    %cst_19 = arith.constant dense<0.000000e+00> : vector<128x4xf32>
    %19 = tpu.matmul %0, %18, %cst_19 {dimension_numbers = #tpu.dot_dimension_numbers<[1], [0], [0], [1], [0, 0, 1, 1], [], []>} : vector<128x32xbf16>, vector<32x4xbf16>, vector<128x4xf32> -> vector<128x4xf32>
    %20 = arith.addf %8, %19 : vector<128x4xf32>
    %21 = vector.extract_strided_slice %20 {offsets = [0, 0], sizes = [32, 4], strides = [1, 1]} : vector<128x4xf32> to vector<32x4xf32>
    %22 = arith.negf %21 : vector<32x4xf32>
    %23 = math.exp %22 : vector<32x4xf32>
    %cst_20 = arith.constant 1.000000e+00 : f32
    %24 = vector.broadcast %cst_20 : f32 to vector<32x4xf32>
    %25 = arith.addf %24, %23 : vector<32x4xf32>
    %26 = arith.divf %24, %25 : vector<32x4xf32>
    %27 = vector.extract_strided_slice %20 {offsets = [32, 0], sizes = [32, 4], strides = [1, 1]} : vector<128x4xf32> to vector<32x4xf32>
    %28 = arith.negf %27 : vector<32x4xf32>
    %29 = math.exp %28 : vector<32x4xf32>
    %cst_21 = arith.constant 1.000000e+00 : f32
    %30 = vector.broadcast %cst_21 : f32 to vector<32x4xf32>
    %31 = arith.addf %30, %29 : vector<32x4xf32>
    %32 = arith.divf %30, %31 : vector<32x4xf32>
    %33 = vector.extract_strided_slice %20 {offsets = [64, 0], sizes = [32, 4], strides = [1, 1]} : vector<128x4xf32> to vector<32x4xf32>
    %34 = math.tanh %33 : vector<32x4xf32>
    %35 = vector.extract_strided_slice %20 {offsets = [96, 0], sizes = [32, 4], strides = [1, 1]} : vector<128x4xf32> to vector<32x4xf32>
    %36 = arith.negf %35 : vector<32x4xf32>
    %37 = math.exp %36 : vector<32x4xf32>
    %cst_22 = arith.constant 1.000000e+00 : f32
    %38 = vector.broadcast %cst_22 : f32 to vector<32x4xf32>
    %39 = arith.addf %38, %37 : vector<32x4xf32>
    %40 = arith.divf %38, %39 : vector<32x4xf32>
    %41 = arith.mulf %32, %17 : vector<32x4xf32>
    %42 = arith.mulf %26, %34 : vector<32x4xf32>
    %43 = arith.addf %41, %42 : vector<32x4xf32>
    %44 = math.tanh %43 : vector<32x4xf32>
    %45 = arith.mulf %40, %44 : vector<32x4xf32>
    %46 = arith.truncf %45 : vector<32x4xf32> to vector<32x4xbf16>
    %cst_23 = arith.constant dense<0.000000e+00> : vector<128x4xf32>
    %47 = tpu.matmul %0, %46, %cst_23 {dimension_numbers = #tpu.dot_dimension_numbers<[1], [0], [0], [1], [0, 0, 1, 1], [], []>} : vector<128x32xbf16>, vector<32x4xbf16>, vector<128x4xf32> -> vector<128x4xf32>
    %48 = arith.addf %15, %47 : vector<128x4xf32>
    %49 = vector.extract_strided_slice %48 {offsets = [0, 0], sizes = [32, 4], strides = [1, 1]} : vector<128x4xf32> to vector<32x4xf32>
    %50 = arith.negf %49 : vector<32x4xf32>
    %51 = math.exp %50 : vector<32x4xf32>
    %cst_24 = arith.constant 1.000000e+00 : f32
    %52 = vector.broadcast %cst_24 : f32 to vector<32x4xf32>
    %53 = arith.addf %52, %51 : vector<32x4xf32>
    %54 = arith.divf %52, %53 : vector<32x4xf32>
    %55 = vector.extract_strided_slice %48 {offsets = [32, 0], sizes = [32, 4], strides = [1, 1]} : vector<128x4xf32> to vector<32x4xf32>
    %56 = arith.negf %55 : vector<32x4xf32>
    %57 = math.exp %56 : vector<32x4xf32>
    %cst_25 = arith.constant 1.000000e+00 : f32
    %58 = vector.broadcast %cst_25 : f32 to vector<32x4xf32>
    %59 = arith.addf %58, %57 : vector<32x4xf32>
    %60 = arith.divf %58, %59 : vector<32x4xf32>
    %61 = vector.extract_strided_slice %48 {offsets = [64, 0], sizes = [32, 4], strides = [1, 1]} : vector<128x4xf32> to vector<32x4xf32>
    %62 = math.tanh %61 : vector<32x4xf32>
    %63 = vector.extract_strided_slice %48 {offsets = [96, 0], sizes = [32, 4], strides = [1, 1]} : vector<128x4xf32> to vector<32x4xf32>
    %64 = arith.negf %63 : vector<32x4xf32>
    %65 = math.exp %64 : vector<32x4xf32>
    %cst_26 = arith.constant 1.000000e+00 : f32
    %66 = vector.broadcast %cst_26 : f32 to vector<32x4xf32>
    %67 = arith.addf %66, %65 : vector<32x4xf32>
    %68 = arith.divf %66, %67 : vector<32x4xf32>
    %69 = arith.mulf %60, %43 : vector<32x4xf32>
    %70 = arith.mulf %54, %62 : vector<32x4xf32>
    %71 = arith.addf %69, %70 : vector<32x4xf32>
    %72 = math.tanh %71 : vector<32x4xf32>
    %73 = arith.mulf %68, %72 : vector<32x4xf32>
    %c0_27 = arith.constant 0 : index
    %c0_28 = arith.constant 0 : index
    %74 = vector.load %arg4[%c0_27, %c0_28] : memref<128x32xbf16, #tpu.memory_space<vmem>>, vector<128x32xbf16>
    %75 = arith.truncf %45 : vector<32x4xf32> to vector<32x4xbf16>
    %cst_29 = arith.constant dense<0.000000e+00> : vector<128x4xf32>
    %76 = tpu.matmul %74, %75, %cst_29 {dimension_numbers = #tpu.dot_dimension_numbers<[1], [0], [0], [1], [0, 0, 1, 1], [], []>} : vector<128x32xbf16>, vector<32x4xbf16>, vector<128x4xf32> -> vector<128x4xf32>
    %c0_30 = arith.constant 0 : index
    %c0_31 = arith.constant 0 : index
    %77 = vector.load %arg6[%c0_30, %c0_31] : memref<128x1xf32, #tpu.memory_space<vmem>>, vector<128x1xf32>
    %78 = vector.broadcast %77 : vector<128x1xf32> to vector<128x4xf32>
    %79 = arith.addf %76, %78 : vector<128x4xf32>
    %c0_32 = arith.constant 0 : index
    %c0_33 = arith.constant 0 : index
    %80 = vector.load %arg4[%c0_32, %c0_33] : memref<128x32xbf16, #tpu.memory_space<vmem>>, vector<128x32xbf16>
    %81 = arith.truncf %73 : vector<32x4xf32> to vector<32x4xbf16>
    %cst_34 = arith.constant dense<0.000000e+00> : vector<128x4xf32>
    %82 = tpu.matmul %80, %81, %cst_34 {dimension_numbers = #tpu.dot_dimension_numbers<[1], [0], [0], [1], [0, 0, 1, 1], [], []>} : vector<128x32xbf16>, vector<32x4xbf16>, vector<128x4xf32> -> vector<128x4xf32>
    %c0_35 = arith.constant 0 : index
    %c0_36 = arith.constant 0 : index
    %83 = vector.load %arg6[%c0_35, %c0_36] : memref<128x1xf32, #tpu.memory_space<vmem>>, vector<128x1xf32>
    %84 = vector.broadcast %83 : vector<128x1xf32> to vector<128x4xf32>
    %85 = arith.addf %82, %84 : vector<128x4xf32>
    %cst_37 = arith.constant 0.000000e+00 : f32
    %86 = vector.broadcast %cst_37 : f32 to vector<32x4xf32>
    %cst_38 = arith.constant 0.000000e+00 : f32
    %87 = vector.broadcast %cst_38 : f32 to vector<32x4xf32>
    %88 = arith.truncf %86 : vector<32x4xf32> to vector<32x4xbf16>
    %cst_39 = arith.constant dense<0.000000e+00> : vector<128x4xf32>
    %89 = tpu.matmul %1, %88, %cst_39 {dimension_numbers = #tpu.dot_dimension_numbers<[1], [0], [0], [1], [0, 0, 1, 1], [], []>} : vector<128x32xbf16>, vector<32x4xbf16>, vector<128x4xf32> -> vector<128x4xf32>
    %90 = arith.addf %79, %89 : vector<128x4xf32>
    %91 = vector.extract_strided_slice %90 {offsets = [0, 0], sizes = [32, 4], strides = [1, 1]} : vector<128x4xf32> to vector<32x4xf32>
    %92 = arith.negf %91 : vector<32x4xf32>
    %93 = math.exp %92 : vector<32x4xf32>
    %cst_40 = arith.constant 1.000000e+00 : f32
    %94 = vector.broadcast %cst_40 : f32 to vector<32x4xf32>
    %95 = arith.addf %94, %93 : vector<32x4xf32>
    %96 = arith.divf %94, %95 : vector<32x4xf32>
    %97 = vector.extract_strided_slice %90 {offsets = [32, 0], sizes = [32, 4], strides = [1, 1]} : vector<128x4xf32> to vector<32x4xf32>
    %98 = arith.negf %97 : vector<32x4xf32>
    %99 = math.exp %98 : vector<32x4xf32>
    %cst_41 = arith.constant 1.000000e+00 : f32
    %100 = vector.broadcast %cst_41 : f32 to vector<32x4xf32>
    %101 = arith.addf %100, %99 : vector<32x4xf32>
    %102 = arith.divf %100, %101 : vector<32x4xf32>
    %103 = vector.extract_strided_slice %90 {offsets = [64, 0], sizes = [32, 4], strides = [1, 1]} : vector<128x4xf32> to vector<32x4xf32>
    %104 = math.tanh %103 : vector<32x4xf32>
    %105 = vector.extract_strided_slice %90 {offsets = [96, 0], sizes = [32, 4], strides = [1, 1]} : vector<128x4xf32> to vector<32x4xf32>
    %106 = arith.negf %105 : vector<32x4xf32>
    %107 = math.exp %106 : vector<32x4xf32>
    %cst_42 = arith.constant 1.000000e+00 : f32
    %108 = vector.broadcast %cst_42 : f32 to vector<32x4xf32>
    %109 = arith.addf %108, %107 : vector<32x4xf32>
    %110 = arith.divf %108, %109 : vector<32x4xf32>
    %111 = arith.mulf %102, %87 : vector<32x4xf32>
    %112 = arith.mulf %96, %104 : vector<32x4xf32>
    %113 = arith.addf %111, %112 : vector<32x4xf32>
    %114 = math.tanh %113 : vector<32x4xf32>
    %115 = arith.mulf %110, %114 : vector<32x4xf32>
    %cst_43 = arith.constant 0.000000e+00 : f32
    %116 = vector.broadcast %cst_43 : f32 to vector<32x4xf32>
    %117 = arith.maximumf %115, %116 : vector<32x4xf32>
    %c0_44 = arith.constant 0 : index
    %c0_45 = arith.constant 0 : index
    %118 = vector.load %arg8[%c0_44, %c0_45] : memref<32x1xf32, #tpu.memory_space<vmem>>, vector<32x1xf32>
    %119 = vector.broadcast %118 : vector<32x1xf32> to vector<32x4xf32>
    %120 = arith.mulf %117, %119 : vector<32x4xf32>
    %cst_46 = arith.constant dense<0.000000e+00> : vector<4xf32>
    %121 = vector.multi_reduction <add>, %120, %cst_46 [0] : vector<32x4xf32> to vector<4xf32>
    %122 = vector.shape_cast %121 : vector<4xf32> to vector<1x4xf32>
    %c0_47 = arith.constant 0 : index
    %c0_48 = arith.constant 0 : index
    %c0_49 = arith.constant 0 : index
    %123 = vector.load %arg7[%c0_47, %c0_48, %c0_49] : memref<2x6x4xf32, #tpu.memory_space<vmem>>, vector<1x6x4xf32>
    %124 = vector.shape_cast %123 : vector<1x6x4xf32> to vector<6x4xf32>
    %c0_50 = arith.constant 0 : index
    %c0_51 = arith.constant 0 : index
    %125 = vector.load %arg9[%c0_50, %c0_51] : memref<6x1xf32, #tpu.memory_space<vmem>>, vector<6x1xf32>
    %126 = vector.broadcast %125 : vector<6x1xf32> to vector<6x4xf32>
    %127 = arith.mulf %124, %126 : vector<6x4xf32>
    %cst_52 = arith.constant dense<0.000000e+00> : vector<4xf32>
    %128 = vector.multi_reduction <add>, %127, %cst_52 [0] : vector<6x4xf32> to vector<4xf32>
    %129 = vector.shape_cast %128 : vector<4xf32> to vector<1x4xf32>
    %130 = arith.addf %122, %129 : vector<1x4xf32>
    %c0_53 = arith.constant 0 : index
    %c0_54 = arith.constant 0 : index
    %131 = vector.load %arg10[%c0_53, %c0_54] : memref<1x1xf32, #tpu.memory_space<vmem>>, vector<1x1xf32>
    %132 = vector.broadcast %131 : vector<1x1xf32> to vector<1x4xf32>
    %133 = arith.addf %130, %132 : vector<1x4xf32>
    %c0_55 = arith.constant 0 : index
    %c0_56 = arith.constant 0 : index
    %c0_57 = arith.constant 0 : index
    %134 = vector.load %arg11[%c0_55, %c0_56, %c0_57] : memref<2x1x4xf32, #tpu.memory_space<vmem>>, vector<1x1x4xf32>
    %135 = vector.shape_cast %134 : vector<1x1x4xf32> to vector<1x4xf32>
    %136 = vector.shape_cast %133 : vector<1x4xf32> to vector<1x1x4xf32>
    tpu.vector_store %arg11[%c0_55, %c0_56, %c0_57], %136 {strides = array<i32>} : memref<2x1x4xf32, #tpu.memory_space<vmem>>, vector<1x1x4xf32>,
    %137 = arith.truncf %115 : vector<32x4xf32> to vector<32x4xbf16>
    %cst_58 = arith.constant dense<0.000000e+00> : vector<128x4xf32>
    %138 = tpu.matmul %1, %137, %cst_58 {dimension_numbers = #tpu.dot_dimension_numbers<[1], [0], [0], [1], [0, 0, 1, 1], [], []>} : vector<128x32xbf16>, vector<32x4xbf16>, vector<128x4xf32> -> vector<128x4xf32>
    %139 = arith.addf %85, %138 : vector<128x4xf32>
    %140 = vector.extract_strided_slice %139 {offsets = [0, 0], sizes = [32, 4], strides = [1, 1]} : vector<128x4xf32> to vector<32x4xf32>
    %141 = arith.negf %140 : vector<32x4xf32>
    %142 = math.exp %141 : vector<32x4xf32>
    %cst_59 = arith.constant 1.000000e+00 : f32
    %143 = vector.broadcast %cst_59 : f32 to vector<32x4xf32>
    %144 = arith.addf %143, %142 : vector<32x4xf32>
    %145 = arith.divf %143, %144 : vector<32x4xf32>
    %146 = vector.extract_strided_slice %139 {offsets = [32, 0], sizes = [32, 4], strides = [1, 1]} : vector<128x4xf32> to vector<32x4xf32>
    %147 = arith.negf %146 : vector<32x4xf32>
    %148 = math.exp %147 : vector<32x4xf32>
    %cst_60 = arith.constant 1.000000e+00 : f32
    %149 = vector.broadcast %cst_60 : f32 to vector<32x4xf32>
    %150 = arith.addf %149, %148 : vector<32x4xf32>
    %151 = arith.divf %149, %150 : vector<32x4xf32>
    %152 = vector.extract_strided_slice %139 {offsets = [64, 0], sizes = [32, 4], strides = [1, 1]} : vector<128x4xf32> to vector<32x4xf32>
    %153 = math.tanh %152 : vector<32x4xf32>
    %154 = vector.extract_strided_slice %139 {offsets = [96, 0], sizes = [32, 4], strides = [1, 1]} : vector<128x4xf32> to vector<32x4xf32>
    %155 = arith.negf %154 : vector<32x4xf32>
    %156 = math.exp %155 : vector<32x4xf32>
    %cst_61 = arith.constant 1.000000e+00 : f32
    %157 = vector.broadcast %cst_61 : f32 to vector<32x4xf32>
    %158 = arith.addf %157, %156 : vector<32x4xf32>
    %159 = arith.divf %157, %158 : vector<32x4xf32>
    %160 = arith.mulf %151, %113 : vector<32x4xf32>
    %161 = arith.mulf %145, %153 : vector<32x4xf32>
    %162 = arith.addf %160, %161 : vector<32x4xf32>
    %163 = math.tanh %162 : vector<32x4xf32>
    %164 = arith.mulf %159, %163 : vector<32x4xf32>
    %cst_62 = arith.constant 0.000000e+00 : f32
    %165 = vector.broadcast %cst_62 : f32 to vector<32x4xf32>
    %166 = arith.maximumf %164, %165 : vector<32x4xf32>
    %c0_63 = arith.constant 0 : index
    %c0_64 = arith.constant 0 : index
    %167 = vector.load %arg8[%c0_63, %c0_64] : memref<32x1xf32, #tpu.memory_space<vmem>>, vector<32x1xf32>
    %168 = vector.broadcast %167 : vector<32x1xf32> to vector<32x4xf32>
    %169 = arith.mulf %166, %168 : vector<32x4xf32>
    %cst_65 = arith.constant dense<0.000000e+00> : vector<4xf32>
    %170 = vector.multi_reduction <add>, %169, %cst_65 [0] : vector<32x4xf32> to vector<4xf32>
    %171 = vector.shape_cast %170 : vector<4xf32> to vector<1x4xf32>
    %c1_66 = arith.constant 1 : index
    %c0_67 = arith.constant 0 : index
    %c0_68 = arith.constant 0 : index
    %172 = vector.load %arg7[%c1_66, %c0_67, %c0_68] : memref<2x6x4xf32, #tpu.memory_space<vmem>>, vector<1x6x4xf32>
    %173 = vector.shape_cast %172 : vector<1x6x4xf32> to vector<6x4xf32>
    %c0_69 = arith.constant 0 : index
    %c0_70 = arith.constant 0 : index
    %174 = vector.load %arg9[%c0_69, %c0_70] : memref<6x1xf32, #tpu.memory_space<vmem>>, vector<6x1xf32>
    %175 = vector.broadcast %174 : vector<6x1xf32> to vector<6x4xf32>
    %176 = arith.mulf %173, %175 : vector<6x4xf32>
    %cst_71 = arith.constant dense<0.000000e+00> : vector<4xf32>
    %177 = vector.multi_reduction <add>, %176, %cst_71 [0] : vector<6x4xf32> to vector<4xf32>
    %178 = vector.shape_cast %177 : vector<4xf32> to vector<1x4xf32>
    %179 = arith.addf %171, %178 : vector<1x4xf32>
    %c0_72 = arith.constant 0 : index
    %c0_73 = arith.constant 0 : index
    %180 = vector.load %arg10[%c0_72, %c0_73] : memref<1x1xf32, #tpu.memory_space<vmem>>, vector<1x1xf32>
    %181 = vector.broadcast %180 : vector<1x1xf32> to vector<1x4xf32>
    %182 = arith.addf %179, %181 : vector<1x4xf32>
    %c1_74 = arith.constant 1 : index
    %c0_75 = arith.constant 0 : index
    %c0_76 = arith.constant 0 : index
    %183 = vector.load %arg11[%c1_74, %c0_75, %c0_76] : memref<2x1x4xf32, #tpu.memory_space<vmem>>, vector<1x1x4xf32>
    %184 = vector.shape_cast %183 : vector<1x1x4xf32> to vector<1x4xf32>
    %185 = vector.shape_cast %182 : vector<1x4xf32> to vector<1x1x4xf32>
    tpu.vector_store %arg11[%c1_74, %c0_75, %c0_76], %185 {strides = array<i32>} : memref<2x1x4xf32, #tpu.memory_space<vmem>>, vector<1x1x4xf32>,
    return
  }
}

module attributes {stable_mosaic.version = 11 : i64} {
  func.func @_cnn_kernel(%arg0: i32, %arg1: memref<1x64x256xbf16, #tpu.memory_space<vmem>>, %arg2: memref<256x16xbf16, #tpu.memory_space<vmem>>, %arg3: memref<1x16xf32, #tpu.memory_space<vmem>>, %arg4: memref<1x16xf32, #tpu.memory_space<vmem>>, %arg5: memref<256x64xbf16, #tpu.memory_space<vmem>>, %arg6: memref<16x16x32xbf16, #tpu.memory_space<vmem>>, %arg7: memref<1x32xf32, #tpu.memory_space<vmem>>, %arg8: memref<1x32xf32, #tpu.memory_space<vmem>>, %arg9: memref<144x16xbf16, #tpu.memory_space<vmem>>, %arg10: memref<9x32x64xbf16, #tpu.memory_space<vmem>>, %arg11: memref<1x64xf32, #tpu.memory_space<vmem>>, %arg12: memref<1x64xf32, #tpu.memory_space<vmem>>, %arg13: memref<1x1x64xbf16, #tpu.memory_space<vmem>>) attributes {dimension_semantics = [#tpu.dimension_semantics<parallel>], iteration_bounds = array<i64: 8>, scalar_prefetch = 0 : i64, scratch_operands = 0 : i64, tpu.core_type = #tpu.core_type<tc>, window_params = [{transform_indices = @transform_0, window_bounds = array<i64: 1, 64, 256>}, {pipeline_mode = #tpu.pipeline_mode<synchronous>, transform_indices = @transform_1, window_bounds = array<i64: 256, 16>}, {pipeline_mode = #tpu.pipeline_mode<synchronous>, transform_indices = @transform_2, window_bounds = array<i64: 1, 16>}, {pipeline_mode = #tpu.pipeline_mode<synchronous>, transform_indices = @transform_3, window_bounds = array<i64: 1, 16>}, {pipeline_mode = #tpu.pipeline_mode<synchronous>, transform_indices = @transform_4, window_bounds = array<i64: 256, 64>}, {pipeline_mode = #tpu.pipeline_mode<synchronous>, transform_indices = @transform_5, window_bounds = array<i64: 16, 16, 32>}, {pipeline_mode = #tpu.pipeline_mode<synchronous>, transform_indices = @transform_6, window_bounds = array<i64: 1, 32>}, {pipeline_mode = #tpu.pipeline_mode<synchronous>, transform_indices = @transform_7, window_bounds = array<i64: 1, 32>}, {pipeline_mode = #tpu.pipeline_mode<synchronous>, transform_indices = @transform_8, window_bounds = array<i64: 144, 16>}, {pipeline_mode = #tpu.pipeline_mode<synchronous>, transform_indices = @transform_9, window_bounds = array<i64: 9, 32, 64>}, {pipeline_mode = #tpu.pipeline_mode<synchronous>, transform_indices = @transform_10, window_bounds = array<i64: 1, 64>}, {pipeline_mode = #tpu.pipeline_mode<synchronous>, transform_indices = @transform_11, window_bounds = array<i64: 1, 64>}, {transform_indices = @transform_12, window_bounds = array<i64: 1, 1, 64>}]} {
    %c0 = arith.constant 0 : index
    %c0_0 = arith.constant 0 : index
    %c0_1 = arith.constant 0 : index
    %0 = vector.load %arg1[%c0, %c0_0, %c0_1] : memref<1x64x256xbf16, #tpu.memory_space<vmem>>, vector<1x64x256xbf16>
    %1 = vector.shape_cast %0 : vector<1x64x256xbf16> to vector<64x256xbf16>
    %c0_2 = arith.constant 0 : index
    %c0_3 = arith.constant 0 : index
    %2 = vector.load %arg2[%c0_2, %c0_3] : memref<256x16xbf16, #tpu.memory_space<vmem>>, vector<256x16xbf16>
    %cst = arith.constant dense<0.000000e+00> : vector<64x16xf32>
    %3 = tpu.matmul %1, %2, %cst {dimension_numbers = #tpu.dot_dimension_numbers<[1], [0], [0], [1], [0, 0, 1, 1], [], []>} : vector<64x256xbf16>, vector<256x16xbf16>, vector<64x16xf32> -> vector<64x16xf32>
    %c0_4 = arith.constant 0 : index
    %c0_5 = arith.constant 0 : index
    %4 = vector.load %arg3[%c0_4, %c0_5] : memref<1x16xf32, #tpu.memory_space<vmem>>, vector<1x16xf32>
    %5 = vector.broadcast %4 : vector<1x16xf32> to vector<64x16xf32>
    %6 = arith.mulf %3, %5 : vector<64x16xf32>
    %c0_6 = arith.constant 0 : index
    %c0_7 = arith.constant 0 : index
    %7 = vector.load %arg4[%c0_6, %c0_7] : memref<1x16xf32, #tpu.memory_space<vmem>>, vector<1x16xf32>
    %8 = vector.broadcast %7 : vector<1x16xf32> to vector<64x16xf32>
    %9 = arith.addf %6, %8 : vector<64x16xf32>
    %cst_8 = arith.constant 0.000000e+00 : f32
    %10 = vector.broadcast %cst_8 : f32 to vector<64x16xf32>
    %11 = arith.maximumf %9, %10 : vector<64x16xf32>
    %12 = arith.truncf %11 : vector<64x16xf32> to vector<64x16xbf16>
    %c0_9 = arith.constant 0 : index
    %c0_10 = arith.constant 0 : index
    %13 = vector.load %arg5[%c0_9, %c0_10] : memref<256x64xbf16, #tpu.memory_space<vmem>>, vector<256x64xbf16>
    %cst_11 = arith.constant dense<0.000000e+00> : vector<256x16xf32>
    %14 = tpu.matmul %13, %12, %cst_11 {dimension_numbers = #tpu.dot_dimension_numbers<[1], [0], [0], [1], [0, 0, 1, 1], [], []>} : vector<256x64xbf16>, vector<64x16xbf16>, vector<256x16xf32> -> vector<256x16xf32>
    %15 = arith.truncf %14 : vector<256x16xf32> to vector<256x16xbf16>
    %cst_12 = arith.constant 0.000000e+00 : f32
    %16 = vector.broadcast %cst_12 : f32 to vector<16x32xf32>
    %17 = vector.extract_strided_slice %15 {offsets = [0, 0], sizes = [16, 16], strides = [1, 1]} : vector<256x16xbf16> to vector<16x16xbf16>
    %c0_13 = arith.constant 0 : index
    %c0_14 = arith.constant 0 : index
    %c0_15 = arith.constant 0 : index
    %18 = vector.load %arg6[%c0_13, %c0_14, %c0_15] : memref<16x16x32xbf16, #tpu.memory_space<vmem>>, vector<1x16x32xbf16>
    %19 = vector.shape_cast %18 : vector<1x16x32xbf16> to vector<16x32xbf16>
    %cst_16 = arith.constant dense<0.000000e+00> : vector<16x32xf32>
    %20 = tpu.matmul %17, %19, %cst_16 {dimension_numbers = #tpu.dot_dimension_numbers<[1], [0], [0], [1], [0, 0, 1, 1], [], []>} : vector<16x16xbf16>, vector<16x32xbf16>, vector<16x32xf32> -> vector<16x32xf32>
    %21 = arith.addf %16, %20 : vector<16x32xf32>
    %22 = vector.extract_strided_slice %15 {offsets = [16, 0], sizes = [16, 16], strides = [1, 1]} : vector<256x16xbf16> to vector<16x16xbf16>
    %c1 = arith.constant 1 : index
    %c0_17 = arith.constant 0 : index
    %c0_18 = arith.constant 0 : index
    %23 = vector.load %arg6[%c1, %c0_17, %c0_18] : memref<16x16x32xbf16, #tpu.memory_space<vmem>>, vector<1x16x32xbf16>
    %24 = vector.shape_cast %23 : vector<1x16x32xbf16> to vector<16x32xbf16>
    %cst_19 = arith.constant dense<0.000000e+00> : vector<16x32xf32>
    %25 = tpu.matmul %22, %24, %cst_19 {dimension_numbers = #tpu.dot_dimension_numbers<[1], [0], [0], [1], [0, 0, 1, 1], [], []>} : vector<16x16xbf16>, vector<16x32xbf16>, vector<16x32xf32> -> vector<16x32xf32>
    %26 = arith.addf %21, %25 : vector<16x32xf32>
    %27 = vector.extract_strided_slice %15 {offsets = [32, 0], sizes = [16, 16], strides = [1, 1]} : vector<256x16xbf16> to vector<16x16xbf16>
    %c2 = arith.constant 2 : index
    %c0_20 = arith.constant 0 : index
    %c0_21 = arith.constant 0 : index
    %28 = vector.load %arg6[%c2, %c0_20, %c0_21] : memref<16x16x32xbf16, #tpu.memory_space<vmem>>, vector<1x16x32xbf16>
    %29 = vector.shape_cast %28 : vector<1x16x32xbf16> to vector<16x32xbf16>
    %cst_22 = arith.constant dense<0.000000e+00> : vector<16x32xf32>
    %30 = tpu.matmul %27, %29, %cst_22 {dimension_numbers = #tpu.dot_dimension_numbers<[1], [0], [0], [1], [0, 0, 1, 1], [], []>} : vector<16x16xbf16>, vector<16x32xbf16>, vector<16x32xf32> -> vector<16x32xf32>
    %31 = arith.addf %26, %30 : vector<16x32xf32>
    %32 = vector.extract_strided_slice %15 {offsets = [48, 0], sizes = [16, 16], strides = [1, 1]} : vector<256x16xbf16> to vector<16x16xbf16>
    %c3 = arith.constant 3 : index
    %c0_23 = arith.constant 0 : index
    %c0_24 = arith.constant 0 : index
    %33 = vector.load %arg6[%c3, %c0_23, %c0_24] : memref<16x16x32xbf16, #tpu.memory_space<vmem>>, vector<1x16x32xbf16>
    %34 = vector.shape_cast %33 : vector<1x16x32xbf16> to vector<16x32xbf16>
    %cst_25 = arith.constant dense<0.000000e+00> : vector<16x32xf32>
    %35 = tpu.matmul %32, %34, %cst_25 {dimension_numbers = #tpu.dot_dimension_numbers<[1], [0], [0], [1], [0, 0, 1, 1], [], []>} : vector<16x16xbf16>, vector<16x32xbf16>, vector<16x32xf32> -> vector<16x32xf32>
    %36 = arith.addf %31, %35 : vector<16x32xf32>
    %37 = vector.extract_strided_slice %15 {offsets = [64, 0], sizes = [16, 16], strides = [1, 1]} : vector<256x16xbf16> to vector<16x16xbf16>
    %c4 = arith.constant 4 : index
    %c0_26 = arith.constant 0 : index
    %c0_27 = arith.constant 0 : index
    %38 = vector.load %arg6[%c4, %c0_26, %c0_27] : memref<16x16x32xbf16, #tpu.memory_space<vmem>>, vector<1x16x32xbf16>
    %39 = vector.shape_cast %38 : vector<1x16x32xbf16> to vector<16x32xbf16>
    %cst_28 = arith.constant dense<0.000000e+00> : vector<16x32xf32>
    %40 = tpu.matmul %37, %39, %cst_28 {dimension_numbers = #tpu.dot_dimension_numbers<[1], [0], [0], [1], [0, 0, 1, 1], [], []>} : vector<16x16xbf16>, vector<16x32xbf16>, vector<16x32xf32> -> vector<16x32xf32>
    %41 = arith.addf %36, %40 : vector<16x32xf32>
    %42 = vector.extract_strided_slice %15 {offsets = [80, 0], sizes = [16, 16], strides = [1, 1]} : vector<256x16xbf16> to vector<16x16xbf16>
    %c5 = arith.constant 5 : index
    %c0_29 = arith.constant 0 : index
    %c0_30 = arith.constant 0 : index
    %43 = vector.load %arg6[%c5, %c0_29, %c0_30] : memref<16x16x32xbf16, #tpu.memory_space<vmem>>, vector<1x16x32xbf16>
    %44 = vector.shape_cast %43 : vector<1x16x32xbf16> to vector<16x32xbf16>
    %cst_31 = arith.constant dense<0.000000e+00> : vector<16x32xf32>
    %45 = tpu.matmul %42, %44, %cst_31 {dimension_numbers = #tpu.dot_dimension_numbers<[1], [0], [0], [1], [0, 0, 1, 1], [], []>} : vector<16x16xbf16>, vector<16x32xbf16>, vector<16x32xf32> -> vector<16x32xf32>
    %46 = arith.addf %41, %45 : vector<16x32xf32>
    %47 = vector.extract_strided_slice %15 {offsets = [96, 0], sizes = [16, 16], strides = [1, 1]} : vector<256x16xbf16> to vector<16x16xbf16>
    %c6 = arith.constant 6 : index
    %c0_32 = arith.constant 0 : index
    %c0_33 = arith.constant 0 : index
    %48 = vector.load %arg6[%c6, %c0_32, %c0_33] : memref<16x16x32xbf16, #tpu.memory_space<vmem>>, vector<1x16x32xbf16>
    %49 = vector.shape_cast %48 : vector<1x16x32xbf16> to vector<16x32xbf16>
    %cst_34 = arith.constant dense<0.000000e+00> : vector<16x32xf32>
    %50 = tpu.matmul %47, %49, %cst_34 {dimension_numbers = #tpu.dot_dimension_numbers<[1], [0], [0], [1], [0, 0, 1, 1], [], []>} : vector<16x16xbf16>, vector<16x32xbf16>, vector<16x32xf32> -> vector<16x32xf32>
    %51 = arith.addf %46, %50 : vector<16x32xf32>
    %52 = vector.extract_strided_slice %15 {offsets = [112, 0], sizes = [16, 16], strides = [1, 1]} : vector<256x16xbf16> to vector<16x16xbf16>
    %c7 = arith.constant 7 : index
    %c0_35 = arith.constant 0 : index
    %c0_36 = arith.constant 0 : index
    %53 = vector.load %arg6[%c7, %c0_35, %c0_36] : memref<16x16x32xbf16, #tpu.memory_space<vmem>>, vector<1x16x32xbf16>
    %54 = vector.shape_cast %53 : vector<1x16x32xbf16> to vector<16x32xbf16>
    %cst_37 = arith.constant dense<0.000000e+00> : vector<16x32xf32>
    %55 = tpu.matmul %52, %54, %cst_37 {dimension_numbers = #tpu.dot_dimension_numbers<[1], [0], [0], [1], [0, 0, 1, 1], [], []>} : vector<16x16xbf16>, vector<16x32xbf16>, vector<16x32xf32> -> vector<16x32xf32>
    %56 = arith.addf %51, %55 : vector<16x32xf32>
    %57 = vector.extract_strided_slice %15 {offsets = [128, 0], sizes = [16, 16], strides = [1, 1]} : vector<256x16xbf16> to vector<16x16xbf16>
    %c8 = arith.constant 8 : index
    %c0_38 = arith.constant 0 : index
    %c0_39 = arith.constant 0 : index
    %58 = vector.load %arg6[%c8, %c0_38, %c0_39] : memref<16x16x32xbf16, #tpu.memory_space<vmem>>, vector<1x16x32xbf16>
    %59 = vector.shape_cast %58 : vector<1x16x32xbf16> to vector<16x32xbf16>
    %cst_40 = arith.constant dense<0.000000e+00> : vector<16x32xf32>
    %60 = tpu.matmul %57, %59, %cst_40 {dimension_numbers = #tpu.dot_dimension_numbers<[1], [0], [0], [1], [0, 0, 1, 1], [], []>} : vector<16x16xbf16>, vector<16x32xbf16>, vector<16x32xf32> -> vector<16x32xf32>
    %61 = arith.addf %56, %60 : vector<16x32xf32>
    %62 = vector.extract_strided_slice %15 {offsets = [144, 0], sizes = [16, 16], strides = [1, 1]} : vector<256x16xbf16> to vector<16x16xbf16>
    %c9 = arith.constant 9 : index
    %c0_41 = arith.constant 0 : index
    %c0_42 = arith.constant 0 : index
    %63 = vector.load %arg6[%c9, %c0_41, %c0_42] : memref<16x16x32xbf16, #tpu.memory_space<vmem>>, vector<1x16x32xbf16>
    %64 = vector.shape_cast %63 : vector<1x16x32xbf16> to vector<16x32xbf16>
    %cst_43 = arith.constant dense<0.000000e+00> : vector<16x32xf32>
    %65 = tpu.matmul %62, %64, %cst_43 {dimension_numbers = #tpu.dot_dimension_numbers<[1], [0], [0], [1], [0, 0, 1, 1], [], []>} : vector<16x16xbf16>, vector<16x32xbf16>, vector<16x32xf32> -> vector<16x32xf32>
    %66 = arith.addf %61, %65 : vector<16x32xf32>
    %67 = vector.extract_strided_slice %15 {offsets = [160, 0], sizes = [16, 16], strides = [1, 1]} : vector<256x16xbf16> to vector<16x16xbf16>
    %c10 = arith.constant 10 : index
    %c0_44 = arith.constant 0 : index
    %c0_45 = arith.constant 0 : index
    %68 = vector.load %arg6[%c10, %c0_44, %c0_45] : memref<16x16x32xbf16, #tpu.memory_space<vmem>>, vector<1x16x32xbf16>
    %69 = vector.shape_cast %68 : vector<1x16x32xbf16> to vector<16x32xbf16>
    %cst_46 = arith.constant dense<0.000000e+00> : vector<16x32xf32>
    %70 = tpu.matmul %67, %69, %cst_46 {dimension_numbers = #tpu.dot_dimension_numbers<[1], [0], [0], [1], [0, 0, 1, 1], [], []>} : vector<16x16xbf16>, vector<16x32xbf16>, vector<16x32xf32> -> vector<16x32xf32>
    %71 = arith.addf %66, %70 : vector<16x32xf32>
    %72 = vector.extract_strided_slice %15 {offsets = [176, 0], sizes = [16, 16], strides = [1, 1]} : vector<256x16xbf16> to vector<16x16xbf16>
    %c11 = arith.constant 11 : index
    %c0_47 = arith.constant 0 : index
    %c0_48 = arith.constant 0 : index
    %73 = vector.load %arg6[%c11, %c0_47, %c0_48] : memref<16x16x32xbf16, #tpu.memory_space<vmem>>, vector<1x16x32xbf16>
    %74 = vector.shape_cast %73 : vector<1x16x32xbf16> to vector<16x32xbf16>
    %cst_49 = arith.constant dense<0.000000e+00> : vector<16x32xf32>
    %75 = tpu.matmul %72, %74, %cst_49 {dimension_numbers = #tpu.dot_dimension_numbers<[1], [0], [0], [1], [0, 0, 1, 1], [], []>} : vector<16x16xbf16>, vector<16x32xbf16>, vector<16x32xf32> -> vector<16x32xf32>
    %76 = arith.addf %71, %75 : vector<16x32xf32>
    %77 = vector.extract_strided_slice %15 {offsets = [192, 0], sizes = [16, 16], strides = [1, 1]} : vector<256x16xbf16> to vector<16x16xbf16>
    %c12 = arith.constant 12 : index
    %c0_50 = arith.constant 0 : index
    %c0_51 = arith.constant 0 : index
    %78 = vector.load %arg6[%c12, %c0_50, %c0_51] : memref<16x16x32xbf16, #tpu.memory_space<vmem>>, vector<1x16x32xbf16>
    %79 = vector.shape_cast %78 : vector<1x16x32xbf16> to vector<16x32xbf16>
    %cst_52 = arith.constant dense<0.000000e+00> : vector<16x32xf32>
    %80 = tpu.matmul %77, %79, %cst_52 {dimension_numbers = #tpu.dot_dimension_numbers<[1], [0], [0], [1], [0, 0, 1, 1], [], []>} : vector<16x16xbf16>, vector<16x32xbf16>, vector<16x32xf32> -> vector<16x32xf32>
    %81 = arith.addf %76, %80 : vector<16x32xf32>
    %82 = vector.extract_strided_slice %15 {offsets = [208, 0], sizes = [16, 16], strides = [1, 1]} : vector<256x16xbf16> to vector<16x16xbf16>
    %c13 = arith.constant 13 : index
    %c0_53 = arith.constant 0 : index
    %c0_54 = arith.constant 0 : index
    %83 = vector.load %arg6[%c13, %c0_53, %c0_54] : memref<16x16x32xbf16, #tpu.memory_space<vmem>>, vector<1x16x32xbf16>
    %84 = vector.shape_cast %83 : vector<1x16x32xbf16> to vector<16x32xbf16>
    %cst_55 = arith.constant dense<0.000000e+00> : vector<16x32xf32>
    %85 = tpu.matmul %82, %84, %cst_55 {dimension_numbers = #tpu.dot_dimension_numbers<[1], [0], [0], [1], [0, 0, 1, 1], [], []>} : vector<16x16xbf16>, vector<16x32xbf16>, vector<16x32xf32> -> vector<16x32xf32>
    %86 = arith.addf %81, %85 : vector<16x32xf32>
    %87 = vector.extract_strided_slice %15 {offsets = [224, 0], sizes = [16, 16], strides = [1, 1]} : vector<256x16xbf16> to vector<16x16xbf16>
    %c14 = arith.constant 14 : index
    %c0_56 = arith.constant 0 : index
    %c0_57 = arith.constant 0 : index
    %88 = vector.load %arg6[%c14, %c0_56, %c0_57] : memref<16x16x32xbf16, #tpu.memory_space<vmem>>, vector<1x16x32xbf16>
    %89 = vector.shape_cast %88 : vector<1x16x32xbf16> to vector<16x32xbf16>
    %cst_58 = arith.constant dense<0.000000e+00> : vector<16x32xf32>
    %90 = tpu.matmul %87, %89, %cst_58 {dimension_numbers = #tpu.dot_dimension_numbers<[1], [0], [0], [1], [0, 0, 1, 1], [], []>} : vector<16x16xbf16>, vector<16x32xbf16>, vector<16x32xf32> -> vector<16x32xf32>
    %91 = arith.addf %86, %90 : vector<16x32xf32>
    %92 = vector.extract_strided_slice %15 {offsets = [240, 0], sizes = [16, 16], strides = [1, 1]} : vector<256x16xbf16> to vector<16x16xbf16>
    %c15 = arith.constant 15 : index
    %c0_59 = arith.constant 0 : index
    %c0_60 = arith.constant 0 : index
    %93 = vector.load %arg6[%c15, %c0_59, %c0_60] : memref<16x16x32xbf16, #tpu.memory_space<vmem>>, vector<1x16x32xbf16>
    %94 = vector.shape_cast %93 : vector<1x16x32xbf16> to vector<16x32xbf16>
    %cst_61 = arith.constant dense<0.000000e+00> : vector<16x32xf32>
    %95 = tpu.matmul %92, %94, %cst_61 {dimension_numbers = #tpu.dot_dimension_numbers<[1], [0], [0], [1], [0, 0, 1, 1], [], []>} : vector<16x16xbf16>, vector<16x32xbf16>, vector<16x32xf32> -> vector<16x32xf32>
    %96 = arith.addf %91, %95 : vector<16x32xf32>
    %c0_62 = arith.constant 0 : index
    %c0_63 = arith.constant 0 : index
    %97 = vector.load %arg7[%c0_62, %c0_63] : memref<1x32xf32, #tpu.memory_space<vmem>>, vector<1x32xf32>
    %98 = vector.broadcast %97 : vector<1x32xf32> to vector<16x32xf32>
    %99 = arith.mulf %96, %98 : vector<16x32xf32>
    %c0_64 = arith.constant 0 : index
    %c0_65 = arith.constant 0 : index
    %100 = vector.load %arg8[%c0_64, %c0_65] : memref<1x32xf32, #tpu.memory_space<vmem>>, vector<1x32xf32>
    %101 = vector.broadcast %100 : vector<1x32xf32> to vector<16x32xf32>
    %102 = arith.addf %99, %101 : vector<16x32xf32>
    %cst_66 = arith.constant 0.000000e+00 : f32
    %103 = vector.broadcast %cst_66 : f32 to vector<16x32xf32>
    %104 = arith.maximumf %102, %103 : vector<16x32xf32>
    %105 = arith.truncf %104 : vector<16x32xf32> to vector<16x32xbf16>
    %c0_67 = arith.constant 0 : index
    %c0_68 = arith.constant 0 : index
    %106 = vector.load %arg9[%c0_67, %c0_68] : memref<144x16xbf16, #tpu.memory_space<vmem>>, vector<144x16xbf16>
    %cst_69 = arith.constant dense<0.000000e+00> : vector<144x32xf32>
    %107 = tpu.matmul %106, %105, %cst_69 {dimension_numbers = #tpu.dot_dimension_numbers<[1], [0], [0], [1], [0, 0, 1, 1], [], []>} : vector<144x16xbf16>, vector<16x32xbf16>, vector<144x32xf32> -> vector<144x32xf32>
    %108 = arith.truncf %107 : vector<144x32xf32> to vector<144x32xbf16>
    %cst_70 = arith.constant 0.000000e+00 : f32
    %109 = vector.broadcast %cst_70 : f32 to vector<16x64xf32>
    %110 = vector.extract_strided_slice %108 {offsets = [0, 0], sizes = [16, 32], strides = [1, 1]} : vector<144x32xbf16> to vector<16x32xbf16>
    %c0_71 = arith.constant 0 : index
    %c0_72 = arith.constant 0 : index
    %c0_73 = arith.constant 0 : index
    %111 = vector.load %arg10[%c0_71, %c0_72, %c0_73] : memref<9x32x64xbf16, #tpu.memory_space<vmem>>, vector<1x32x64xbf16>
    %112 = vector.shape_cast %111 : vector<1x32x64xbf16> to vector<32x64xbf16>
    %cst_74 = arith.constant dense<0.000000e+00> : vector<16x64xf32>
    %113 = tpu.matmul %110, %112, %cst_74 {dimension_numbers = #tpu.dot_dimension_numbers<[1], [0], [0], [1], [0, 0, 1, 1], [], []>} : vector<16x32xbf16>, vector<32x64xbf16>, vector<16x64xf32> -> vector<16x64xf32>
    %114 = arith.addf %109, %113 : vector<16x64xf32>
    %115 = vector.extract_strided_slice %108 {offsets = [16, 0], sizes = [16, 32], strides = [1, 1]} : vector<144x32xbf16> to vector<16x32xbf16>
    %c1_75 = arith.constant 1 : index
    %c0_76 = arith.constant 0 : index
    %c0_77 = arith.constant 0 : index
    %116 = vector.load %arg10[%c1_75, %c0_76, %c0_77] : memref<9x32x64xbf16, #tpu.memory_space<vmem>>, vector<1x32x64xbf16>
    %117 = vector.shape_cast %116 : vector<1x32x64xbf16> to vector<32x64xbf16>
    %cst_78 = arith.constant dense<0.000000e+00> : vector<16x64xf32>
    %118 = tpu.matmul %115, %117, %cst_78 {dimension_numbers = #tpu.dot_dimension_numbers<[1], [0], [0], [1], [0, 0, 1, 1], [], []>} : vector<16x32xbf16>, vector<32x64xbf16>, vector<16x64xf32> -> vector<16x64xf32>
    %119 = arith.addf %114, %118 : vector<16x64xf32>
    %120 = vector.extract_strided_slice %108 {offsets = [32, 0], sizes = [16, 32], strides = [1, 1]} : vector<144x32xbf16> to vector<16x32xbf16>
    %c2_79 = arith.constant 2 : index
    %c0_80 = arith.constant 0 : index
    %c0_81 = arith.constant 0 : index
    %121 = vector.load %arg10[%c2_79, %c0_80, %c0_81] : memref<9x32x64xbf16, #tpu.memory_space<vmem>>, vector<1x32x64xbf16>
    %122 = vector.shape_cast %121 : vector<1x32x64xbf16> to vector<32x64xbf16>
    %cst_82 = arith.constant dense<0.000000e+00> : vector<16x64xf32>
    %123 = tpu.matmul %120, %122, %cst_82 {dimension_numbers = #tpu.dot_dimension_numbers<[1], [0], [0], [1], [0, 0, 1, 1], [], []>} : vector<16x32xbf16>, vector<32x64xbf16>, vector<16x64xf32> -> vector<16x64xf32>
    %124 = arith.addf %119, %123 : vector<16x64xf32>
    %125 = vector.extract_strided_slice %108 {offsets = [48, 0], sizes = [16, 32], strides = [1, 1]} : vector<144x32xbf16> to vector<16x32xbf16>
    %c3_83 = arith.constant 3 : index
    %c0_84 = arith.constant 0 : index
    %c0_85 = arith.constant 0 : index
    %126 = vector.load %arg10[%c3_83, %c0_84, %c0_85] : memref<9x32x64xbf16, #tpu.memory_space<vmem>>, vector<1x32x64xbf16>
    %127 = vector.shape_cast %126 : vector<1x32x64xbf16> to vector<32x64xbf16>
    %cst_86 = arith.constant dense<0.000000e+00> : vector<16x64xf32>
    %128 = tpu.matmul %125, %127, %cst_86 {dimension_numbers = #tpu.dot_dimension_numbers<[1], [0], [0], [1], [0, 0, 1, 1], [], []>} : vector<16x32xbf16>, vector<32x64xbf16>, vector<16x64xf32> -> vector<16x64xf32>
    %129 = arith.addf %124, %128 : vector<16x64xf32>
    %130 = vector.extract_strided_slice %108 {offsets = [64, 0], sizes = [16, 32], strides = [1, 1]} : vector<144x32xbf16> to vector<16x32xbf16>
    %c4_87 = arith.constant 4 : index
    %c0_88 = arith.constant 0 : index
    %c0_89 = arith.constant 0 : index
    %131 = vector.load %arg10[%c4_87, %c0_88, %c0_89] : memref<9x32x64xbf16, #tpu.memory_space<vmem>>, vector<1x32x64xbf16>
    %132 = vector.shape_cast %131 : vector<1x32x64xbf16> to vector<32x64xbf16>
    %cst_90 = arith.constant dense<0.000000e+00> : vector<16x64xf32>
    %133 = tpu.matmul %130, %132, %cst_90 {dimension_numbers = #tpu.dot_dimension_numbers<[1], [0], [0], [1], [0, 0, 1, 1], [], []>} : vector<16x32xbf16>, vector<32x64xbf16>, vector<16x64xf32> -> vector<16x64xf32>
    %134 = arith.addf %129, %133 : vector<16x64xf32>
    %135 = vector.extract_strided_slice %108 {offsets = [80, 0], sizes = [16, 32], strides = [1, 1]} : vector<144x32xbf16> to vector<16x32xbf16>
    %c5_91 = arith.constant 5 : index
    %c0_92 = arith.constant 0 : index
    %c0_93 = arith.constant 0 : index
    %136 = vector.load %arg10[%c5_91, %c0_92, %c0_93] : memref<9x32x64xbf16, #tpu.memory_space<vmem>>, vector<1x32x64xbf16>
    %137 = vector.shape_cast %136 : vector<1x32x64xbf16> to vector<32x64xbf16>
    %cst_94 = arith.constant dense<0.000000e+00> : vector<16x64xf32>
    %138 = tpu.matmul %135, %137, %cst_94 {dimension_numbers = #tpu.dot_dimension_numbers<[1], [0], [0], [1], [0, 0, 1, 1], [], []>} : vector<16x32xbf16>, vector<32x64xbf16>, vector<16x64xf32> -> vector<16x64xf32>
    %139 = arith.addf %134, %138 : vector<16x64xf32>
    %140 = vector.extract_strided_slice %108 {offsets = [96, 0], sizes = [16, 32], strides = [1, 1]} : vector<144x32xbf16> to vector<16x32xbf16>
    %c6_95 = arith.constant 6 : index
    %c0_96 = arith.constant 0 : index
    %c0_97 = arith.constant 0 : index
    %141 = vector.load %arg10[%c6_95, %c0_96, %c0_97] : memref<9x32x64xbf16, #tpu.memory_space<vmem>>, vector<1x32x64xbf16>
    %142 = vector.shape_cast %141 : vector<1x32x64xbf16> to vector<32x64xbf16>
    %cst_98 = arith.constant dense<0.000000e+00> : vector<16x64xf32>
    %143 = tpu.matmul %140, %142, %cst_98 {dimension_numbers = #tpu.dot_dimension_numbers<[1], [0], [0], [1], [0, 0, 1, 1], [], []>} : vector<16x32xbf16>, vector<32x64xbf16>, vector<16x64xf32> -> vector<16x64xf32>
    %144 = arith.addf %139, %143 : vector<16x64xf32>
    %145 = vector.extract_strided_slice %108 {offsets = [112, 0], sizes = [16, 32], strides = [1, 1]} : vector<144x32xbf16> to vector<16x32xbf16>
    %c7_99 = arith.constant 7 : index
    %c0_100 = arith.constant 0 : index
    %c0_101 = arith.constant 0 : index
    %146 = vector.load %arg10[%c7_99, %c0_100, %c0_101] : memref<9x32x64xbf16, #tpu.memory_space<vmem>>, vector<1x32x64xbf16>
    %147 = vector.shape_cast %146 : vector<1x32x64xbf16> to vector<32x64xbf16>
    %cst_102 = arith.constant dense<0.000000e+00> : vector<16x64xf32>
    %148 = tpu.matmul %145, %147, %cst_102 {dimension_numbers = #tpu.dot_dimension_numbers<[1], [0], [0], [1], [0, 0, 1, 1], [], []>} : vector<16x32xbf16>, vector<32x64xbf16>, vector<16x64xf32> -> vector<16x64xf32>
    %149 = arith.addf %144, %148 : vector<16x64xf32>
    %150 = vector.extract_strided_slice %108 {offsets = [128, 0], sizes = [16, 32], strides = [1, 1]} : vector<144x32xbf16> to vector<16x32xbf16>
    %c8_103 = arith.constant 8 : index
    %c0_104 = arith.constant 0 : index
    %c0_105 = arith.constant 0 : index
    %151 = vector.load %arg10[%c8_103, %c0_104, %c0_105] : memref<9x32x64xbf16, #tpu.memory_space<vmem>>, vector<1x32x64xbf16>
    %152 = vector.shape_cast %151 : vector<1x32x64xbf16> to vector<32x64xbf16>
    %cst_106 = arith.constant dense<0.000000e+00> : vector<16x64xf32>
    %153 = tpu.matmul %150, %152, %cst_106 {dimension_numbers = #tpu.dot_dimension_numbers<[1], [0], [0], [1], [0, 0, 1, 1], [], []>} : vector<16x32xbf16>, vector<32x64xbf16>, vector<16x64xf32> -> vector<16x64xf32>
    %154 = arith.addf %149, %153 : vector<16x64xf32>
    %cst_107 = arith.constant dense<0.000000e+00> : vector<64xf32>
    %155 = vector.multi_reduction <add>, %154, %cst_107 [0] : vector<16x64xf32> to vector<64xf32>
    %156 = vector.shape_cast %155 : vector<64xf32> to vector<1x64xf32>
    %c0_108 = arith.constant 0 : index
    %c0_109 = arith.constant 0 : index
    %157 = vector.load %arg11[%c0_108, %c0_109] : memref<1x64xf32, #tpu.memory_space<vmem>>, vector<1x64xf32>
    %158 = arith.mulf %156, %157 : vector<1x64xf32>
    %c0_110 = arith.constant 0 : index
    %c0_111 = arith.constant 0 : index
    %159 = vector.load %arg12[%c0_110, %c0_111] : memref<1x64xf32, #tpu.memory_space<vmem>>, vector<1x64xf32>
    %160 = arith.addf %158, %159 : vector<1x64xf32>
    %cst_112 = arith.constant 0.000000e+00 : f32
    %161 = vector.broadcast %cst_112 : f32 to vector<1x64xf32>
    %162 = arith.maximumf %160, %161 : vector<1x64xf32>
    %163 = arith.truncf %162 : vector<1x64xf32> to vector<1x64xbf16>
    %c0_113 = arith.constant 0 : index
    %c0_114 = arith.constant 0 : index
    %c0_115 = arith.constant 0 : index
    %164 = vector.load %arg13[%c0_113, %c0_114, %c0_115] : memref<1x1x64xbf16, #tpu.memory_space<vmem>>, vector<1x1x64xbf16>
    %165 = vector.shape_cast %164 : vector<1x1x64xbf16> to vector<1x64xbf16>
    %166 = vector.shape_cast %163 : vector<1x64xbf16> to vector<1x1x64xbf16>
    tpu.vector_store %arg13[%c0_113, %c0_114, %c0_115], %166 {strides = array<i32>} : memref<1x1x64xbf16, #tpu.memory_space<vmem>>, vector<1x1x64xbf16>,
    return
  }
  func.func @transform_0(%arg0: i32) -> (i32, i32, i32) {
    %c0_i32 = arith.constant 0 : i32
    %c0_i32_0 = arith.constant 0 : i32
    %c0_i32_1 = arith.constant 0 : i32
    return %arg0, %c0_i32, %c0_i32_0 : i32, i32, i32
  }
  func.func @transform_1(%arg0: i32) -> (i32, i32) {
    %c0_i32 = arith.constant 0 : i32
    %c0_i32_0 = arith.constant 0 : i32
    %c0_i32_1 = arith.constant 0 : i32
    return %c0_i32, %c0_i32_0 : i32, i32
  }
  func.func @transform_2(%arg0: i32) -> (i32, i32) {
    %c0_i32 = arith.constant 0 : i32
    %c0_i32_0 = arith.constant 0 : i32
    %c0_i32_1 = arith.constant 0 : i32
    return %c0_i32, %c0_i32_0 : i32, i32
  }
  func.func @transform_3(%arg0: i32) -> (i32, i32) {
    %c0_i32 = arith.constant 0 : i32
    %c0_i32_0 = arith.constant 0 : i32
    %c0_i32_1 = arith.constant 0 : i32
    return %c0_i32, %c0_i32_0 : i32, i32
  }
  func.func @transform_4(%arg0: i32) -> (i32, i32) {
    %c0_i32 = arith.constant 0 : i32
    %c0_i32_0 = arith.constant 0 : i32
    %c0_i32_1 = arith.constant 0 : i32
    return %c0_i32, %c0_i32_0 : i32, i32
  }
  func.func @transform_5(%arg0: i32) -> (i32, i32, i32) {
    %c0_i32 = arith.constant 0 : i32
    %c0_i32_0 = arith.constant 0 : i32
    %c0_i32_1 = arith.constant 0 : i32
    %c0_i32_2 = arith.constant 0 : i32
    return %c0_i32, %c0_i32_0, %c0_i32_1 : i32, i32, i32
  }
  func.func @transform_6(%arg0: i32) -> (i32, i32) {
    %c0_i32 = arith.constant 0 : i32
    %c0_i32_0 = arith.constant 0 : i32
    %c0_i32_1 = arith.constant 0 : i32
    return %c0_i32, %c0_i32_0 : i32, i32
  }
  func.func @transform_7(%arg0: i32) -> (i32, i32) {
    %c0_i32 = arith.constant 0 : i32
    %c0_i32_0 = arith.constant 0 : i32
    %c0_i32_1 = arith.constant 0 : i32
    return %c0_i32, %c0_i32_0 : i32, i32
  }
  func.func @transform_8(%arg0: i32) -> (i32, i32) {
    %c0_i32 = arith.constant 0 : i32
    %c0_i32_0 = arith.constant 0 : i32
    %c0_i32_1 = arith.constant 0 : i32
    return %c0_i32, %c0_i32_0 : i32, i32
  }
  func.func @transform_9(%arg0: i32) -> (i32, i32, i32) {
    %c0_i32 = arith.constant 0 : i32
    %c0_i32_0 = arith.constant 0 : i32
    %c0_i32_1 = arith.constant 0 : i32
    %c0_i32_2 = arith.constant 0 : i32
    return %c0_i32, %c0_i32_0, %c0_i32_1 : i32, i32, i32
  }
  func.func @transform_10(%arg0: i32) -> (i32, i32) {
    %c0_i32 = arith.constant 0 : i32
    %c0_i32_0 = arith.constant 0 : i32
    %c0_i32_1 = arith.constant 0 : i32
    return %c0_i32, %c0_i32_0 : i32, i32
  }
  func.func @transform_11(%arg0: i32) -> (i32, i32) {
    %c0_i32 = arith.constant 0 : i32
    %c0_i32_0 = arith.constant 0 : i32
    %c0_i32_1 = arith.constant 0 : i32
    return %c0_i32, %c0_i32_0 : i32, i32
  }
  func.func @transform_12(%arg0: i32) -> (i32, i32, i32) {
    %c0_i32 = arith.constant 0 : i32
    %c0_i32_0 = arith.constant 0 : i32
    %c0_i32_1 = arith.constant 0 : i32
    return %arg0, %c0_i32, %c0_i32_0 : i32, i32, i32
  }
}

</mosaic_0001>

<llo_original>
// kernel: forward.3
$region0: #{forward.3}
  #allocation0 [shape = 'u32[]', space=smem, size = 0x4, offset = 0x4, fixed_abs, tag = 'smem constant byte address 0x4 - core index']
  #allocation1 [shape = 'u32[72,128]{1,0:T(1,128)}', space=vmem, size = 0x9000, scoped, tag = 'internal scratch']
  #allocation2 [shape = 'f32[1,1]{1,0:T(1,128)S(1)}', space=vmem, size = 0x200, scoped, tag = 'scoped memory for forward.3']
  %s0 = inlined_call_operand.vmem [shape: bf16[2,64,4], index: 0, kind: input, shape index: {}]
  %s1 = inlined_call_operand.vmem [shape: bf16[128,64], index: 1, kind: input, shape index: {}]
  %s2 = inlined_call_operand.vmem [shape: bf16[128,32], index: 2, kind: input, shape index: {}]
  %s3 = inlined_call_operand.vmem [shape: f32[128,1], index: 3, kind: input, shape index: {}]
  %s4 = inlined_call_operand.vmem [shape: bf16[128,32], index: 4, kind: input, shape index: {}]
  %s5 = inlined_call_operand.vmem [shape: bf16[128,32], index: 5, kind: input, shape index: {}]
  %s6 = inlined_call_operand.vmem [shape: f32[128,1], index: 6, kind: input, shape index: {}]
  %s7 = inlined_call_operand.vmem [shape: f32[2,6,4], index: 7, kind: input, shape index: {}]
  %s8 = inlined_call_operand.vmem [shape: f32[32,1], index: 8, kind: input, shape index: {}]
  %s9 = inlined_call_operand.vmem [shape: f32[6,1], index: 9, kind: input, shape index: {}]
  %s10 = inlined_call_operand.<no memory space> [shape: f32[1,1], index: 10, kind: input, shape index: {}]
  %s11 = inlined_call_operand.hbm [shape: f32[2,1,4], index: 11, kind: output, shape index: {}]
  %s12 = sld [smem:[#allocation0]]
  $region54: #{forward.3} parent=0
    _
  %s14 = ssub.s32 1, %s12
  %s15 = scalar_select 0, %s14, %s12
  %v16 = vstv %s10
  %17 = vst [vmem:[#allocation2] sm:$0x1] %v16
  $region1: #{forward.3} parent=0
    #allocation3 [shape = 'u8[1024]{0}', space=vmem, size = 0x400, scoped, tag = 'output window, operand 0, single buffered']
    #allocation4 [shape = 's32[1]{0}', space=sflag, size = 0x4, scoped, tag = 'scoped memory for forward.3']
    %18 = vsyncpa [#allocation4], 0
    // Predicated region
    $region2: #{forward.3} parent=1 // pred_check
      _
    $region3: #{forward.3} parent=1 // pred_check_branch
      %20 = sbr.rel (0) target = $region5
    $region4: #{forward.3} parent=1 // pred_region
      _
    $region5: #{forward.3} parent=1 // pred_fallthru
      _
    // Predicated region
    $region6: #{forward.3} parent=1 // pred_check
      _
    $region7: #{forward.3} parent=1 // pred_check_branch
      %22 = sbr.rel (0) target = $region9
    $region8: #{forward.3} parent=1 // pred_region
      _
    $region9: #{forward.3} parent=1 // pred_fallthru
      _
    // Predicated region
    $region10: #{forward.3} parent=1 // pred_check
      _
    $region11: #{forward.3} parent=1 // pred_check_branch
      %24 = sbr.rel (0) target = $region13
    $region12: #{forward.3} parent=1 // pred_region
      _
    $region13: #{forward.3} parent=1 // pred_fallthru
      _
    // Predicated region
    $region14: #{forward.3} parent=1 // pred_check
      _
    $region15: #{forward.3} parent=1 // pred_check_branch
      %26 = sbr.rel (0) target = $region17
    $region16: #{forward.3} parent=1 // pred_region
      _
    $region17: #{forward.3} parent=1 // pred_fallthru
      _
    // Predicated region
    $region18: #{forward.3} parent=1 // pred_check
      _
    $region19: #{forward.3} parent=1 // pred_check_branch
      %28 = sbr.rel (0) target = $region21
    $region20: #{forward.3} parent=1 // pred_region
      _
    $region21: #{forward.3} parent=1 // pred_fallthru
      _
    // Predicated region
    $region22: #{forward.3} parent=1 // pred_check
      _
    $region23: #{forward.3} parent=1 // pred_check_branch
      %30 = sbr.rel (0) target = $region25
    $region24: #{forward.3} parent=1 // pred_region
      _
    $region25: #{forward.3} parent=1 // pred_fallthru
      _
    // Predicated region
    $region26: #{forward.3} parent=1 // pred_check
      _
    $region27: #{forward.3} parent=1 // pred_check_branch
      %32 = sbr.rel (0) target = $region29
    $region28: #{forward.3} parent=1 // pred_region
      _
    $region29: #{forward.3} parent=1 // pred_fallthru
      _
    // Predicated region
    $region30: #{forward.3} parent=1 // pred_check
      _
    $region31: #{forward.3} parent=1 // pred_check_branch
      %34 = sbr.rel (0) target = $region33
    $region32: #{forward.3} parent=1 // pred_region
      _
    $region33: #{forward.3} parent=1 // pred_fallthru
      _
    // Predicated region
    $region34: #{forward.3} parent=1 // pred_check
      _
    $region35: #{forward.3} parent=1 // pred_check_branch
      %36 = sbr.rel (0) target = $region37
    $region36: #{forward.3} parent=1 // pred_region
      _
    $region37: #{forward.3} parent=1 // pred_fallthru
      _
    // Predicated region
    $region38: #{forward.3} parent=1 // pred_check
      _
    $region39: #{forward.3} parent=1 // pred_check_branch
      %38 = sbr.rel (0) target = $region41
    $region40: #{forward.3} parent=1 // pred_region
      _
    $region41: #{forward.3} parent=1 // pred_fallthru
      _
    // Predicated region
    $region42: #{forward.3} parent=1 // pred_check
      _
    $region43: #{forward.3} parent=1 // pred_check_branch
      %40 = sbr.rel (0) target = $region45
    $region44: #{forward.3} parent=1 // pred_region
      _
    $region45: #{forward.3} parent=1 // pred_fallthru
      _
    %v42 = vld [vmem:[%s2] sm:$0xf]
    %v43 = vld [vmem:[%s2 + $0x4] sm:$0xf]
    %v44 = vld [vmem:[%s2 + $0x8] sm:$0xf]
    %v45 = vld [vmem:[%s2 + $0xc] sm:$0xf]
    %v46 = vld [vmem:[%s2 + $0x10] sm:$0xf]
    %v47 = vld [vmem:[%s2 + $0x14] sm:$0xf]
    %v48 = vld [vmem:[%s2 + $0x18] sm:$0xf]
    %v49 = vld [vmem:[%s2 + $0x1c] sm:$0xf]
    %v50 = vld [vmem:[%s2 + $0x20] sm:$0xf]
    %v51 = vld [vmem:[%s2 + $0x24] sm:$0xf]
    %v52 = vld [vmem:[%s2 + $0x28] sm:$0xf]
    %v53 = vld [vmem:[%s2 + $0x2c] sm:$0xf]
    %v54 = vld [vmem:[%s2 + $0x30] sm:$0xf]
    %v55 = vld [vmem:[%s2 + $0x34] sm:$0xf]
    %v56 = vld [vmem:[%s2 + $0x38] sm:$0xf]
    %v57 = vld [vmem:[%s2 + $0x3c] sm:$0xf]
    %v58 = vld [vmem:[%s5] sm:$0xf]
    %v59 = vld [vmem:[%s5 + $0x4] sm:$0xf]
    %v60 = vld [vmem:[%s5 + $0x8] sm:$0xf]
    %v61 = vld [vmem:[%s5 + $0xc] sm:$0xf]
    %v62 = vld [vmem:[%s5 + $0x10] sm:$0xf]
    %v63 = vld [vmem:[%s5 + $0x14] sm:$0xf]
    %v64 = vld [vmem:[%s5 + $0x18] sm:$0xf]
    %v65 = vld [vmem:[%s5 + $0x1c] sm:$0xf]
    %v66 = vld [vmem:[%s5 + $0x20] sm:$0xf]
    %v67 = vld [vmem:[%s5 + $0x24] sm:$0xf]
    %v68 = vld [vmem:[%s5 + $0x28] sm:$0xf]
    %v69 = vld [vmem:[%s5 + $0x2c] sm:$0xf]
    %v70 = vld [vmem:[%s5 + $0x30] sm:$0xf]
    %v71 = vld [vmem:[%s5 + $0x34] sm:$0xf]
    %v72 = vld [vmem:[%s5 + $0x38] sm:$0xf]
    %v73 = vld [vmem:[%s5 + $0x3c] sm:$0xf]
    %v74 = vld [vmem:[%s1] sm:$0xf]
    %v75 = vld [vmem:[%s1 + $0x4] sm:$0xf]
    %v76 = vld [vmem:[%s1 + $0x8] sm:$0xf]
    %v77 = vld [vmem:[%s1 + $0xc] sm:$0xf]
    %v78 = vld [vmem:[%s1 + $0x10] sm:$0xf]
    %v79 = vld [vmem:[%s1 + $0x14] sm:$0xf]
    %v80 = vld [vmem:[%s1 + $0x18] sm:$0xf]
    %v81 = vld [vmem:[%s1 + $0x1c] sm:$0xf]
    %v82 = vld [vmem:[%s1 + $0x20] sm:$0xf]
    %v83 = vld [vmem:[%s1 + $0x24] sm:$0xf]
    %v84 = vld [vmem:[%s1 + $0x28] sm:$0xf]
    %v85 = vld [vmem:[%s1 + $0x2c] sm:$0xf]
    %v86 = vld [vmem:[%s1 + $0x30] sm:$0xf]
    %v87 = vld [vmem:[%s1 + $0x34] sm:$0xf]
    %v88 = vld [vmem:[%s1 + $0x38] sm:$0xf]
    %v89 = vld [vmem:[%s1 + $0x3c] sm:$0xf]
    %v90 = vld [vmem:[%s0] sm:$0xf]
    %v91 = vld [vmem:[%s0 + $0x4] sm:$0xf]
    %v92 = vld [vmem:[%s0 + $0x8] sm:$0xf]
    %v93 = vld [vmem:[%s0 + $0xc] sm:$0xf]
    %v94 = vld [vmem:[%s0 + $0x10] sm:$0xf]
    %v95 = vld [vmem:[%s0 + $0x14] sm:$0xf]
    %v96 = vld [vmem:[%s0 + $0x18] sm:$0xf]
    %v97 = vld [vmem:[%s0 + $0x1c] sm:$0xf]
    %v98 = vld [vmem:[%s3] sm:$0xff]
    %v99 = vld [vmem:[%s3 + $0x8] sm:$0xff]
    %v100 = vld [vmem:[%s3 + $0x10] sm:$0xff]
    %v101 = vld [vmem:[%s3 + $0x18] sm:$0xff]
    %v102 = vld [vmem:[%s3 + $0x20] sm:$0xff]
    %v103 = vld [vmem:[%s3 + $0x28] sm:$0xff]
    %v104 = vld [vmem:[%s3 + $0x30] sm:$0xff]
    %v105 = vld [vmem:[%s3 + $0x38] sm:$0xff]
    %v106 = vld [vmem:[%s3 + $0x40] sm:$0xff]
    %v107 = vld [vmem:[%s3 + $0x48] sm:$0xff]
    %v108 = vld [vmem:[%s3 + $0x50] sm:$0xff]
    %v109 = vld [vmem:[%s3 + $0x58] sm:$0xff]
    %v110 = vld [vmem:[%s3 + $0x60] sm:$0xff]
    %v111 = vld [vmem:[%s3 + $0x68] sm:$0xff]
    %v112 = vld [vmem:[%s3 + $0x70] sm:$0xff]
    %v113 = vld [vmem:[%s3 + $0x78] sm:$0xff]
    %115 = vset.pattern.permute.xlu0 0
    %116 = vperm.xlu0 %115, %v98
    %v117 = vpop.permute.xlu0 %116
    %120 = vset.pattern.permute.xlu0 0
    %121 = vperm.xlu0 %120, %v99
    %v122 = vpop.permute.xlu0 %121
    %125 = vset.pattern.permute.xlu0 0
    %126 = vperm.xlu0 %125, %v100
    %v127 = vpop.permute.xlu0 %126
    %130 = vset.pattern.permute.xlu0 0
    %131 = vperm.xlu0 %130, %v101
    %v132 = vpop.permute.xlu0 %131
    %135 = vset.pattern.permute.xlu0 0
    %136 = vperm.xlu0 %135, %v102
    %v137 = vpop.permute.xlu0 %136
    %140 = vset.pattern.permute.xlu0 0
    %141 = vperm.xlu0 %140, %v103
    %v142 = vpop.permute.xlu0 %141
    %145 = vset.pattern.permute.xlu0 0
    %146 = vperm.xlu0 %145, %v104
    %v147 = vpop.permute.xlu0 %146
    %150 = vset.pattern.permute.xlu0 0
    %151 = vperm.xlu0 %150, %v105
    %v152 = vpop.permute.xlu0 %151
    %155 = vset.pattern.permute.xlu0 0
    %156 = vperm.xlu0 %155, %v106
    %v157 = vpop.permute.xlu0 %156
    %160 = vset.pattern.permute.xlu0 0
    %161 = vperm.xlu0 %160, %v107
    %v162 = vpop.permute.xlu0 %161
    %165 = vset.pattern.permute.xlu0 0
    %166 = vperm.xlu0 %165, %v108
    %v167 = vpop.permute.xlu0 %166
    %170 = vset.pattern.permute.xlu0 0
    %171 = vperm.xlu0 %170, %v109
    %v172 = vpop.permute.xlu0 %171
    %175 = vset.pattern.permute.xlu0 0
    %176 = vperm.xlu0 %175, %v110
    %v177 = vpop.permute.xlu0 %176
    %180 = vset.pattern.permute.xlu0 0
    %181 = vperm.xlu0 %180, %v111
    %v182 = vpop.permute.xlu0 %181
    %185 = vset.pattern.permute.xlu0 0
    %186 = vperm.xlu0 %185, %v112
    %v187 = vpop.permute.xlu0 %186
    %190 = vset.pattern.permute.xlu0 0
    %191 = vperm.xlu0 %190, %v113
    %v192 = vpop.permute.xlu0 %191
    %v210 = vunpack.c.l.b16 %v74
    %v211 = vunpack.c.l.b16 %v75
    %v212 = vunpack.c.l.b16 %v76
    %v213 = vunpack.c.l.b16 %v77
    %v214 = vunpack.c.l.b16 %v78
    %v215 = vunpack.c.l.b16 %v79
    %v216 = vunpack.c.l.b16 %v80
    %v217 = vunpack.c.l.b16 %v81
    %v218 = vunpack.c.l.b16 %v82
    %v219 = vunpack.c.l.b16 %v83
    %v220 = vunpack.c.l.b16 %v84
    %v221 = vunpack.c.l.b16 %v85
    %v222 = vunpack.c.l.b16 %v86
    %v223 = vunpack.c.l.b16 %v87
    %v224 = vunpack.c.l.b16 %v88
    %v225 = vunpack.c.l.b16 %v89
    %v226 = vpack.c.b16 %v211, %v210
    %v227 = vpack.c.b16 %v213, %v212
    %v228 = vpack.c.b16 %v215, %v214
    %v229 = vpack.c.b16 %v217, %v216
    %v230 = vpack.c.b16 %v219, %v218
    %v231 = vpack.c.b16 %v221, %v220
    %v232 = vpack.c.b16 %v223, %v222
    %v233 = vpack.c.b16 %v225, %v224
    %v242 = vunpack.c.l.b16 %v90
    %v243 = vunpack.c.l.b16 %v91
    %v244 = vunpack.c.l.b16 %v92
    %v245 = vunpack.c.l.b16 %v93
    %v246 = vunpack.c.l.b16 %v94
    %v247 = vunpack.c.l.b16 %v95
    %v248 = vunpack.c.l.b16 %v96
    %v249 = vunpack.c.l.b16 %v97
    %v250 = vpack.c.b16 %v243, %v242
    %v251 = vpack.c.b16 %v245, %v244
    %v252 = vpack.c.b16 %v247, %v246
    %v253 = vpack.c.b16 %v249, %v248
    %vm258 = vcmask 523264
    %v260 = vsel %vm258, %v226, 0
    %v263 = vsel %vm258, %v227, 0
    %v266 = vsel %vm258, %v228, 0
    %v269 = vsel %vm258, %v229, 0
    %v272 = vsel %vm258, %v230, 0
    %v275 = vsel %vm258, %v231, 0
    %v278 = vsel %vm258, %v232, 0
    %v281 = vsel %vm258, %v233, 0
    %283 = vmatpush.bf16.msra.mxu0 0
    %284 = vmatpush.bf16.msra.mxu0 0
    %285 = vmatpush.bf16.msra.mxu0 0
    %286 = vmatpush.bf16.msra.mxu0 0
    %287 = vmatpush.bf16.msra.mxu0 %v253
    %288 = vmatpush.bf16.msra.mxu0 %v252
    %289 = vmatpush.bf16.msra.mxu0 %v251
    %290 = vmatpush.bf16.msra.mxu0 %v250
    %291 = vmatmul.bf16.gmra.mxu0 %v260
    %v292 = vpop.f32.mrf.mxu0
    %v293 = vadd.f32 %v117, %v292
    %v294 = vpop.f32.mrf.mxu0
    %v295 = vadd.f32 %v122, %v294
    %296 = vmatmul.bf16.gmra.mxu0 %v263
    %v297 = vpop.f32.mrf.mxu0
    %v298 = vadd.f32 %v127, %v297
    %v299 = vpop.f32.mrf.mxu0
    %v300 = vadd.f32 %v132, %v299
    %301 = vmatmul.bf16.gmra.mxu0 %v266
    %v302 = vpop.f32.mrf.mxu0
    %v303 = vadd.f32 %v137, %v302
    %v304 = vpop.f32.mrf.mxu0
    %v305 = vadd.f32 %v142, %v304
    %306 = vmatmul.bf16.gmra.mxu0 %v269
    %v307 = vpop.f32.mrf.mxu0
    %v308 = vadd.f32 %v147, %v307
    %v309 = vpop.f32.mrf.mxu0
    %v310 = vadd.f32 %v152, %v309
    %311 = vmatmul.bf16.gmra.mxu0 %v272
    %v312 = vpop.f32.mrf.mxu0
    %v313 = vadd.f32 %v157, %v312
    %v314 = vpop.f32.mrf.mxu0
    %v315 = vadd.f32 %v162, %v314
    %316 = vmatmul.bf16.gmra.mxu0 %v275
    %v317 = vpop.f32.mrf.mxu0
    %v318 = vadd.f32 %v167, %v317
    %v319 = vpop.f32.mrf.mxu0
    %v320 = vadd.f32 %v172, %v319
    %321 = vmatmul.bf16.gmra.mxu0 %v278
    %v322 = vpop.f32.mrf.mxu0
    %v323 = vadd.f32 %v177, %v322
    %v324 = vpop.f32.mrf.mxu0
    %v325 = vadd.f32 %v182, %v324
    %326 = vmatmul.bf16.gmra.mxu0 %v281
    %v327 = vpop.f32.mrf.mxu0
    %v328 = vadd.f32 %v187, %v327
    %v329 = vpop.f32.mrf.mxu0
    %v330 = vadd.f32 %v192, %v329
    %331 = vdwg.mxu0
    %s332 = scalar_lea.vmem %s0, 32
    %v333 = vld [vmem:[%s332] sm:$0xf]
    %v334 = vld [vmem:[%s332 + $0x4] sm:$0xf]
    %v335 = vld [vmem:[%s332 + $0x8] sm:$0xf]
    %v336 = vld [vmem:[%s332 + $0xc] sm:$0xf]
    %v337 = vld [vmem:[%s332 + $0x10] sm:$0xf]
    %v338 = vld [vmem:[%s332 + $0x14] sm:$0xf]
    %v339 = vld [vmem:[%s332 + $0x18] sm:$0xf]
    %v340 = vld [vmem:[%s332 + $0x1c] sm:$0xf]
    %v349 = vunpack.c.l.b16 %v333
    %v350 = vunpack.c.l.b16 %v334
    %v351 = vunpack.c.l.b16 %v335
    %v352 = vunpack.c.l.b16 %v336
    %v353 = vunpack.c.l.b16 %v337
    %v354 = vunpack.c.l.b16 %v338
    %v355 = vunpack.c.l.b16 %v339
    %v356 = vunpack.c.l.b16 %v340
    %v357 = vpack.c.b16 %v350, %v349
    %v358 = vpack.c.b16 %v352, %v351
    %v359 = vpack.c.b16 %v354, %v353
    %v360 = vpack.c.b16 %v356, %v355
    %365 = vmatpush.bf16.msra.mxu0 0
    %366 = vmatpush.bf16.msra.mxu0 0
    %367 = vmatpush.bf16.msra.mxu0 0
    %368 = vmatpush.bf16.msra.mxu0 0
    %369 = vmatpush.bf16.msra.mxu0 %v360
    %370 = vmatpush.bf16.msra.mxu0 %v359
    %371 = vmatpush.bf16.msra.mxu0 %v358
    %372 = vmatpush.bf16.msra.mxu0 %v357
    %373 = vmatmul.bf16.gmra.mxu0 %v260
    %v374 = vpop.f32.mrf.mxu0
    %v375 = vadd.f32 %v117, %v374
    %v376 = vpop.f32.mrf.mxu0
    %v377 = vadd.f32 %v122, %v376
    %378 = vmatmul.bf16.gmra.mxu0 %v263
    %v379 = vpop.f32.mrf.mxu0
    %v380 = vadd.f32 %v127, %v379
    %v381 = vpop.f32.mrf.mxu0
    %v382 = vadd.f32 %v132, %v381
    %383 = vmatmul.bf16.gmra.mxu0 %v266
    %v384 = vpop.f32.mrf.mxu0
    %v385 = vadd.f32 %v137, %v384
    %v386 = vpop.f32.mrf.mxu0
    %v387 = vadd.f32 %v142, %v386
    %388 = vmatmul.bf16.gmra.mxu0 %v269
    %v389 = vpop.f32.mrf.mxu0
    %v390 = vadd.f32 %v147, %v389
    %v391 = vpop.f32.mrf.mxu0
    %v392 = vadd.f32 %v152, %v391
    %393 = vmatmul.bf16.gmra.mxu0 %v272
    %v394 = vpop.f32.mrf.mxu0
    %v395 = vadd.f32 %v157, %v394
    %v396 = vpop.f32.mrf.mxu0
    %v397 = vadd.f32 %v162, %v396
    %398 = vmatmul.bf16.gmra.mxu0 %v275
    %v399 = vpop.f32.mrf.mxu0
    %v400 = vadd.f32 %v167, %v399
    %v401 = vpop.f32.mrf.mxu0
    %v402 = vadd.f32 %v172, %v401
    %403 = vmatmul.bf16.gmra.mxu0 %v278
    %v404 = vpop.f32.mrf.mxu0
    %v405 = vadd.f32 %v177, %v404
    %v406 = vpop.f32.mrf.mxu0
    %v407 = vadd.f32 %v182, %v406
    %408 = vmatmul.bf16.gmra.mxu0 %v281
    %v409 = vpop.f32.mrf.mxu0
    %v410 = vadd.f32 %v187, %v409
    %v411 = vpop.f32.mrf.mxu0
    %v412 = vadd.f32 %v192, %v411
    %413 = vdwg.mxu0
    %v430 = vunpack.c.l.b16 %v42
    %v431 = vunpack.c.l.b16 %v43
    %v432 = vunpack.c.l.b16 %v44
    %v433 = vunpack.c.l.b16 %v45
    %v434 = vunpack.c.l.b16 %v46
    %v435 = vunpack.c.l.b16 %v47
    %v436 = vunpack.c.l.b16 %v48
    %v437 = vunpack.c.l.b16 %v49
    %v438 = vunpack.c.l.b16 %v50
    %v439 = vunpack.c.l.b16 %v51
    %v440 = vunpack.c.l.b16 %v52
    %v441 = vunpack.c.l.b16 %v53
    %v442 = vunpack.c.l.b16 %v54
    %v443 = vunpack.c.l.b16 %v55
    %v444 = vunpack.c.l.b16 %v56
    %v445 = vunpack.c.l.b16 %v57
    %v446 = vpack.c.b16 %v431, %v430
    %v447 = vpack.c.b16 %v433, %v432
    %v448 = vpack.c.b16 %v435, %v434
    %v449 = vpack.c.b16 %v437, %v436
    %v450 = vpack.c.b16 %v439, %v438
    %v451 = vpack.c.b16 %v441, %v440
    %v452 = vpack.c.b16 %v443, %v442
    %v453 = vpack.c.b16 %v445, %v444
    %vm454 = vcmask 261120
    %v456 = vsel %vm454, %v446, 0
    %v459 = vsel %vm454, %v447, 0
    %v462 = vsel %vm454, %v448, 0
    %v465 = vsel %vm454, %v449, 0
    %v468 = vsel %vm454, %v450, 0
    %v471 = vsel %vm454, %v451, 0
    %v474 = vsel %vm454, %v452, 0
    %v477 = vsel %vm454, %v453, 0
    %479 = vmatpush.bf16.msra.mxu0 0
    %480 = vmatpush.bf16.msra.mxu0 0
    %481 = vmatpush.bf16.msra.mxu0 0
    %482 = vmatpush.bf16.msra.mxu0 0
    %483 = vmatpush.bf16.msra.mxu0 0
    %484 = vmatpush.bf16.msra.mxu0 0
    %485 = vmatpush.bf16.msra.mxu0 0
    %486 = vmatpush.bf16.msra.mxu0 0
    %487 = vmatmul.bf16.gmra.mxu0 %v456
    %v488 = vpop.f32.mrf.mxu0
    %v489 = vadd.f32 0.0, %v488
    %v490 = vpop.f32.mrf.mxu0
    %v491 = vadd.f32 0.0, %v490
    %492 = vmatmul.bf16.gmra.mxu0 %v459
    %v493 = vpop.f32.mrf.mxu0
    %v494 = vadd.f32 0.0, %v493
    %v495 = vpop.f32.mrf.mxu0
    %v496 = vadd.f32 0.0, %v495
    %497 = vmatmul.bf16.gmra.mxu0 %v462
    %v498 = vpop.f32.mrf.mxu0
    %v499 = vadd.f32 0.0, %v498
    %v500 = vpop.f32.mrf.mxu0
    %v501 = vadd.f32 0.0, %v500
    %502 = vmatmul.bf16.gmra.mxu0 %v465
    %v503 = vpop.f32.mrf.mxu0
    %v504 = vadd.f32 0.0, %v503
    %v505 = vpop.f32.mrf.mxu0
    %v506 = vadd.f32 0.0, %v505
    %507 = vmatmul.bf16.gmra.mxu0 %v468
    %v508 = vpop.f32.mrf.mxu0
    %v509 = vadd.f32 0.0, %v508
    %v510 = vpop.f32.mrf.mxu0
    %v511 = vadd.f32 0.0, %v510
    %512 = vmatmul.bf16.gmra.mxu0 %v471
    %v513 = vpop.f32.mrf.mxu0
    %v514 = vadd.f32 0.0, %v513
    %v515 = vpop.f32.mrf.mxu0
    %v516 = vadd.f32 0.0, %v515
    %517 = vmatmul.bf16.gmra.mxu0 %v474
    %v518 = vpop.f32.mrf.mxu0
    %v519 = vadd.f32 0.0, %v518
    %v520 = vpop.f32.mrf.mxu0
    %v521 = vadd.f32 0.0, %v520
    %522 = vmatmul.bf16.gmra.mxu0 %v477
    %v523 = vpop.f32.mrf.mxu0
    %v524 = vadd.f32 0.0, %v523
    %v525 = vpop.f32.mrf.mxu0
    %v526 = vadd.f32 0.0, %v525
    %527 = vdwg.mxu0
    %v528 = vadd.f32 %v293, %v489
    %v529 = vadd.f32 %v295, %v491
    %v530 = vadd.f32 %v298, %v494
    %v531 = vadd.f32 %v300, %v496
    %v532 = vadd.f32 %v303, %v499
    %v533 = vadd.f32 %v305, %v501
    %v534 = vadd.f32 %v308, %v504
    %v535 = vadd.f32 %v310, %v506
    %v536 = vadd.f32 %v313, %v509
    %v537 = vadd.f32 %v315, %v511
    %v538 = vadd.f32 %v318, %v514
    %v539 = vadd.f32 %v320, %v516
    %v540 = vadd.f32 %v323, %v519
    %v541 = vadd.f32 %v325, %v521
    %v542 = vadd.f32 %v328, %v524
    %v543 = vadd.f32 %v330, %v526
    %v544 = vxor.u32 %v528, 2147483648
    %v545 = vxor.u32 %v529, 2147483648
    %v546 = vxor.u32 %v530, 2147483648
    %v547 = vxor.u32 %v531, 2147483648
    %v548 = vmul.f32 %v544, 1.442695
    %v549 = vpow.pop %v548
    %v550 = vmul.f32 %v545, 1.442695
    %v551 = vpow.pop %v550
    %v552 = vmul.f32 %v546, 1.442695
    %v553 = vpow.pop %v552
    %v554 = vmul.f32 %v547, 1.442695
    %v555 = vpow.pop %v554
    %v556 = vadd.f32 %v549, 1.0
    %v557 = vadd.f32 %v551, 1.0
    %v558 = vadd.f32 %v553, 1.0
    %v559 = vadd.f32 %v555, 1.0
    %v560 = vrcp.pop %v556
    %v561 = vmul.f32 %v556, %v560
    %v562 = vsub.f32 1.0, %v561
    %v563 = vmul.f32 %v560, %v562
    %v564 = vadd.f32 %v560, %v563
    %vm565 = vweird.f32 %v556
    %vm566 = vweird.f32 %v560
    %vm567 = vmor %vm565, %vm566
    %v568 = vsel %vm567, %v560, %v564
    %v569 = vand.u32 2147483647, %v556
    %vm570 = vcmp.eq.f32.partialorder %v569, 8.507059e+37
    %v571 = vand.u32 %v556, 2147483648
    %v572 = vor.u32 1.1754944e-38, %v571
    %v573 = vsel %vm570, %v572, %v568
    %v574 = vmul.f32 1.0, %v573
    %v575 = vrcp.pop %v557
    %v576 = vmul.f32 %v557, %v575
    %v577 = vsub.f32 1.0, %v576
    %v578 = vmul.f32 %v575, %v577
    %v579 = vadd.f32 %v575, %v578
    %vm580 = vweird.f32 %v557
    %vm581 = vweird.f32 %v575
    %vm582 = vmor %vm580, %vm581
    %v583 = vsel %vm582, %v575, %v579
    %v584 = vand.u32 2147483647, %v557
    %vm585 = vcmp.eq.f32.partialorder %v584, 8.507059e+37
    %v586 = vand.u32 %v557, 2147483648
    %v587 = vor.u32 1.1754944e-38, %v586
    %v588 = vsel %vm585, %v587, %v583
    %v589 = vmul.f32 1.0, %v588
    %v590 = vrcp.pop %v558
    %v591 = vmul.f32 %v558, %v590
    %v592 = vsub.f32 1.0, %v591
    %v593 = vmul.f32 %v590, %v592
    %v594 = vadd.f32 %v590, %v593
    %vm595 = vweird.f32 %v558
    %vm596 = vweird.f32 %v590
    %vm597 = vmor %vm595, %vm596
    %v598 = vsel %vm597, %v590, %v594
    %v599 = vand.u32 2147483647, %v558
    %vm600 = vcmp.eq.f32.partialorder %v599, 8.507059e+37
    %v601 = vand.u32 %v558, 2147483648
    %v602 = vor.u32 1.1754944e-38, %v601
    %v603 = vsel %vm600, %v602, %v598
    %v604 = vmul.f32 1.0, %v603
    %v605 = vrcp.pop %v559
    %v606 = vmul.f32 %v559, %v605
    %v607 = vsub.f32 1.0, %v606
    %v608 = vmul.f32 %v605, %v607
    %v609 = vadd.f32 %v605, %v608
    %vm610 = vweird.f32 %v559
    %vm611 = vweird.f32 %v605
    %vm612 = vmor %vm610, %vm611
    %v613 = vsel %vm612, %v605, %v609
    %v614 = vand.u32 2147483647, %v559
    %vm615 = vcmp.eq.f32.partialorder %v614, 8.507059e+37
    %v616 = vand.u32 %v559, 2147483648
    %v617 = vor.u32 1.1754944e-38, %v616
    %v618 = vsel %vm615, %v617, %v613
    %v619 = vmul.f32 1.0, %v618
    %v620 = vxor.u32 %v532, 2147483648
    %v621 = vxor.u32 %v533, 2147483648
    %v622 = vxor.u32 %v534, 2147483648
    %v623 = vxor.u32 %v535, 2147483648
    %v624 = vmul.f32 %v620, 1.442695
    %v625 = vpow.pop %v624
    %v626 = vmul.f32 %v621, 1.442695
    %v627 = vpow.pop %v626
    %v628 = vmul.f32 %v622, 1.442695
    %v629 = vpow.pop %v628
    %v630 = vmul.f32 %v623, 1.442695
    %v631 = vpow.pop %v630
    %v632 = vadd.f32 %v625, 1.0
    %v633 = vadd.f32 %v627, 1.0
    %v634 = vadd.f32 %v629, 1.0
    %v635 = vadd.f32 %v631, 1.0
    %v636 = vrcp.pop %v632
    %v637 = vmul.f32 %v632, %v636
    %v638 = vsub.f32 1.0, %v637
    %v639 = vmul.f32 %v636, %v638
    %v640 = vadd.f32 %v636, %v639
    %vm641 = vweird.f32 %v632
    %vm642 = vweird.f32 %v636
    %vm643 = vmor %vm641, %vm642
    %v644 = vsel %vm643, %v636, %v640
    %v645 = vand.u32 2147483647, %v632
    %vm646 = vcmp.eq.f32.partialorder %v645, 8.507059e+37
    %v647 = vand.u32 %v632, 2147483648
    %v648 = vor.u32 1.1754944e-38, %v647
    %v649 = vsel %vm646, %v648, %v644
    %v650 = vmul.f32 1.0, %v649
    %v651 = vrcp.pop %v633
    %v652 = vmul.f32 %v633, %v651
    %v653 = vsub.f32 1.0, %v652
    %v654 = vmul.f32 %v651, %v653
    %v655 = vadd.f32 %v651, %v654
    %vm656 = vweird.f32 %v633
    %vm657 = vweird.f32 %v651
    %vm658 = vmor %vm656, %vm657
    %v659 = vsel %vm658, %v651, %v655
    %v660 = vand.u32 2147483647, %v633
    %vm661 = vcmp.eq.f32.partialorder %v660, 8.507059e+37
    %v662 = vand.u32 %v633, 2147483648
    %v663 = vor.u32 1.1754944e-38, %v662
    %v664 = vsel %vm661, %v663, %v659
    %v665 = vmul.f32 1.0, %v664
    %v666 = vrcp.pop %v634
    %v667 = vmul.f32 %v634, %v666
    %v668 = vsub.f32 1.0, %v667
    %v669 = vmul.f32 %v666, %v668
    %v670 = vadd.f32 %v666, %v669
    %vm671 = vweird.f32 %v634
    %vm672 = vweird.f32 %v666
    %vm673 = vmor %vm671, %vm672
    %v674 = vsel %vm673, %v666, %v670
    %v675 = vand.u32 2147483647, %v634
    %vm676 = vcmp.eq.f32.partialorder %v675, 8.507059e+37
    %v677 = vand.u32 %v634, 2147483648
    %v678 = vor.u32 1.1754944e-38, %v677
    %v679 = vsel %vm676, %v678, %v674
    %v680 = vmul.f32 1.0, %v679
    %v681 = vrcp.pop %v635
    %v682 = vmul.f32 %v635, %v681
    %v683 = vsub.f32 1.0, %v682
    %v684 = vmul.f32 %v681, %v683
    %v685 = vadd.f32 %v681, %v684
    %vm686 = vweird.f32 %v635
    %vm687 = vweird.f32 %v681
    %vm688 = vmor %vm686, %vm687
    %v689 = vsel %vm688, %v681, %v685
    %v690 = vand.u32 2147483647, %v635
    %vm691 = vcmp.eq.f32.partialorder %v690, 8.507059e+37
    %v692 = vand.u32 %v635, 2147483648
    %v693 = vor.u32 1.1754944e-38, %v692
    %v694 = vsel %vm691, %v693, %v689
    %v695 = vmul.f32 1.0, %v694
    %v696 = vtanh.pop %v536
    %v697 = vtanh.pop %v537
    %v698 = vtanh.pop %v538
    %v699 = vtanh.pop %v539
    %v700 = vxor.u32 %v540, 2147483648
    %v701 = vxor.u32 %v541, 2147483648
    %v702 = vxor.u32 %v542, 2147483648
    %v703 = vxor.u32 %v543, 2147483648
    %v704 = vmul.f32 %v700, 1.442695
    %v705 = vpow.pop %v704
    %v706 = vmul.f32 %v701, 1.442695
    %v707 = vpow.pop %v706
    %v708 = vmul.f32 %v702, 1.442695
    %v709 = vpow.pop %v708
    %v710 = vmul.f32 %v703, 1.442695
    %v711 = vpow.pop %v710
    %v712 = vadd.f32 %v705, 1.0
    %v713 = vadd.f32 %v707, 1.0
    %v714 = vadd.f32 %v709, 1.0
    %v715 = vadd.f32 %v711, 1.0
    %v716 = vrcp.pop %v712
    %v717 = vmul.f32 %v712, %v716
    %v718 = vsub.f32 1.0, %v717
    %v719 = vmul.f32 %v716, %v718
    %v720 = vadd.f32 %v716, %v719
    %vm721 = vweird.f32 %v712
    %vm722 = vweird.f32 %v716
    %vm723 = vmor %vm721, %vm722
    %v724 = vsel %vm723, %v716, %v720
    %v725 = vand.u32 2147483647, %v712
    %vm726 = vcmp.eq.f32.partialorder %v725, 8.507059e+37
    %v727 = vand.u32 %v712, 2147483648
    %v728 = vor.u32 1.1754944e-38, %v727
    %v729 = vsel %vm726, %v728, %v724
    %v730 = vmul.f32 1.0, %v729
    %v731 = vrcp.pop %v713
    %v732 = vmul.f32 %v713, %v731
    %v733 = vsub.f32 1.0, %v732
    %v734 = vmul.f32 %v731, %v733
    %v735 = vadd.f32 %v731, %v734
    %vm736 = vweird.f32 %v713
    %vm737 = vweird.f32 %v731
    %vm738 = vmor %vm736, %vm737
    %v739 = vsel %vm738, %v731, %v735
    %v740 = vand.u32 2147483647, %v713
    %vm741 = vcmp.eq.f32.partialorder %v740, 8.507059e+37
    %v742 = vand.u32 %v713, 2147483648
    %v743 = vor.u32 1.1754944e-38, %v742
    %v744 = vsel %vm741, %v743, %v739
    %v745 = vmul.f32 1.0, %v744
    %v746 = vrcp.pop %v714
    %v747 = vmul.f32 %v714, %v746
    %v748 = vsub.f32 1.0, %v747
    %v749 = vmul.f32 %v746, %v748
    %v750 = vadd.f32 %v746, %v749
    %vm751 = vweird.f32 %v714
    %vm752 = vweird.f32 %v746
    %vm753 = vmor %vm751, %vm752
    %v754 = vsel %vm753, %v746, %v750
    %v755 = vand.u32 2147483647, %v714
    %vm756 = vcmp.eq.f32.partialorder %v755, 8.507059e+37
    %v757 = vand.u32 %v714, 2147483648
    %v758 = vor.u32 1.1754944e-38, %v757
    %v759 = vsel %vm756, %v758, %v754
    %v760 = vmul.f32 1.0, %v759
    %v761 = vrcp.pop %v715
    %v762 = vmul.f32 %v715, %v761
    %v763 = vsub.f32 1.0, %v762
    %v764 = vmul.f32 %v761, %v763
    %v765 = vadd.f32 %v761, %v764
    %vm766 = vweird.f32 %v715
    %vm767 = vweird.f32 %v761
    %vm768 = vmor %vm766, %vm767
    %v769 = vsel %vm768, %v761, %v765
    %v770 = vand.u32 2147483647, %v715
    %vm771 = vcmp.eq.f32.partialorder %v770, 8.507059e+37
    %v772 = vand.u32 %v715, 2147483648
    %v773 = vor.u32 1.1754944e-38, %v772
    %v774 = vsel %vm771, %v773, %v769
    %v775 = vmul.f32 1.0, %v774
    %v776 = vmul.f32 %v650, 0.0
    %v777 = vmul.f32 %v665, 0.0
    %v778 = vmul.f32 %v680, 0.0
    %v779 = vmul.f32 %v695, 0.0
    %v780 = vmul.f32 %v574, %v696
    %v781 = vmul.f32 %v589, %v697
    %v782 = vmul.f32 %v604, %v698
    %v783 = vmul.f32 %v619, %v699
    %v784 = vadd.f32 %v776, %v780
    %v785 = vadd.f32 %v777, %v781
    %v786 = vadd.f32 %v778, %v782
    %v787 = vadd.f32 %v779, %v783
    %v788 = vtanh.pop %v784
    %v789 = vtanh.pop %v785
    %v790 = vtanh.pop %v786
    %v791 = vtanh.pop %v787
    %v792 = vmul.f32 %v730, %v788
    %v793 = vmul.f32 %v745, %v789
    %v794 = vmul.f32 %v760, %v790
    %v795 = vmul.f32 %v775, %v791
    %v796 = vpack.c.bf16 %v793, %v792
    %v797 = vpack.c.bf16 %v795, %v794
    %798 = vmatpush.bf16.msra.mxu0 0
    %799 = vmatpush.bf16.msra.mxu0 0
    %800 = vmatpush.bf16.msra.mxu0 0
    %801 = vmatpush.bf16.msra.mxu0 0
    %802 = vmatpush.bf16.msra.mxu0 0
    %803 = vmatpush.bf16.msra.mxu0 0
    %804 = vmatpush.bf16.msra.mxu0 %v797
    %805 = vmatpush.bf16.msra.mxu0 %v796
    %806 = vmatmul.bf16.gmra.mxu0 %v456
    %v807 = vpop.f32.mrf.mxu0
    %v808 = vadd.f32 0.0, %v807
    %v809 = vpop.f32.mrf.mxu0
    %v810 = vadd.f32 0.0, %v809
    %811 = vmatmul.bf16.gmra.mxu0 %v459
    %v812 = vpop.f32.mrf.mxu0
    %v813 = vadd.f32 0.0, %v812
    %v814 = vpop.f32.mrf.mxu0
    %v815 = vadd.f32 0.0, %v814
    %816 = vmatmul.bf16.gmra.mxu0 %v462
    %v817 = vpop.f32.mrf.mxu0
    %v818 = vadd.f32 0.0, %v817
    %v819 = vpop.f32.mrf.mxu0
    %v820 = vadd.f32 0.0, %v819
    %821 = vmatmul.bf16.gmra.mxu0 %v465
    %v822 = vpop.f32.mrf.mxu0
    %v823 = vadd.f32 0.0, %v822
    %v824 = vpop.f32.mrf.mxu0
    %v825 = vadd.f32 0.0, %v824
    %826 = vmatmul.bf16.gmra.mxu0 %v468
    %v827 = vpop.f32.mrf.mxu0
    %v828 = vadd.f32 0.0, %v827
    %v829 = vpop.f32.mrf.mxu0
    %v830 = vadd.f32 0.0, %v829
    %831 = vmatmul.bf16.gmra.mxu0 %v471
    %v832 = vpop.f32.mrf.mxu0
    %v833 = vadd.f32 0.0, %v832
    %v834 = vpop.f32.mrf.mxu0
    %v835 = vadd.f32 0.0, %v834
    %836 = vmatmul.bf16.gmra.mxu0 %v474
    %v837 = vpop.f32.mrf.mxu0
    %v838 = vadd.f32 0.0, %v837
    %v839 = vpop.f32.mrf.mxu0
    %v840 = vadd.f32 0.0, %v839
    %841 = vmatmul.bf16.gmra.mxu0 %v477
    %v842 = vpop.f32.mrf.mxu0
    %v843 = vadd.f32 0.0, %v842
    %v844 = vpop.f32.mrf.mxu0
    %v845 = vadd.f32 0.0, %v844
    %846 = vdwg.mxu0
    %v847 = vadd.f32 %v375, %v808
    %v848 = vadd.f32 %v377, %v810
    %v849 = vadd.f32 %v380, %v813
    %v850 = vadd.f32 %v382, %v815
    %v851 = vadd.f32 %v385, %v818
    %v852 = vadd.f32 %v387, %v820
    %v853 = vadd.f32 %v390, %v823
    %v854 = vadd.f32 %v392, %v825
    %v855 = vadd.f32 %v395, %v828
    %v856 = vadd.f32 %v397, %v830
    %v857 = vadd.f32 %v400, %v833
    %v858 = vadd.f32 %v402, %v835
    %v859 = vadd.f32 %v405, %v838
    %v860 = vadd.f32 %v407, %v840
    %v861 = vadd.f32 %v410, %v843
    %v862 = vadd.f32 %v412, %v845
    %v863 = vxor.u32 %v847, 2147483648
    %v864 = vxor.u32 %v848, 2147483648
    %v865 = vxor.u32 %v849, 2147483648
    %v866 = vxor.u32 %v850, 2147483648
    %v867 = vmul.f32 %v863, 1.442695
    %v868 = vpow.pop %v867
    %v869 = vmul.f32 %v864, 1.442695
    %v870 = vpow.pop %v869
    %v871 = vmul.f32 %v865, 1.442695
    %v872 = vpow.pop %v871
    %v873 = vmul.f32 %v866, 1.442695
    %v874 = vpow.pop %v873
    %v875 = vadd.f32 %v868, 1.0
    %v876 = vadd.f32 %v870, 1.0
    %v877 = vadd.f32 %v872, 1.0
    %v878 = vadd.f32 %v874, 1.0
    %v879 = vrcp.pop %v875
    %v880 = vmul.f32 %v875, %v879
    %v881 = vsub.f32 1.0, %v880
    %v882 = vmul.f32 %v879, %v881
    %v883 = vadd.f32 %v879, %v882
    %vm884 = vweird.f32 %v875
    %vm885 = vweird.f32 %v879
    %vm886 = vmor %vm884, %vm885
    %v887 = vsel %vm886, %v879, %v883
    %v888 = vand.u32 2147483647, %v875
    %vm889 = vcmp.eq.f32.partialorder %v888, 8.507059e+37
    %v890 = vand.u32 %v875, 2147483648
    %v891 = vor.u32 1.1754944e-38, %v890
    %v892 = vsel %vm889, %v891, %v887
    %v893 = vmul.f32 1.0, %v892
    %v894 = vrcp.pop %v876
    %v895 = vmul.f32 %v876, %v894
    %v896 = vsub.f32 1.0, %v895
    %v897 = vmul.f32 %v894, %v896
    %v898 = vadd.f32 %v894, %v897
    %vm899 = vweird.f32 %v876
    %vm900 = vweird.f32 %v894
    %vm901 = vmor %vm899, %vm900
    %v902 = vsel %vm901, %v894, %v898
    %v903 = vand.u32 2147483647, %v876
    %vm904 = vcmp.eq.f32.partialorder %v903, 8.507059e+37
    %v905 = vand.u32 %v876, 2147483648
    %v906 = vor.u32 1.1754944e-38, %v905
    %v907 = vsel %vm904, %v906, %v902
    %v908 = vmul.f32 1.0, %v907
    %v909 = vrcp.pop %v877
    %v910 = vmul.f32 %v877, %v909
    %v911 = vsub.f32 1.0, %v910
    %v912 = vmul.f32 %v909, %v911
    %v913 = vadd.f32 %v909, %v912
    %vm914 = vweird.f32 %v877
    %vm915 = vweird.f32 %v909
    %vm916 = vmor %vm914, %vm915
    %v917 = vsel %vm916, %v909, %v913
    %v918 = vand.u32 2147483647, %v877
    %vm919 = vcmp.eq.f32.partialorder %v918, 8.507059e+37
    %v920 = vand.u32 %v877, 2147483648
    %v921 = vor.u32 1.1754944e-38, %v920
    %v922 = vsel %vm919, %v921, %v917
    %v923 = vmul.f32 1.0, %v922
    %v924 = vrcp.pop %v878
    %v925 = vmul.f32 %v878, %v924
    %v926 = vsub.f32 1.0, %v925
    %v927 = vmul.f32 %v924, %v926
    %v928 = vadd.f32 %v924, %v927
    %vm929 = vweird.f32 %v878
    %vm930 = vweird.f32 %v924
    %vm931 = vmor %vm929, %vm930
    %v932 = vsel %vm931, %v924, %v928
    %v933 = vand.u32 2147483647, %v878
    %vm934 = vcmp.eq.f32.partialorder %v933, 8.507059e+37
    %v935 = vand.u32 %v878, 2147483648
    %v936 = vor.u32 1.1754944e-38, %v935
    %v937 = vsel %vm934, %v936, %v932
    %v938 = vmul.f32 1.0, %v937
    %v939 = vxor.u32 %v851, 2147483648
    %v940 = vxor.u32 %v852, 2147483648
    %v941 = vxor.u32 %v853, 2147483648
    %v942 = vxor.u32 %v854, 2147483648
    %v943 = vmul.f32 %v939, 1.442695
    %v944 = vpow.pop %v943
    %v945 = vmul.f32 %v940, 1.442695
    %v946 = vpow.pop %v945
    %v947 = vmul.f32 %v941, 1.442695
    %v948 = vpow.pop %v947
    %v949 = vmul.f32 %v942, 1.442695
    %v950 = vpow.pop %v949
    %v951 = vadd.f32 %v944, 1.0
    %v952 = vadd.f32 %v946, 1.0
    %v953 = vadd.f32 %v948, 1.0
    %v954 = vadd.f32 %v950, 1.0
    %v955 = vrcp.pop %v951
    %v956 = vmul.f32 %v951, %v955
    %v957 = vsub.f32 1.0, %v956
    %v958 = vmul.f32 %v955, %v957
    %v959 = vadd.f32 %v955, %v958
    %vm960 = vweird.f32 %v951
    %vm961 = vweird.f32 %v955
    %vm962 = vmor %vm960, %vm961
    %v963 = vsel %vm962, %v955, %v959
    %v964 = vand.u32 2147483647, %v951
    %vm965 = vcmp.eq.f32.partialorder %v964, 8.507059e+37
    %v966 = vand.u32 %v951, 2147483648
    %v967 = vor.u32 1.1754944e-38, %v966
    %v968 = vsel %vm965, %v967, %v963
    %v969 = vmul.f32 1.0, %v968
    %v970 = vrcp.pop %v952
    %v971 = vmul.f32 %v952, %v970
    %v972 = vsub.f32 1.0, %v971
    %v973 = vmul.f32 %v970, %v972
    %v974 = vadd.f32 %v970, %v973
    %vm975 = vweird.f32 %v952
    %vm976 = vweird.f32 %v970
    %vm977 = vmor %vm975, %vm976
    %v978 = vsel %vm977, %v970, %v974
    %v979 = vand.u32 2147483647, %v952
    %vm980 = vcmp.eq.f32.partialorder %v979, 8.507059e+37
    %v981 = vand.u32 %v952, 2147483648
    %v982 = vor.u32 1.1754944e-38, %v981
    %v983 = vsel %vm980, %v982, %v978
    %v984 = vmul.f32 1.0, %v983
    %v985 = vrcp.pop %v953
    %v986 = vmul.f32 %v953, %v985
    %v987 = vsub.f32 1.0, %v986
    %v988 = vmul.f32 %v985, %v987
    %v989 = vadd.f32 %v985, %v988
    %vm990 = vweird.f32 %v953
    %vm991 = vweird.f32 %v985
    %vm992 = vmor %vm990, %vm991
    %v993 = vsel %vm992, %v985, %v989
    %v994 = vand.u32 2147483647, %v953
    %vm995 = vcmp.eq.f32.partialorder %v994, 8.507059e+37
    %v996 = vand.u32 %v953, 2147483648
    %v997 = vor.u32 1.1754944e-38, %v996
    %v998 = vsel %vm995, %v997, %v993
    %v999 = vmul.f32 1.0, %v998
    %v1000 = vrcp.pop %v954
    %v1001 = vmul.f32 %v954, %v1000
    %v1002 = vsub.f32 1.0, %v1001
    %v1003 = vmul.f32 %v1000, %v1002
    %v1004 = vadd.f32 %v1000, %v1003
    %vm1005 = vweird.f32 %v954
    %vm1006 = vweird.f32 %v1000
    %vm1007 = vmor %vm1005, %vm1006
    %v1008 = vsel %vm1007, %v1000, %v1004
    %v1009 = vand.u32 2147483647, %v954
    %vm1010 = vcmp.eq.f32.partialorder %v1009, 8.507059e+37
    %v1011 = vand.u32 %v954, 2147483648
    %v1012 = vor.u32 1.1754944e-38, %v1011
    %v1013 = vsel %vm1010, %v1012, %v1008
    %v1014 = vmul.f32 1.0, %v1013
    %v1015 = vtanh.pop %v855
    %v1016 = vtanh.pop %v856
    %v1017 = vtanh.pop %v857
    %v1018 = vtanh.pop %v858
    %v1019 = vxor.u32 %v859, 2147483648
    %v1020 = vxor.u32 %v860, 2147483648
    %v1021 = vxor.u32 %v861, 2147483648
    %v1022 = vxor.u32 %v862, 2147483648
    %v1023 = vmul.f32 %v1019, 1.442695
    %v1024 = vpow.pop %v1023
    %v1025 = vmul.f32 %v1020, 1.442695
    %v1026 = vpow.pop %v1025
    %v1027 = vmul.f32 %v1021, 1.442695
    %v1028 = vpow.pop %v1027
    %v1029 = vmul.f32 %v1022, 1.442695
    %v1030 = vpow.pop %v1029
    %v1031 = vadd.f32 %v1024, 1.0
    %v1032 = vadd.f32 %v1026, 1.0
    %v1033 = vadd.f32 %v1028, 1.0
    %v1034 = vadd.f32 %v1030, 1.0
    %v1035 = vrcp.pop %v1031
    %v1036 = vmul.f32 %v1031, %v1035
    %v1037 = vsub.f32 1.0, %v1036
    %v1038 = vmul.f32 %v1035, %v1037
    %v1039 = vadd.f32 %v1035, %v1038
    %vm1040 = vweird.f32 %v1031
    %vm1041 = vweird.f32 %v1035
    %vm1042 = vmor %vm1040, %vm1041
    %v1043 = vsel %vm1042, %v1035, %v1039
    %v1044 = vand.u32 2147483647, %v1031
    %vm1045 = vcmp.eq.f32.partialorder %v1044, 8.507059e+37
    %v1046 = vand.u32 %v1031, 2147483648
    %v1047 = vor.u32 1.1754944e-38, %v1046
    %v1048 = vsel %vm1045, %v1047, %v1043
    %v1049 = vmul.f32 1.0, %v1048
    %v1050 = vrcp.pop %v1032
    %v1051 = vmul.f32 %v1032, %v1050
    %v1052 = vsub.f32 1.0, %v1051
    %v1053 = vmul.f32 %v1050, %v1052
    %v1054 = vadd.f32 %v1050, %v1053
    %vm1055 = vweird.f32 %v1032
    %vm1056 = vweird.f32 %v1050
    %vm1057 = vmor %vm1055, %vm1056
    %v1058 = vsel %vm1057, %v1050, %v1054
    %v1059 = vand.u32 2147483647, %v1032
    %vm1060 = vcmp.eq.f32.partialorder %v1059, 8.507059e+37
    %v1061 = vand.u32 %v1032, 2147483648
    %v1062 = vor.u32 1.1754944e-38, %v1061
    %v1063 = vsel %vm1060, %v1062, %v1058
    %v1064 = vmul.f32 1.0, %v1063
    %v1065 = vrcp.pop %v1033
    %v1066 = vmul.f32 %v1033, %v1065
    %v1067 = vsub.f32 1.0, %v1066
    %v1068 = vmul.f32 %v1065, %v1067
    %v1069 = vadd.f32 %v1065, %v1068
    %vm1070 = vweird.f32 %v1033
    %vm1071 = vweird.f32 %v1065
    %vm1072 = vmor %vm1070, %vm1071
    %v1073 = vsel %vm1072, %v1065, %v1069
    %v1074 = vand.u32 2147483647, %v1033
    %vm1075 = vcmp.eq.f32.partialorder %v1074, 8.507059e+37
    %v1076 = vand.u32 %v1033, 2147483648
    %v1077 = vor.u32 1.1754944e-38, %v1076
    %v1078 = vsel %vm1075, %v1077, %v1073
    %v1079 = vmul.f32 1.0, %v1078
    %v1080 = vrcp.pop %v1034
    %v1081 = vmul.f32 %v1034, %v1080
    %v1082 = vsub.f32 1.0, %v1081
    %v1083 = vmul.f32 %v1080, %v1082
    %v1084 = vadd.f32 %v1080, %v1083
    %vm1085 = vweird.f32 %v1034
    %vm1086 = vweird.f32 %v1080
    %vm1087 = vmor %vm1085, %vm1086
    %v1088 = vsel %vm1087, %v1080, %v1084
    %v1089 = vand.u32 2147483647, %v1034
    %vm1090 = vcmp.eq.f32.partialorder %v1089, 8.507059e+37
    %v1091 = vand.u32 %v1034, 2147483648
    %v1092 = vor.u32 1.1754944e-38, %v1091
    %v1093 = vsel %vm1090, %v1092, %v1088
    %v1094 = vmul.f32 1.0, %v1093
    %v1095 = vmul.f32 %v969, %v784
    %v1096 = vmul.f32 %v984, %v785
    %v1097 = vmul.f32 %v999, %v786
    %v1098 = vmul.f32 %v1014, %v787
    %v1099 = vmul.f32 %v893, %v1015
    %v1100 = vmul.f32 %v908, %v1016
    %v1101 = vmul.f32 %v923, %v1017
    %v1102 = vmul.f32 %v938, %v1018
    %v1103 = vadd.f32 %v1095, %v1099
    %v1104 = vadd.f32 %v1096, %v1100
    %v1105 = vadd.f32 %v1097, %v1101
    %v1106 = vadd.f32 %v1098, %v1102
    %v1107 = vtanh.pop %v1103
    %v1108 = vtanh.pop %v1104
    %v1109 = vtanh.pop %v1105
    %v1110 = vtanh.pop %v1106
    %v1111 = vmul.f32 %v1049, %v1107
    %v1112 = vmul.f32 %v1064, %v1108
    %v1113 = vmul.f32 %v1079, %v1109
    %v1114 = vmul.f32 %v1094, %v1110
    %v1115 = vld [vmem:[%s4] sm:$0xf]
    %v1116 = vld [vmem:[%s4 + $0x4] sm:$0xf]
    %v1117 = vld [vmem:[%s4 + $0x8] sm:$0xf]
    %v1118 = vld [vmem:[%s4 + $0xc] sm:$0xf]
    %v1119 = vld [vmem:[%s4 + $0x10] sm:$0xf]
    %v1120 = vld [vmem:[%s4 + $0x14] sm:$0xf]
    %v1121 = vld [vmem:[%s4 + $0x18] sm:$0xf]
    %v1122 = vld [vmem:[%s4 + $0x1c] sm:$0xf]
    %v1123 = vld [vmem:[%s4 + $0x20] sm:$0xf]
    %v1124 = vld [vmem:[%s4 + $0x24] sm:$0xf]
    %v1125 = vld [vmem:[%s4 + $0x28] sm:$0xf]
    %v1126 = vld [vmem:[%s4 + $0x2c] sm:$0xf]
    %v1127 = vld [vmem:[%s4 + $0x30] sm:$0xf]
    %v1128 = vld [vmem:[%s4 + $0x34] sm:$0xf]
    %v1129 = vld [vmem:[%s4 + $0x38] sm:$0xf]
    %v1130 = vld [vmem:[%s4 + $0x3c] sm:$0xf]
    %v1131 = vld [vmem:[%s6] sm:$0xff]
    %v1132 = vld [vmem:[%s6 + $0x8] sm:$0xff]
    %v1133 = vld [vmem:[%s6 + $0x10] sm:$0xff]
    %v1134 = vld [vmem:[%s6 + $0x18] sm:$0xff]
    %v1135 = vld [vmem:[%s6 + $0x20] sm:$0xff]
    %v1136 = vld [vmem:[%s6 + $0x28] sm:$0xff]
    %v1137 = vld [vmem:[%s6 + $0x30] sm:$0xff]
    %v1138 = vld [vmem:[%s6 + $0x38] sm:$0xff]
    %v1139 = vld [vmem:[%s6 + $0x40] sm:$0xff]
    %v1140 = vld [vmem:[%s6 + $0x48] sm:$0xff]
    %v1141 = vld [vmem:[%s6 + $0x50] sm:$0xff]
    %v1142 = vld [vmem:[%s6 + $0x58] sm:$0xff]
    %v1143 = vld [vmem:[%s6 + $0x60] sm:$0xff]
    %v1144 = vld [vmem:[%s6 + $0x68] sm:$0xff]
    %v1145 = vld [vmem:[%s6 + $0x70] sm:$0xff]
    %v1146 = vld [vmem:[%s6 + $0x78] sm:$0xff]
    %1148 = vset.pattern.permute.xlu0 0
    %1149 = vperm.xlu0 %1148, %v1131
    %v1150 = vpop.permute.xlu0 %1149
    %1153 = vset.pattern.permute.xlu0 0
    %1154 = vperm.xlu0 %1153, %v1132
    %v1155 = vpop.permute.xlu0 %1154
    %1158 = vset.pattern.permute.xlu0 0
    %1159 = vperm.xlu0 %1158, %v1133
    %v1160 = vpop.permute.xlu0 %1159
    %1163 = vset.pattern.permute.xlu0 0
    %1164 = vperm.xlu0 %1163, %v1134
    %v1165 = vpop.permute.xlu0 %1164
    %1168 = vset.pattern.permute.xlu0 0
    %1169 = vperm.xlu0 %1168, %v1135
    %v1170 = vpop.permute.xlu0 %1169
    %1173 = vset.pattern.permute.xlu0 0
    %1174 = vperm.xlu0 %1173, %v1136
    %v1175 = vpop.permute.xlu0 %1174
    %1178 = vset.pattern.permute.xlu0 0
    %1179 = vperm.xlu0 %1178, %v1137
    %v1180 = vpop.permute.xlu0 %1179
    %1183 = vset.pattern.permute.xlu0 0
    %1184 = vperm.xlu0 %1183, %v1138
    %v1185 = vpop.permute.xlu0 %1184
    %1188 = vset.pattern.permute.xlu0 0
    %1189 = vperm.xlu0 %1188, %v1139
    %v1190 = vpop.permute.xlu0 %1189
    %1193 = vset.pattern.permute.xlu0 0
    %1194 = vperm.xlu0 %1193, %v1140
    %v1195 = vpop.permute.xlu0 %1194
    %1198 = vset.pattern.permute.xlu0 0
    %1199 = vperm.xlu0 %1198, %v1141
    %v1200 = vpop.permute.xlu0 %1199
    %1203 = vset.pattern.permute.xlu0 0
    %1204 = vperm.xlu0 %1203, %v1142
    %v1205 = vpop.permute.xlu0 %1204
    %1208 = vset.pattern.permute.xlu0 0
    %1209 = vperm.xlu0 %1208, %v1143
    %v1210 = vpop.permute.xlu0 %1209
    %1213 = vset.pattern.permute.xlu0 0
    %1214 = vperm.xlu0 %1213, %v1144
    %v1215 = vpop.permute.xlu0 %1214
    %1218 = vset.pattern.permute.xlu0 0
    %1219 = vperm.xlu0 %1218, %v1145
    %v1220 = vpop.permute.xlu0 %1219
    %1223 = vset.pattern.permute.xlu0 0
    %1224 = vperm.xlu0 %1223, %v1146
    %v1225 = vpop.permute.xlu0 %1224
    %v1243 = vunpack.c.l.b16 %v1115
    %v1244 = vunpack.c.l.b16 %v1116
    %v1245 = vunpack.c.l.b16 %v1117
    %v1246 = vunpack.c.l.b16 %v1118
    %v1247 = vunpack.c.l.b16 %v1119
    %v1248 = vunpack.c.l.b16 %v1120
    %v1249 = vunpack.c.l.b16 %v1121
    %v1250 = vunpack.c.l.b16 %v1122
    %v1251 = vunpack.c.l.b16 %v1123
    %v1252 = vunpack.c.l.b16 %v1124
    %v1253 = vunpack.c.l.b16 %v1125
    %v1254 = vunpack.c.l.b16 %v1126
    %v1255 = vunpack.c.l.b16 %v1127
    %v1256 = vunpack.c.l.b16 %v1128
    %v1257 = vunpack.c.l.b16 %v1129
    %v1258 = vunpack.c.l.b16 %v1130
    %v1259 = vpack.c.b16 %v1244, %v1243
    %v1260 = vpack.c.b16 %v1246, %v1245
    %v1261 = vpack.c.b16 %v1248, %v1247
    %v1262 = vpack.c.b16 %v1250, %v1249
    %v1263 = vpack.c.b16 %v1252, %v1251
    %v1264 = vpack.c.b16 %v1254, %v1253
    %v1265 = vpack.c.b16 %v1256, %v1255
    %v1266 = vpack.c.b16 %v1258, %v1257
    %v1268 = vsel %vm454, %v1259, 0
    %v1271 = vsel %vm454, %v1260, 0
    %v1274 = vsel %vm454, %v1261, 0
    %v1277 = vsel %vm454, %v1262, 0
    %v1280 = vsel %vm454, %v1263, 0
    %v1283 = vsel %vm454, %v1264, 0
    %v1286 = vsel %vm454, %v1265, 0
    %v1289 = vsel %vm454, %v1266, 0
    %1291 = vmatpush.bf16.msra.mxu0 0
    %1292 = vmatpush.bf16.msra.mxu0 0
    %1293 = vmatpush.bf16.msra.mxu0 0
    %1294 = vmatpush.bf16.msra.mxu0 0
    %1295 = vmatpush.bf16.msra.mxu0 0
    %1296 = vmatpush.bf16.msra.mxu0 0
    %1297 = vmatpush.bf16.msra.mxu0 %v797
    %1298 = vmatpush.bf16.msra.mxu0 %v796
    %1299 = vmatmul.bf16.gmra.mxu0 %v1268
    %v1300 = vpop.f32.mrf.mxu0
    %v1301 = vadd.f32 %v1150, %v1300
    %v1302 = vpop.f32.mrf.mxu0
    %v1303 = vadd.f32 %v1155, %v1302
    %1304 = vmatmul.bf16.gmra.mxu0 %v1271
    %v1305 = vpop.f32.mrf.mxu0
    %v1306 = vadd.f32 %v1160, %v1305
    %v1307 = vpop.f32.mrf.mxu0
    %v1308 = vadd.f32 %v1165, %v1307
    %1309 = vmatmul.bf16.gmra.mxu0 %v1274
    %v1310 = vpop.f32.mrf.mxu0
    %v1311 = vadd.f32 %v1170, %v1310
    %v1312 = vpop.f32.mrf.mxu0
    %v1313 = vadd.f32 %v1175, %v1312
    %1314 = vmatmul.bf16.gmra.mxu0 %v1277
    %v1315 = vpop.f32.mrf.mxu0
    %v1316 = vadd.f32 %v1180, %v1315
    %v1317 = vpop.f32.mrf.mxu0
    %v1318 = vadd.f32 %v1185, %v1317
    %1319 = vmatmul.bf16.gmra.mxu0 %v1280
    %v1320 = vpop.f32.mrf.mxu0
    %v1321 = vadd.f32 %v1190, %v1320
    %v1322 = vpop.f32.mrf.mxu0
    %v1323 = vadd.f32 %v1195, %v1322
    %1324 = vmatmul.bf16.gmra.mxu0 %v1283
    %v1325 = vpop.f32.mrf.mxu0
    %v1326 = vadd.f32 %v1200, %v1325
    %v1327 = vpop.f32.mrf.mxu0
    %v1328 = vadd.f32 %v1205, %v1327
    %1329 = vmatmul.bf16.gmra.mxu0 %v1286
    %v1330 = vpop.f32.mrf.mxu0
    %v1331 = vadd.f32 %v1210, %v1330
    %v1332 = vpop.f32.mrf.mxu0
    %v1333 = vadd.f32 %v1215, %v1332
    %1334 = vmatmul.bf16.gmra.mxu0 %v1289
    %v1335 = vpop.f32.mrf.mxu0
    %v1336 = vadd.f32 %v1220, %v1335
    %v1337 = vpop.f32.mrf.mxu0
    %v1338 = vadd.f32 %v1225, %v1337
    %1339 = vdwg.mxu0
    %v1340 = vpack.c.bf16 %v1112, %v1111
    %v1341 = vpack.c.bf16 %v1114, %v1113
    %1342 = vmatpush.bf16.msra.mxu0 0
    %1343 = vmatpush.bf16.msra.mxu0 0
    %1344 = vmatpush.bf16.msra.mxu0 0
    %1345 = vmatpush.bf16.msra.mxu0 0
    %1346 = vmatpush.bf16.msra.mxu0 0
    %1347 = vmatpush.bf16.msra.mxu0 0
    %1348 = vmatpush.bf16.msra.mxu0 %v1341
    %1349 = vmatpush.bf16.msra.mxu0 %v1340
    %1350 = vmatmul.bf16.gmra.mxu0 %v1268
    %v1351 = vpop.f32.mrf.mxu0
    %v1352 = vadd.f32 %v1150, %v1351
    %v1353 = vpop.f32.mrf.mxu0
    %v1354 = vadd.f32 %v1155, %v1353
    %1355 = vmatmul.bf16.gmra.mxu0 %v1271
    %v1356 = vpop.f32.mrf.mxu0
    %v1357 = vadd.f32 %v1160, %v1356
    %v1358 = vpop.f32.mrf.mxu0
    %v1359 = vadd.f32 %v1165, %v1358
    %1360 = vmatmul.bf16.gmra.mxu0 %v1274
    %v1361 = vpop.f32.mrf.mxu0
    %v1362 = vadd.f32 %v1170, %v1361
    %v1363 = vpop.f32.mrf.mxu0
    %v1364 = vadd.f32 %v1175, %v1363
    %1365 = vmatmul.bf16.gmra.mxu0 %v1277
    %v1366 = vpop.f32.mrf.mxu0
    %v1367 = vadd.f32 %v1180, %v1366
    %v1368 = vpop.f32.mrf.mxu0
    %v1369 = vadd.f32 %v1185, %v1368
    %1370 = vmatmul.bf16.gmra.mxu0 %v1280
    %v1371 = vpop.f32.mrf.mxu0
    %v1372 = vadd.f32 %v1190, %v1371
    %v1373 = vpop.f32.mrf.mxu0
    %v1374 = vadd.f32 %v1195, %v1373
    %1375 = vmatmul.bf16.gmra.mxu0 %v1283
    %v1376 = vpop.f32.mrf.mxu0
    %v1377 = vadd.f32 %v1200, %v1376
    %v1378 = vpop.f32.mrf.mxu0
    %v1379 = vadd.f32 %v1205, %v1378
    %1380 = vmatmul.bf16.gmra.mxu0 %v1286
    %v1381 = vpop.f32.mrf.mxu0
    %v1382 = vadd.f32 %v1210, %v1381
    %v1383 = vpop.f32.mrf.mxu0
    %v1384 = vadd.f32 %v1215, %v1383
    %1385 = vmatmul.bf16.gmra.mxu0 %v1289
    %v1386 = vpop.f32.mrf.mxu0
    %v1387 = vadd.f32 %v1220, %v1386
    %v1388 = vpop.f32.mrf.mxu0
    %v1389 = vadd.f32 %v1225, %v1388
    %1390 = vdwg.mxu0
    %v1407 = vunpack.c.l.b16 %v58
    %v1408 = vunpack.c.l.b16 %v59
    %v1409 = vunpack.c.l.b16 %v60
    %v1410 = vunpack.c.l.b16 %v61
    %v1411 = vunpack.c.l.b16 %v62
    %v1412 = vunpack.c.l.b16 %v63
    %v1413 = vunpack.c.l.b16 %v64
    %v1414 = vunpack.c.l.b16 %v65
    %v1415 = vunpack.c.l.b16 %v66
    %v1416 = vunpack.c.l.b16 %v67
    %v1417 = vunpack.c.l.b16 %v68
    %v1418 = vunpack.c.l.b16 %v69
    %v1419 = vunpack.c.l.b16 %v70
    %v1420 = vunpack.c.l.b16 %v71
    %v1421 = vunpack.c.l.b16 %v72
    %v1422 = vunpack.c.l.b16 %v73
    %v1423 = vpack.c.b16 %v1408, %v1407
    %v1424 = vpack.c.b16 %v1410, %v1409
    %v1425 = vpack.c.b16 %v1412, %v1411
    %v1426 = vpack.c.b16 %v1414, %v1413
    %v1427 = vpack.c.b16 %v1416, %v1415
    %v1428 = vpack.c.b16 %v1418, %v1417
    %v1429 = vpack.c.b16 %v1420, %v1419
    %v1430 = vpack.c.b16 %v1422, %v1421
    %v1432 = vsel %vm454, %v1423, 0
    %v1435 = vsel %vm454, %v1424, 0
    %v1438 = vsel %vm454, %v1425, 0
    %v1441 = vsel %vm454, %v1426, 0
    %v1444 = vsel %vm454, %v1427, 0
    %v1447 = vsel %vm454, %v1428, 0
    %v1450 = vsel %vm454, %v1429, 0
    %v1453 = vsel %vm454, %v1430, 0
    %1455 = vmatpush.bf16.msra.mxu0 0
    %1456 = vmatpush.bf16.msra.mxu0 0
    %1457 = vmatpush.bf16.msra.mxu0 0
    %1458 = vmatpush.bf16.msra.mxu0 0
    %1459 = vmatpush.bf16.msra.mxu0 0
    %1460 = vmatpush.bf16.msra.mxu0 0
    %1461 = vmatpush.bf16.msra.mxu0 0
    %1462 = vmatpush.bf16.msra.mxu0 0
    %1463 = vmatmul.bf16.gmra.mxu0 %v1432
    %v1464 = vpop.f32.mrf.mxu0
    %v1465 = vadd.f32 0.0, %v1464
    %v1466 = vpop.f32.mrf.mxu0
    %v1467 = vadd.f32 0.0, %v1466
    %1468 = vmatmul.bf16.gmra.mxu0 %v1435
    %v1469 = vpop.f32.mrf.mxu0
    %v1470 = vadd.f32 0.0, %v1469
    %v1471 = vpop.f32.mrf.mxu0
    %v1472 = vadd.f32 0.0, %v1471
    %1473 = vmatmul.bf16.gmra.mxu0 %v1438
    %v1474 = vpop.f32.mrf.mxu0
    %v1475 = vadd.f32 0.0, %v1474
    %v1476 = vpop.f32.mrf.mxu0
    %v1477 = vadd.f32 0.0, %v1476
    %1478 = vmatmul.bf16.gmra.mxu0 %v1441
    %v1479 = vpop.f32.mrf.mxu0
    %v1480 = vadd.f32 0.0, %v1479
    %v1481 = vpop.f32.mrf.mxu0
    %v1482 = vadd.f32 0.0, %v1481
    %1483 = vmatmul.bf16.gmra.mxu0 %v1444
    %v1484 = vpop.f32.mrf.mxu0
    %v1485 = vadd.f32 0.0, %v1484
    %v1486 = vpop.f32.mrf.mxu0
    %v1487 = vadd.f32 0.0, %v1486
    %1488 = vmatmul.bf16.gmra.mxu0 %v1447
    %v1489 = vpop.f32.mrf.mxu0
    %v1490 = vadd.f32 0.0, %v1489
    %v1491 = vpop.f32.mrf.mxu0
    %v1492 = vadd.f32 0.0, %v1491
    %1493 = vmatmul.bf16.gmra.mxu0 %v1450
    %v1494 = vpop.f32.mrf.mxu0
    %v1495 = vadd.f32 0.0, %v1494
    %v1496 = vpop.f32.mrf.mxu0
    %v1497 = vadd.f32 0.0, %v1496
    %1498 = vmatmul.bf16.gmra.mxu0 %v1453
    %v1499 = vpop.f32.mrf.mxu0
    %v1500 = vadd.f32 0.0, %v1499
    %v1501 = vpop.f32.mrf.mxu0
    %v1502 = vadd.f32 0.0, %v1501
    %1503 = vdwg.mxu0
    %v1504 = vadd.f32 %v1301, %v1465
    %v1505 = vadd.f32 %v1303, %v1467
    %v1506 = vadd.f32 %v1306, %v1470
    %v1507 = vadd.f32 %v1308, %v1472
    %v1508 = vadd.f32 %v1311, %v1475
    %v1509 = vadd.f32 %v1313, %v1477
    %v1510 = vadd.f32 %v1316, %v1480
    %v1511 = vadd.f32 %v1318, %v1482
    %v1512 = vadd.f32 %v1321, %v1485
    %v1513 = vadd.f32 %v1323, %v1487
    %v1514 = vadd.f32 %v1326, %v1490
    %v1515 = vadd.f32 %v1328, %v1492
    %v1516 = vadd.f32 %v1331, %v1495
    %v1517 = vadd.f32 %v1333, %v1497
    %v1518 = vadd.f32 %v1336, %v1500
    %v1519 = vadd.f32 %v1338, %v1502
    %v1520 = vxor.u32 %v1504, 2147483648
    %v1521 = vxor.u32 %v1505, 2147483648
    %v1522 = vxor.u32 %v1506, 2147483648
    %v1523 = vxor.u32 %v1507, 2147483648
    %v1524 = vmul.f32 %v1520, 1.442695
    %v1525 = vpow.pop %v1524
    %v1526 = vmul.f32 %v1521, 1.442695
    %v1527 = vpow.pop %v1526
    %v1528 = vmul.f32 %v1522, 1.442695
    %v1529 = vpow.pop %v1528
    %v1530 = vmul.f32 %v1523, 1.442695
    %v1531 = vpow.pop %v1530
    %v1532 = vadd.f32 %v1525, 1.0
    %v1533 = vadd.f32 %v1527, 1.0
    %v1534 = vadd.f32 %v1529, 1.0
    %v1535 = vadd.f32 %v1531, 1.0
    %v1536 = vrcp.pop %v1532
    %v1537 = vmul.f32 %v1532, %v1536
    %v1538 = vsub.f32 1.0, %v1537
    %v1539 = vmul.f32 %v1536, %v1538
    %v1540 = vadd.f32 %v1536, %v1539
    %vm1541 = vweird.f32 %v1532
    %vm1542 = vweird.f32 %v1536
    %vm1543 = vmor %vm1541, %vm1542
    %v1544 = vsel %vm1543, %v1536, %v1540
    %v1545 = vand.u32 2147483647, %v1532
    %vm1546 = vcmp.eq.f32.partialorder %v1545, 8.507059e+37
    %v1547 = vand.u32 %v1532, 2147483648
    %v1548 = vor.u32 1.1754944e-38, %v1547
    %v1549 = vsel %vm1546, %v1548, %v1544
    %v1550 = vmul.f32 1.0, %v1549
    %v1551 = vrcp.pop %v1533
    %v1552 = vmul.f32 %v1533, %v1551
    %v1553 = vsub.f32 1.0, %v1552
    %v1554 = vmul.f32 %v1551, %v1553
    %v1555 = vadd.f32 %v1551, %v1554
    %vm1556 = vweird.f32 %v1533
    %vm1557 = vweird.f32 %v1551
    %vm1558 = vmor %vm1556, %vm1557
    %v1559 = vsel %vm1558, %v1551, %v1555
    %v1560 = vand.u32 2147483647, %v1533
    %vm1561 = vcmp.eq.f32.partialorder %v1560, 8.507059e+37
    %v1562 = vand.u32 %v1533, 2147483648
    %v1563 = vor.u32 1.1754944e-38, %v1562
    %v1564 = vsel %vm1561, %v1563, %v1559
    %v1565 = vmul.f32 1.0, %v1564
    %v1566 = vrcp.pop %v1534
    %v1567 = vmul.f32 %v1534, %v1566
    %v1568 = vsub.f32 1.0, %v1567
    %v1569 = vmul.f32 %v1566, %v1568
    %v1570 = vadd.f32 %v1566, %v1569
    %vm1571 = vweird.f32 %v1534
    %vm1572 = vweird.f32 %v1566
    %vm1573 = vmor %vm1571, %vm1572
    %v1574 = vsel %vm1573, %v1566, %v1570
    %v1575 = vand.u32 2147483647, %v1534
    %vm1576 = vcmp.eq.f32.partialorder %v1575, 8.507059e+37
    %v1577 = vand.u32 %v1534, 2147483648
    %v1578 = vor.u32 1.1754944e-38, %v1577
    %v1579 = vsel %vm1576, %v1578, %v1574
    %v1580 = vmul.f32 1.0, %v1579
    %v1581 = vrcp.pop %v1535
    %v1582 = vmul.f32 %v1535, %v1581
    %v1583 = vsub.f32 1.0, %v1582
    %v1584 = vmul.f32 %v1581, %v1583
    %v1585 = vadd.f32 %v1581, %v1584
    %vm1586 = vweird.f32 %v1535
    %vm1587 = vweird.f32 %v1581
    %vm1588 = vmor %vm1586, %vm1587
    %v1589 = vsel %vm1588, %v1581, %v1585
    %v1590 = vand.u32 2147483647, %v1535
    %vm1591 = vcmp.eq.f32.partialorder %v1590, 8.507059e+37
    %v1592 = vand.u32 %v1535, 2147483648
    %v1593 = vor.u32 1.1754944e-38, %v1592
    %v1594 = vsel %vm1591, %v1593, %v1589
    %v1595 = vmul.f32 1.0, %v1594
    %v1596 = vxor.u32 %v1508, 2147483648
    %v1597 = vxor.u32 %v1509, 2147483648
    %v1598 = vxor.u32 %v1510, 2147483648
    %v1599 = vxor.u32 %v1511, 2147483648
    %v1600 = vmul.f32 %v1596, 1.442695
    %v1601 = vpow.pop %v1600
    %v1602 = vmul.f32 %v1597, 1.442695
    %v1603 = vpow.pop %v1602
    %v1604 = vmul.f32 %v1598, 1.442695
    %v1605 = vpow.pop %v1604
    %v1606 = vmul.f32 %v1599, 1.442695
    %v1607 = vpow.pop %v1606
    %v1608 = vadd.f32 %v1601, 1.0
    %v1609 = vadd.f32 %v1603, 1.0
    %v1610 = vadd.f32 %v1605, 1.0
    %v1611 = vadd.f32 %v1607, 1.0
    %v1612 = vrcp.pop %v1608
    %v1613 = vmul.f32 %v1608, %v1612
    %v1614 = vsub.f32 1.0, %v1613
    %v1615 = vmul.f32 %v1612, %v1614
    %v1616 = vadd.f32 %v1612, %v1615
    %vm1617 = vweird.f32 %v1608
    %vm1618 = vweird.f32 %v1612
    %vm1619 = vmor %vm1617, %vm1618
    %v1620 = vsel %vm1619, %v1612, %v1616
    %v1621 = vand.u32 2147483647, %v1608
    %vm1622 = vcmp.eq.f32.partialorder %v1621, 8.507059e+37
    %v1623 = vand.u32 %v1608, 2147483648
    %v1624 = vor.u32 1.1754944e-38, %v1623
    %v1625 = vsel %vm1622, %v1624, %v1620
    %v1626 = vmul.f32 1.0, %v1625
    %v1627 = vrcp.pop %v1609
    %v1628 = vmul.f32 %v1609, %v1627
    %v1629 = vsub.f32 1.0, %v1628
    %v1630 = vmul.f32 %v1627, %v1629
    %v1631 = vadd.f32 %v1627, %v1630
    %vm1632 = vweird.f32 %v1609
    %vm1633 = vweird.f32 %v1627
    %vm1634 = vmor %vm1632, %vm1633
    %v1635 = vsel %vm1634, %v1627, %v1631
    %v1636 = vand.u32 2147483647, %v1609
    %vm1637 = vcmp.eq.f32.partialorder %v1636, 8.507059e+37
    %v1638 = vand.u32 %v1609, 2147483648
    %v1639 = vor.u32 1.1754944e-38, %v1638
    %v1640 = vsel %vm1637, %v1639, %v1635
    %v1641 = vmul.f32 1.0, %v1640
    %v1642 = vrcp.pop %v1610
    %v1643 = vmul.f32 %v1610, %v1642
    %v1644 = vsub.f32 1.0, %v1643
    %v1645 = vmul.f32 %v1642, %v1644
    %v1646 = vadd.f32 %v1642, %v1645
    %vm1647 = vweird.f32 %v1610
    %vm1648 = vweird.f32 %v1642
    %vm1649 = vmor %vm1647, %vm1648
    %v1650 = vsel %vm1649, %v1642, %v1646
    %v1651 = vand.u32 2147483647, %v1610
    %vm1652 = vcmp.eq.f32.partialorder %v1651, 8.507059e+37
    %v1653 = vand.u32 %v1610, 2147483648
    %v1654 = vor.u32 1.1754944e-38, %v1653
    %v1655 = vsel %vm1652, %v1654, %v1650
    %v1656 = vmul.f32 1.0, %v1655
    %v1657 = vrcp.pop %v1611
    %v1658 = vmul.f32 %v1611, %v1657
    %v1659 = vsub.f32 1.0, %v1658
    %v1660 = vmul.f32 %v1657, %v1659
    %v1661 = vadd.f32 %v1657, %v1660
    %vm1662 = vweird.f32 %v1611
    %vm1663 = vweird.f32 %v1657
    %vm1664 = vmor %vm1662, %vm1663
    %v1665 = vsel %vm1664, %v1657, %v1661
    %v1666 = vand.u32 2147483647, %v1611
    %vm1667 = vcmp.eq.f32.partialorder %v1666, 8.507059e+37
    %v1668 = vand.u32 %v1611, 2147483648
    %v1669 = vor.u32 1.1754944e-38, %v1668
    %v1670 = vsel %vm1667, %v1669, %v1665
    %v1671 = vmul.f32 1.0, %v1670
    %v1672 = vtanh.pop %v1512
    %v1673 = vtanh.pop %v1513
    %v1674 = vtanh.pop %v1514
    %v1675 = vtanh.pop %v1515
    %v1676 = vxor.u32 %v1516, 2147483648
    %v1677 = vxor.u32 %v1517, 2147483648
    %v1678 = vxor.u32 %v1518, 2147483648
    %v1679 = vxor.u32 %v1519, 2147483648
    %v1680 = vmul.f32 %v1676, 1.442695
    %v1681 = vpow.pop %v1680
    %v1682 = vmul.f32 %v1677, 1.442695
    %v1683 = vpow.pop %v1682
    %v1684 = vmul.f32 %v1678, 1.442695
    %v1685 = vpow.pop %v1684
    %v1686 = vmul.f32 %v1679, 1.442695
    %v1687 = vpow.pop %v1686
    %v1688 = vadd.f32 %v1681, 1.0
    %v1689 = vadd.f32 %v1683, 1.0
    %v1690 = vadd.f32 %v1685, 1.0
    %v1691 = vadd.f32 %v1687, 1.0
    %v1692 = vrcp.pop %v1688
    %v1693 = vmul.f32 %v1688, %v1692
    %v1694 = vsub.f32 1.0, %v1693
    %v1695 = vmul.f32 %v1692, %v1694
    %v1696 = vadd.f32 %v1692, %v1695
    %vm1697 = vweird.f32 %v1688
    %vm1698 = vweird.f32 %v1692
    %vm1699 = vmor %vm1697, %vm1698
    %v1700 = vsel %vm1699, %v1692, %v1696
    %v1701 = vand.u32 2147483647, %v1688
    %vm1702 = vcmp.eq.f32.partialorder %v1701, 8.507059e+37
    %v1703 = vand.u32 %v1688, 2147483648
    %v1704 = vor.u32 1.1754944e-38, %v1703
    %v1705 = vsel %vm1702, %v1704, %v1700
    %v1706 = vmul.f32 1.0, %v1705
    %v1707 = vrcp.pop %v1689
    %v1708 = vmul.f32 %v1689, %v1707
    %v1709 = vsub.f32 1.0, %v1708
    %v1710 = vmul.f32 %v1707, %v1709
    %v1711 = vadd.f32 %v1707, %v1710
    %vm1712 = vweird.f32 %v1689
    %vm1713 = vweird.f32 %v1707
    %vm1714 = vmor %vm1712, %vm1713
    %v1715 = vsel %vm1714, %v1707, %v1711
    %v1716 = vand.u32 2147483647, %v1689
    %vm1717 = vcmp.eq.f32.partialorder %v1716, 8.507059e+37
    %v1718 = vand.u32 %v1689, 2147483648
    %v1719 = vor.u32 1.1754944e-38, %v1718
    %v1720 = vsel %vm1717, %v1719, %v1715
    %v1721 = vmul.f32 1.0, %v1720
    %v1722 = vrcp.pop %v1690
    %v1723 = vmul.f32 %v1690, %v1722
    %v1724 = vsub.f32 1.0, %v1723
    %v1725 = vmul.f32 %v1722, %v1724
    %v1726 = vadd.f32 %v1722, %v1725
    %vm1727 = vweird.f32 %v1690
    %vm1728 = vweird.f32 %v1722
    %vm1729 = vmor %vm1727, %vm1728
    %v1730 = vsel %vm1729, %v1722, %v1726
    %v1731 = vand.u32 2147483647, %v1690
    %vm1732 = vcmp.eq.f32.partialorder %v1731, 8.507059e+37
    %v1733 = vand.u32 %v1690, 2147483648
    %v1734 = vor.u32 1.1754944e-38, %v1733
    %v1735 = vsel %vm1732, %v1734, %v1730
    %v1736 = vmul.f32 1.0, %v1735
    %v1737 = vrcp.pop %v1691
    %v1738 = vmul.f32 %v1691, %v1737
    %v1739 = vsub.f32 1.0, %v1738
    %v1740 = vmul.f32 %v1737, %v1739
    %v1741 = vadd.f32 %v1737, %v1740
    %vm1742 = vweird.f32 %v1691
    %vm1743 = vweird.f32 %v1737
    %vm1744 = vmor %vm1742, %vm1743
    %v1745 = vsel %vm1744, %v1737, %v1741
    %v1746 = vand.u32 2147483647, %v1691
    %vm1747 = vcmp.eq.f32.partialorder %v1746, 8.507059e+37
    %v1748 = vand.u32 %v1691, 2147483648
    %v1749 = vor.u32 1.1754944e-38, %v1748
    %v1750 = vsel %vm1747, %v1749, %v1745
    %v1751 = vmul.f32 1.0, %v1750
    %v1752 = vmul.f32 %v1626, 0.0
    %v1753 = vmul.f32 %v1641, 0.0
    %v1754 = vmul.f32 %v1656, 0.0
    %v1755 = vmul.f32 %v1671, 0.0
    %v1756 = vmul.f32 %v1550, %v1672
    %v1757 = vmul.f32 %v1565, %v1673
    %v1758 = vmul.f32 %v1580, %v1674
    %v1759 = vmul.f32 %v1595, %v1675
    %v1760 = vadd.f32 %v1752, %v1756
    %v1761 = vadd.f32 %v1753, %v1757
    %v1762 = vadd.f32 %v1754, %v1758
    %v1763 = vadd.f32 %v1755, %v1759
    %v1764 = vtanh.pop %v1760
    %v1765 = vtanh.pop %v1761
    %v1766 = vtanh.pop %v1762
    %v1767 = vtanh.pop %v1763
    %v1768 = vmul.f32 %v1706, %v1764
    %v1769 = vmul.f32 %v1721, %v1765
    %v1770 = vmul.f32 %v1736, %v1766
    %v1771 = vmul.f32 %v1751, %v1767
    %v1772 = vmax.f32 %v1768, 0.0
    %v1773 = vmax.f32 %v1769, 0.0
    %v1774 = vmax.f32 %v1770, 0.0
    %v1775 = vmax.f32 %v1771, 0.0
    %v1776 = vld [vmem:[%s8] sm:$0xff]
    %v1777 = vld [vmem:[%s8 + $0x8] sm:$0xff]
    %v1778 = vld [vmem:[%s8 + $0x10] sm:$0xff]
    %v1779 = vld [vmem:[%s8 + $0x18] sm:$0xff]
    %1781 = vset.pattern.permute.xlu0 0
    %1782 = vperm.xlu0 %1781, %v1776
    %v1783 = vpop.permute.xlu0 %1782
    %1786 = vset.pattern.permute.xlu0 0
    %1787 = vperm.xlu0 %1786, %v1777
    %v1788 = vpop.permute.xlu0 %1787
    %1791 = vset.pattern.permute.xlu0 0
    %1792 = vperm.xlu0 %1791, %v1778
    %v1793 = vpop.permute.xlu0 %1792
    %1796 = vset.pattern.permute.xlu0 0
    %1797 = vperm.xlu0 %1796, %v1779
    %v1798 = vpop.permute.xlu0 %1797
    %v1800 = vmul.f32 %v1772, %v1783
    %v1801 = vmul.f32 %v1773, %v1788
    %v1802 = vmul.f32 %v1774, %v1793
    %v1803 = vmul.f32 %v1775, %v1798
    %vm1804 = vcmask 31744
    %v1805 = vsel %vm1804, %v1800, 0.0
    %v1806 = vsel %vm1804, %v1801, 0.0
    %v1807 = vadd.f32 %v1805, %v1806
    %v1808 = vsel %vm1804, %v1802, 0.0
    %v1809 = vadd.f32 %v1807, %v1808
    %v1810 = vsel %vm1804, %v1803, 0.0
    %v1811 = vadd.f32 %v1809, %v1810
    %v1812 = vrot.slane %v1811, 4
    %v1813 = vadd.f32 %v1811, %v1812
    %v1814 = vrot.slane %v1813, 2
    %v1815 = vadd.f32 %v1813, %v1814
    %v1816 = vrot.slane %v1815, 1
    %v1817 = vadd.f32 %v1815, %v1816
    %v1818 = vld [vmem:[%s7] sm:$0x3f]
    %v1819 = vld [vmem:[%s9] sm:$0x3f]
    %1821 = vset.pattern.permute.xlu0 0
    %1822 = vperm.xlu0 %1821, %v1819
    %v1823 = vpop.permute.xlu0 %1822
    %v1825 = vmul.f32 %v1818, %v1823
    %vm1826 = vcmask 29696
    %v1827 = vsel %vm1826, %v1825, 0.0
    %v1828 = vrot.slane %v1827, 4
    %v1829 = vadd.f32 %v1827, %v1828
    %v1830 = vrot.slane %v1829, 2
    %v1831 = vadd.f32 %v1829, %v1830
    %v1832 = vrot.slane %v1831, 1
    %v1833 = vadd.f32 %v1831, %v1832
    %v1834 = vadd.f32 %v1817, %v1833
    %v1835 = vld [vmem:[#allocation2] sm:$0x1]
    %1837 = vset.pattern.permute.xlu0 0
    %1838 = vperm.xlu0 %1837, %v1835
    %v1839 = vpop.permute.xlu0 %1838
    %v1841 = vperm.slane %v1839, 0
    %v1842 = vadd.f32 %v1834, %v1841
    %vm1843 = vcmask 24576
    %1844 = vst.msk [vmem:[#allocation3] sm:$0x1] %vm1843, %v1842
    %v1845 = vpack.c.bf16 %v1769, %v1768
    %v1846 = vpack.c.bf16 %v1771, %v1770
    %1847 = vmatpush.bf16.msra.mxu0 0
    %1848 = vmatpush.bf16.msra.mxu0 0
    %1849 = vmatpush.bf16.msra.mxu0 0
    %1850 = vmatpush.bf16.msra.mxu0 0
    %1851 = vmatpush.bf16.msra.mxu0 0
    %1852 = vmatpush.bf16.msra.mxu0 0
    %1853 = vmatpush.bf16.msra.mxu0 %v1846
    %1854 = vmatpush.bf16.msra.mxu0 %v1845
    %1855 = vmatmul.bf16.gmra.mxu0 %v1432
    %v1856 = vpop.f32.mrf.mxu0
    %v1857 = vadd.f32 0.0, %v1856
    %v1858 = vpop.f32.mrf.mxu0
    %v1859 = vadd.f32 0.0, %v1858
    %1860 = vmatmul.bf16.gmra.mxu0 %v1435
    %v1861 = vpop.f32.mrf.mxu0
    %v1862 = vadd.f32 0.0, %v1861
    %v1863 = vpop.f32.mrf.mxu0
    %v1864 = vadd.f32 0.0, %v1863
    %1865 = vmatmul.bf16.gmra.mxu0 %v1438
    %v1866 = vpop.f32.mrf.mxu0
    %v1867 = vadd.f32 0.0, %v1866
    %v1868 = vpop.f32.mrf.mxu0
    %v1869 = vadd.f32 0.0, %v1868
    %1870 = vmatmul.bf16.gmra.mxu0 %v1441
    %v1871 = vpop.f32.mrf.mxu0
    %v1872 = vadd.f32 0.0, %v1871
    %v1873 = vpop.f32.mrf.mxu0
    %v1874 = vadd.f32 0.0, %v1873
    %1875 = vmatmul.bf16.gmra.mxu0 %v1444
    %v1876 = vpop.f32.mrf.mxu0
    %v1877 = vadd.f32 0.0, %v1876
    %v1878 = vpop.f32.mrf.mxu0
    %v1879 = vadd.f32 0.0, %v1878
    %1880 = vmatmul.bf16.gmra.mxu0 %v1447
    %v1881 = vpop.f32.mrf.mxu0
    %v1882 = vadd.f32 0.0, %v1881
    %v1883 = vpop.f32.mrf.mxu0
    %v1884 = vadd.f32 0.0, %v1883
    %1885 = vmatmul.bf16.gmra.mxu0 %v1450
    %v1886 = vpop.f32.mrf.mxu0
    %v1887 = vadd.f32 0.0, %v1886
    %v1888 = vpop.f32.mrf.mxu0
    %v1889 = vadd.f32 0.0, %v1888
    %1890 = vmatmul.bf16.gmra.mxu0 %v1453
    %v1891 = vpop.f32.mrf.mxu0
    %v1892 = vadd.f32 0.0, %v1891
    %v1893 = vpop.f32.mrf.mxu0
    %v1894 = vadd.f32 0.0, %v1893
    %1895 = vdwg.mxu0
    %v1896 = vadd.f32 %v1352, %v1857
    %v1897 = vadd.f32 %v1354, %v1859
    %v1898 = vadd.f32 %v1357, %v1862
    %v1899 = vadd.f32 %v1359, %v1864
    %v1900 = vadd.f32 %v1362, %v1867
    %v1901 = vadd.f32 %v1364, %v1869
    %v1902 = vadd.f32 %v1367, %v1872
    %v1903 = vadd.f32 %v1369, %v1874
    %v1904 = vadd.f32 %v1372, %v1877
    %v1905 = vadd.f32 %v1374, %v1879
    %v1906 = vadd.f32 %v1377, %v1882
    %v1907 = vadd.f32 %v1379, %v1884
    %v1908 = vadd.f32 %v1382, %v1887
    %v1909 = vadd.f32 %v1384, %v1889
    %v1910 = vadd.f32 %v1387, %v1892
    %v1911 = vadd.f32 %v1389, %v1894
    %v1912 = vxor.u32 %v1896, 2147483648
    %v1913 = vxor.u32 %v1897, 2147483648
    %v1914 = vxor.u32 %v1898, 2147483648
    %v1915 = vxor.u32 %v1899, 2147483648
    %v1916 = vmul.f32 %v1912, 1.442695
    %v1917 = vpow.pop %v1916
    %v1918 = vmul.f32 %v1913, 1.442695
    %v1919 = vpow.pop %v1918
    %v1920 = vmul.f32 %v1914, 1.442695
    %v1921 = vpow.pop %v1920
    %v1922 = vmul.f32 %v1915, 1.442695
    %v1923 = vpow.pop %v1922
    %v1924 = vadd.f32 %v1917, 1.0
    %v1925 = vadd.f32 %v1919, 1.0
    %v1926 = vadd.f32 %v1921, 1.0
    %v1927 = vadd.f32 %v1923, 1.0
    %v1928 = vrcp.pop %v1924
    %v1929 = vmul.f32 %v1924, %v1928
    %v1930 = vsub.f32 1.0, %v1929
    %v1931 = vmul.f32 %v1928, %v1930
    %v1932 = vadd.f32 %v1928, %v1931
    %vm1933 = vweird.f32 %v1924
    %vm1934 = vweird.f32 %v1928
    %vm1935 = vmor %vm1933, %vm1934
    %v1936 = vsel %vm1935, %v1928, %v1932
    %v1937 = vand.u32 2147483647, %v1924
    %vm1938 = vcmp.eq.f32.partialorder %v1937, 8.507059e+37
    %v1939 = vand.u32 %v1924, 2147483648
    %v1940 = vor.u32 1.1754944e-38, %v1939
    %v1941 = vsel %vm1938, %v1940, %v1936
    %v1942 = vmul.f32 1.0, %v1941
    %v1943 = vrcp.pop %v1925
    %v1944 = vmul.f32 %v1925, %v1943
    %v1945 = vsub.f32 1.0, %v1944
    %v1946 = vmul.f32 %v1943, %v1945
    %v1947 = vadd.f32 %v1943, %v1946
    %vm1948 = vweird.f32 %v1925
    %vm1949 = vweird.f32 %v1943
    %vm1950 = vmor %vm1948, %vm1949
    %v1951 = vsel %vm1950, %v1943, %v1947
    %v1952 = vand.u32 2147483647, %v1925
    %vm1953 = vcmp.eq.f32.partialorder %v1952, 8.507059e+37
    %v1954 = vand.u32 %v1925, 2147483648
    %v1955 = vor.u32 1.1754944e-38, %v1954
    %v1956 = vsel %vm1953, %v1955, %v1951
    %v1957 = vmul.f32 1.0, %v1956
    %v1958 = vrcp.pop %v1926
    %v1959 = vmul.f32 %v1926, %v1958
    %v1960 = vsub.f32 1.0, %v1959
    %v1961 = vmul.f32 %v1958, %v1960
    %v1962 = vadd.f32 %v1958, %v1961
    %vm1963 = vweird.f32 %v1926
    %vm1964 = vweird.f32 %v1958
    %vm1965 = vmor %vm1963, %vm1964
    %v1966 = vsel %vm1965, %v1958, %v1962
    %v1967 = vand.u32 2147483647, %v1926
    %vm1968 = vcmp.eq.f32.partialorder %v1967, 8.507059e+37
    %v1969 = vand.u32 %v1926, 2147483648
    %v1970 = vor.u32 1.1754944e-38, %v1969
    %v1971 = vsel %vm1968, %v1970, %v1966
    %v1972 = vmul.f32 1.0, %v1971
    %v1973 = vrcp.pop %v1927
    %v1974 = vmul.f32 %v1927, %v1973
    %v1975 = vsub.f32 1.0, %v1974
    %v1976 = vmul.f32 %v1973, %v1975
    %v1977 = vadd.f32 %v1973, %v1976
    %vm1978 = vweird.f32 %v1927
    %vm1979 = vweird.f32 %v1973
    %vm1980 = vmor %vm1978, %vm1979
    %v1981 = vsel %vm1980, %v1973, %v1977
    %v1982 = vand.u32 2147483647, %v1927
    %vm1983 = vcmp.eq.f32.partialorder %v1982, 8.507059e+37
    %v1984 = vand.u32 %v1927, 2147483648
    %v1985 = vor.u32 1.1754944e-38, %v1984
    %v1986 = vsel %vm1983, %v1985, %v1981
    %v1987 = vmul.f32 1.0, %v1986
    %v1988 = vxor.u32 %v1900, 2147483648
    %v1989 = vxor.u32 %v1901, 2147483648
    %v1990 = vxor.u32 %v1902, 2147483648
    %v1991 = vxor.u32 %v1903, 2147483648
    %v1992 = vmul.f32 %v1988, 1.442695
    %v1993 = vpow.pop %v1992
    %v1994 = vmul.f32 %v1989, 1.442695
    %v1995 = vpow.pop %v1994
    %v1996 = vmul.f32 %v1990, 1.442695
    %v1997 = vpow.pop %v1996
    %v1998 = vmul.f32 %v1991, 1.442695
    %v1999 = vpow.pop %v1998
    %v2000 = vadd.f32 %v1993, 1.0
    %v2001 = vadd.f32 %v1995, 1.0
    %v2002 = vadd.f32 %v1997, 1.0
    %v2003 = vadd.f32 %v1999, 1.0
    %v2004 = vrcp.pop %v2000
    %v2005 = vmul.f32 %v2000, %v2004
    %v2006 = vsub.f32 1.0, %v2005
    %v2007 = vmul.f32 %v2004, %v2006
    %v2008 = vadd.f32 %v2004, %v2007
    %vm2009 = vweird.f32 %v2000
    %vm2010 = vweird.f32 %v2004
    %vm2011 = vmor %vm2009, %vm2010
    %v2012 = vsel %vm2011, %v2004, %v2008
    %v2013 = vand.u32 2147483647, %v2000
    %vm2014 = vcmp.eq.f32.partialorder %v2013, 8.507059e+37
    %v2015 = vand.u32 %v2000, 2147483648
    %v2016 = vor.u32 1.1754944e-38, %v2015
    %v2017 = vsel %vm2014, %v2016, %v2012
    %v2018 = vmul.f32 1.0, %v2017
    %v2019 = vrcp.pop %v2001
    %v2020 = vmul.f32 %v2001, %v2019
    %v2021 = vsub.f32 1.0, %v2020
    %v2022 = vmul.f32 %v2019, %v2021
    %v2023 = vadd.f32 %v2019, %v2022
    %vm2024 = vweird.f32 %v2001
    %vm2025 = vweird.f32 %v2019
    %vm2026 = vmor %vm2024, %vm2025
    %v2027 = vsel %vm2026, %v2019, %v2023
    %v2028 = vand.u32 2147483647, %v2001
    %vm2029 = vcmp.eq.f32.partialorder %v2028, 8.507059e+37
    %v2030 = vand.u32 %v2001, 2147483648
    %v2031 = vor.u32 1.1754944e-38, %v2030
    %v2032 = vsel %vm2029, %v2031, %v2027
    %v2033 = vmul.f32 1.0, %v2032
    %v2034 = vrcp.pop %v2002
    %v2035 = vmul.f32 %v2002, %v2034
    %v2036 = vsub.f32 1.0, %v2035
    %v2037 = vmul.f32 %v2034, %v2036
    %v2038 = vadd.f32 %v2034, %v2037
    %vm2039 = vweird.f32 %v2002
    %vm2040 = vweird.f32 %v2034
    %vm2041 = vmor %vm2039, %vm2040
    %v2042 = vsel %vm2041, %v2034, %v2038
    %v2043 = vand.u32 2147483647, %v2002
    %vm2044 = vcmp.eq.f32.partialorder %v2043, 8.507059e+37
    %v2045 = vand.u32 %v2002, 2147483648
    %v2046 = vor.u32 1.1754944e-38, %v2045
    %v2047 = vsel %vm2044, %v2046, %v2042
    %v2048 = vmul.f32 1.0, %v2047
    %v2049 = vrcp.pop %v2003
    %v2050 = vmul.f32 %v2003, %v2049
    %v2051 = vsub.f32 1.0, %v2050
    %v2052 = vmul.f32 %v2049, %v2051
    %v2053 = vadd.f32 %v2049, %v2052
    %vm2054 = vweird.f32 %v2003
    %vm2055 = vweird.f32 %v2049
    %vm2056 = vmor %vm2054, %vm2055
    %v2057 = vsel %vm2056, %v2049, %v2053
    %v2058 = vand.u32 2147483647, %v2003
    %vm2059 = vcmp.eq.f32.partialorder %v2058, 8.507059e+37
    %v2060 = vand.u32 %v2003, 2147483648
    %v2061 = vor.u32 1.1754944e-38, %v2060
    %v2062 = vsel %vm2059, %v2061, %v2057
    %v2063 = vmul.f32 1.0, %v2062
    %v2064 = vtanh.pop %v1904
    %v2065 = vtanh.pop %v1905
    %v2066 = vtanh.pop %v1906
    %v2067 = vtanh.pop %v1907
    %v2068 = vxor.u32 %v1908, 2147483648
    %v2069 = vxor.u32 %v1909, 2147483648
    %v2070 = vxor.u32 %v1910, 2147483648
    %v2071 = vxor.u32 %v1911, 2147483648
    %v2072 = vmul.f32 %v2068, 1.442695
    %v2073 = vpow.pop %v2072
    %v2074 = vmul.f32 %v2069, 1.442695
    %v2075 = vpow.pop %v2074
    %v2076 = vmul.f32 %v2070, 1.442695
    %v2077 = vpow.pop %v2076
    %v2078 = vmul.f32 %v2071, 1.442695
    %v2079 = vpow.pop %v2078
    %v2080 = vadd.f32 %v2073, 1.0
    %v2081 = vadd.f32 %v2075, 1.0
    %v2082 = vadd.f32 %v2077, 1.0
    %v2083 = vadd.f32 %v2079, 1.0
    %v2084 = vrcp.pop %v2080
    %v2085 = vmul.f32 %v2080, %v2084
    %v2086 = vsub.f32 1.0, %v2085
    %v2087 = vmul.f32 %v2084, %v2086
    %v2088 = vadd.f32 %v2084, %v2087
    %vm2089 = vweird.f32 %v2080
    %vm2090 = vweird.f32 %v2084
    %vm2091 = vmor %vm2089, %vm2090
    %v2092 = vsel %vm2091, %v2084, %v2088
    %v2093 = vand.u32 2147483647, %v2080
    %vm2094 = vcmp.eq.f32.partialorder %v2093, 8.507059e+37
    %v2095 = vand.u32 %v2080, 2147483648
    %v2096 = vor.u32 1.1754944e-38, %v2095
    %v2097 = vsel %vm2094, %v2096, %v2092
    %v2098 = vmul.f32 1.0, %v2097
    %v2099 = vrcp.pop %v2081
    %v2100 = vmul.f32 %v2081, %v2099
    %v2101 = vsub.f32 1.0, %v2100
    %v2102 = vmul.f32 %v2099, %v2101
    %v2103 = vadd.f32 %v2099, %v2102
    %vm2104 = vweird.f32 %v2081
    %vm2105 = vweird.f32 %v2099
    %vm2106 = vmor %vm2104, %vm2105
    %v2107 = vsel %vm2106, %v2099, %v2103
    %v2108 = vand.u32 2147483647, %v2081
    %vm2109 = vcmp.eq.f32.partialorder %v2108, 8.507059e+37
    %v2110 = vand.u32 %v2081, 2147483648
    %v2111 = vor.u32 1.1754944e-38, %v2110
    %v2112 = vsel %vm2109, %v2111, %v2107
    %v2113 = vmul.f32 1.0, %v2112
    %v2114 = vrcp.pop %v2082
    %v2115 = vmul.f32 %v2082, %v2114
    %v2116 = vsub.f32 1.0, %v2115
    %v2117 = vmul.f32 %v2114, %v2116
    %v2118 = vadd.f32 %v2114, %v2117
    %vm2119 = vweird.f32 %v2082
    %vm2120 = vweird.f32 %v2114
    %vm2121 = vmor %vm2119, %vm2120
    %v2122 = vsel %vm2121, %v2114, %v2118
    %v2123 = vand.u32 2147483647, %v2082
    %vm2124 = vcmp.eq.f32.partialorder %v2123, 8.507059e+37
    %v2125 = vand.u32 %v2082, 2147483648
    %v2126 = vor.u32 1.1754944e-38, %v2125
    %v2127 = vsel %vm2124, %v2126, %v2122
    %v2128 = vmul.f32 1.0, %v2127
    %v2129 = vrcp.pop %v2083
    %v2130 = vmul.f32 %v2083, %v2129
    %v2131 = vsub.f32 1.0, %v2130
    %v2132 = vmul.f32 %v2129, %v2131
    %v2133 = vadd.f32 %v2129, %v2132
    %vm2134 = vweird.f32 %v2083
    %vm2135 = vweird.f32 %v2129
    %vm2136 = vmor %vm2134, %vm2135
    %v2137 = vsel %vm2136, %v2129, %v2133
    %v2138 = vand.u32 2147483647, %v2083
    %vm2139 = vcmp.eq.f32.partialorder %v2138, 8.507059e+37
    %v2140 = vand.u32 %v2083, 2147483648
    %v2141 = vor.u32 1.1754944e-38, %v2140
    %v2142 = vsel %vm2139, %v2141, %v2137
    %v2143 = vmul.f32 1.0, %v2142
    %v2144 = vmul.f32 %v2018, %v1760
    %v2145 = vmul.f32 %v2033, %v1761
    %v2146 = vmul.f32 %v2048, %v1762
    %v2147 = vmul.f32 %v2063, %v1763
    %v2148 = vmul.f32 %v1942, %v2064
    %v2149 = vmul.f32 %v1957, %v2065
    %v2150 = vmul.f32 %v1972, %v2066
    %v2151 = vmul.f32 %v1987, %v2067
    %v2152 = vadd.f32 %v2144, %v2148
    %v2153 = vadd.f32 %v2145, %v2149
    %v2154 = vadd.f32 %v2146, %v2150
    %v2155 = vadd.f32 %v2147, %v2151
    %v2156 = vtanh.pop %v2152
    %v2157 = vtanh.pop %v2153
    %v2158 = vtanh.pop %v2154
    %v2159 = vtanh.pop %v2155
    %v2160 = vmul.f32 %v2098, %v2156
    %v2161 = vmul.f32 %v2113, %v2157
    %v2162 = vmul.f32 %v2128, %v2158
    %v2163 = vmul.f32 %v2143, %v2159
    %v2164 = vmax.f32 %v2160, 0.0
    %v2165 = vmax.f32 %v2161, 0.0
    %v2166 = vmax.f32 %v2162, 0.0
    %v2167 = vmax.f32 %v2163, 0.0
    %v2168 = vld [vmem:[%s8] sm:$0xff]
    %v2169 = vld [vmem:[%s8 + $0x8] sm:$0xff]
    %v2170 = vld [vmem:[%s8 + $0x10] sm:$0xff]
    %v2171 = vld [vmem:[%s8 + $0x18] sm:$0xff]
    %2173 = vset.pattern.permute.xlu0 0
    %2174 = vperm.xlu0 %2173, %v2168
    %v2175 = vpop.permute.xlu0 %2174
    %2178 = vset.pattern.permute.xlu0 0
    %2179 = vperm.xlu0 %2178, %v2169
    %v2180 = vpop.permute.xlu0 %2179
    %2183 = vset.pattern.permute.xlu0 0
    %2184 = vperm.xlu0 %2183, %v2170
    %v2185 = vpop.permute.xlu0 %2184
    %2188 = vset.pattern.permute.xlu0 0
    %2189 = vperm.xlu0 %2188, %v2171
    %v2190 = vpop.permute.xlu0 %2189
    %v2192 = vmul.f32 %v2164, %v2175
    %v2193 = vmul.f32 %v2165, %v2180
    %v2194 = vmul.f32 %v2166, %v2185
    %v2195 = vmul.f32 %v2167, %v2190
    %v2196 = vsel %vm1804, %v2192, 0.0
    %v2197 = vsel %vm1804, %v2193, 0.0
    %v2198 = vadd.f32 %v2196, %v2197
    %v2199 = vsel %vm1804, %v2194, 0.0
    %v2200 = vadd.f32 %v2198, %v2199
    %v2201 = vsel %vm1804, %v2195, 0.0
    %v2202 = vadd.f32 %v2200, %v2201
    %v2203 = vrot.slane %v2202, 4
    %v2204 = vadd.f32 %v2202, %v2203
    %v2205 = vrot.slane %v2204, 2
    %v2206 = vadd.f32 %v2204, %v2205
    %v2207 = vrot.slane %v2206, 1
    %v2208 = vadd.f32 %v2206, %v2207
    %s2209 = scalar_lea.vmem %s7, 8
    %v2210 = vld [vmem:[%s2209] sm:$0x3f]
    %v2211 = vld [vmem:[%s9] sm:$0x3f]
    %2213 = vset.pattern.permute.xlu0 0
    %2214 = vperm.xlu0 %2213, %v2211
    %v2215 = vpop.permute.xlu0 %2214
    %v2217 = vmul.f32 %v2210, %v2215
    %v2218 = vsel %vm1826, %v2217, 0.0
    %v2219 = vrot.slane %v2218, 4
    %v2220 = vadd.f32 %v2218, %v2219
    %v2221 = vrot.slane %v2220, 2
    %v2222 = vadd.f32 %v2220, %v2221
    %v2223 = vrot.slane %v2222, 1
    %v2224 = vadd.f32 %v2222, %v2223
    %v2225 = vadd.f32 %v2208, %v2224
    %v2226 = vld [vmem:[#allocation2] sm:$0x1]
    %2228 = vset.pattern.permute.xlu0 0
    %2229 = vperm.xlu0 %2228, %v2226
    %v2230 = vpop.permute.xlu0 %2229
    %v2232 = vperm.slane %v2230, 0
    %v2233 = vadd.f32 %v2225, %v2232
    %s2234 = scalar_lea.vmem [#allocation3], 1
    %2235 = vst.msk [vmem:[%s2234] sm:$0x1] %vm1843, %v2233
    // Predicated region
    $region46: #{forward.3} parent=1 // pred_check
      _
    $region47: #{forward.3} parent=1 // pred_check_branch
      %2237 = sbr.rel (0) target = $region49
    $region48: #{forward.3} parent=1 // pred_region
      %2239 = vsyncadd [#allocation4], 0
      %s2240 = sshll.u32 [#allocation3], 4
      %s2241 = int_to_ptr.vmem [resolvable:$true] %s2240
      %s2242 = sshll.u32 %s11, 4
      %s2243 = int_to_ptr.hbm [resolvable:$true] %s2242
      %2248 = dma.vmem_to_hbm [thread:$0]  %s2241, 32, %s2243, [#allocation4], 16, 16, 1
    $region49: #{forward.3} parent=1 // pred_fallthru
      _
    // Predicated region
    $region50: #{forward.3} parent=1 // pred_check
      _
    $region51: #{forward.3} parent=1 // pred_check_branch
      %2250 = sbr.rel (0) target = $region53
    $region52: #{forward.3} parent=1 // pred_region
      %2252 = dma.done [#allocation4], 32
    $region53: #{forward.3} parent=1 // pred_fallthru
      _
    %2253 = vsyncpa [#allocation4], 1

// kernel: forward.2
$region0: #{forward.2}
  #allocation0 [shape = 'u32[]', space=smem, size = 0x4, offset = 0x4, fixed_abs, tag = 'smem constant byte address 0x4 - core index']
  #allocation1 [shape = 'u32[72,128]{1,0:T(1,128)}', space=vmem, size = 0x9000, scoped, tag = 'internal scratch']
  %s0 = inlined_call_operand.vmem [shape: bf16[8,64,256], index: 0, kind: input, shape index: {}]
  %s1 = inlined_call_operand.vmem [shape: bf16[256,16], index: 1, kind: input, shape index: {}]
  %s2 = inlined_call_operand.vmem [shape: f32[1,16], index: 2, kind: input, shape index: {}]
  %s3 = inlined_call_operand.vmem [shape: f32[1,16], index: 3, kind: input, shape index: {}]
  %s4 = inlined_call_operand.vmem [shape: bf16[256,64], index: 4, kind: input, shape index: {}]
  %s5 = inlined_call_operand.vmem [shape: bf16[16,16,32], index: 5, kind: input, shape index: {}]
  %s6 = inlined_call_operand.vmem [shape: f32[1,32], index: 6, kind: input, shape index: {}]
  %s7 = inlined_call_operand.vmem [shape: f32[1,32], index: 7, kind: input, shape index: {}]
  %s8 = inlined_call_operand.vmem [shape: bf16[144,16], index: 8, kind: input, shape index: {}]
  %s9 = inlined_call_operand.vmem [shape: bf16[9,32,64], index: 9, kind: input, shape index: {}]
  %s10 = inlined_call_operand.vmem [shape: f32[1,64], index: 10, kind: input, shape index: {}]
  %s11 = inlined_call_operand.vmem [shape: f32[1,64], index: 11, kind: input, shape index: {}]
  %s12 = inlined_call_operand.vmem [shape: bf16[8,1,64], index: 12, kind: output, shape index: {}]
  %s13 = sld [smem:[#allocation0]]
  $region81: #{forward.2} parent=0
    _
  %s15 = ssub.s32 1, %s13
  %s16 = scalar_select 0, %s15, %s13
  loop: start=0, step=1, limit=10
  $region2: #{forward.2} parent=0 // loop_pre_header
    _
  $region3: #{forward.2} parent=0 // loop_header
    %s18 = sphi 0, %s22
    %p19 = scmp.ge.s32.totalorder %s18, 10
    %s28 = sphi 0, %s30
    %s31 = sphi 0, %s28
    %s32 = sphi 0, %s31
    %s48 = sphi 0, %s32
    %s52 = sphi 0, %s52
    %s54 = sphi 0, %s52
    %s55 = sphi 0, %s54
    %s69 = sphi 0, %s55
    %s73 = sphi 0, %s73
    %s75 = sphi 0, %s73
    %s76 = sphi 0, %s75
    %s90 = sphi 0, %s76
    %s94 = sphi 0, %s94
    %s96 = sphi 0, %s94
    %s97 = sphi 0, %s96
    %s111 = sphi 0, %s97
    %s115 = sphi 0, %s115
    %s117 = sphi 0, %s115
    %s118 = sphi 0, %s117
    %s132 = sphi 0, %s118
    %s136 = sphi 0, %s136
    %s138 = sphi 0, %s136
    %s139 = sphi 0, %s138
    %s153 = sphi 0, %s139
    %s157 = sphi 0, %s157
    %s159 = sphi 0, %s157
    %s160 = sphi 0, %s159
    %s174 = sphi 0, %s160
    %s178 = sphi 0, %s178
    %s180 = sphi 0, %s178
    %s181 = sphi 0, %s180
    %s195 = sphi 0, %s181
    %s199 = sphi 0, %s199
    %s201 = sphi 0, %s199
    %s202 = sphi 0, %s201
    %s216 = sphi 0, %s202
    %s220 = sphi 0, %s220
    %s222 = sphi 0, %s220
    %s223 = sphi 0, %s222
    %s237 = sphi 0, %s223
    %s241 = sphi 0, %s241
    %s243 = sphi 0, %s241
    %s244 = sphi 0, %s243
    %s258 = sphi 0, %s244
    %s262 = sphi 0, %s262
    %s264 = sphi 0, %s262
    %s265 = sphi 0, %s264
    %s279 = sphi 0, %s265
    %s285 = sphi 0, %s287
    %s288 = sphi 0, %s285
    %s289 = sphi 0, %s288
    %s305 = sphi 0, %s289
  $region4: #{forward.2} parent=0 // loop_header_branch
    %21 = sbr.rel (%p19) target = $region8
  $region5: #{forward.2} parent=0 // loop_body
    %s23 = ssub.s32 %s18, 1
    %s24 = ssub.s32 %s18, 2
    %s25 = sadd.s32 %s18, 1
    %s26 = ssub.s32 %s18, %s25
    %p27 = scmp.eq.s32.totalorder %s26, 0
    %s29 = sadd.s32 %s28, 1
    %s30 = scalar_select %p27, %s28, %s29
    %p33 = pneg %p27
    %p34 = scmp.eq.s32.totalorder %s18, 7
    %p35 = por %p33, %p34
    %p36 = scmp.ne.s32.totalorder %s28, %s31
    %p37 = scmp.eq.s32.totalorder %s18, 0
    %p38 = por %p36, %p37
    %p39 = scmp.ne.s32.totalorder %s28, %s31
    %p40 = scmp.eq.s32.totalorder %s23, 7
    %p41 = por %p39, %p40
    %p42 = scmp.ne.s32.totalorder %s31, %s32
    %p43 = scmp.eq.s32.totalorder %s23, 0
    %p44 = por %p42, %p43
    %p45 = scmp.ne.s32.totalorder %s31, %s32
    %p46 = scmp.eq.s32.totalorder %s24, 7
    %p47 = por %p45, %p46
    %p49 = scmp.ne.s32.totalorder %s32, %s48
    %p50 = scmp.eq.s32.totalorder %s24, 0
    %p51 = por %p49, %p50
    %s53 = sadd.s32 %s52, 1
    %p56 = scmp.eq.s32.totalorder %s18, 7
    %p57 = scmp.ne.s32.totalorder %s52, %s54
    %p58 = scmp.eq.s32.totalorder %s18, 0
    %p59 = por %p57, %p58
    %p60 = scmp.ne.s32.totalorder %s52, %s54
    %p61 = scmp.eq.s32.totalorder %s23, 7
    %p62 = por %p60, %p61
    %p63 = scmp.ne.s32.totalorder %s54, %s55
    %p64 = scmp.eq.s32.totalorder %s23, 0
    %p65 = por %p63, %p64
    %p66 = scmp.ne.s32.totalorder %s54, %s55
    %p67 = scmp.eq.s32.totalorder %s24, 7
    %p68 = por %p66, %p67
    %p70 = scmp.ne.s32.totalorder %s55, %s69
    %p71 = scmp.eq.s32.totalorder %s24, 0
    %p72 = por %p70, %p71
    %s74 = sadd.s32 %s73, 1
    %p77 = scmp.eq.s32.totalorder %s18, 7
    %p78 = scmp.ne.s32.totalorder %s73, %s75
    %p79 = scmp.eq.s32.totalorder %s18, 0
    %p80 = por %p78, %p79
    %p81 = scmp.ne.s32.totalorder %s73, %s75
    %p82 = scmp.eq.s32.totalorder %s23, 7
    %p83 = por %p81, %p82
    %p84 = scmp.ne.s32.totalorder %s75, %s76
    %p85 = scmp.eq.s32.totalorder %s23, 0
    %p86 = por %p84, %p85
    %p87 = scmp.ne.s32.totalorder %s75, %s76
    %p88 = scmp.eq.s32.totalorder %s24, 7
    %p89 = por %p87, %p88
    %p91 = scmp.ne.s32.totalorder %s76, %s90
    %p92 = scmp.eq.s32.totalorder %s24, 0
    %p93 = por %p91, %p92
    %s95 = sadd.s32 %s94, 1
    %p98 = scmp.eq.s32.totalorder %s18, 7
    %p99 = scmp.ne.s32.totalorder %s94, %s96
    %p100 = scmp.eq.s32.totalorder %s18, 0
    %p101 = por %p99, %p100
    %p102 = scmp.ne.s32.totalorder %s94, %s96
    %p103 = scmp.eq.s32.totalorder %s23, 7
    %p104 = por %p102, %p103
    %p105 = scmp.ne.s32.totalorder %s96, %s97
    %p106 = scmp.eq.s32.totalorder %s23, 0
    %p107 = por %p105, %p106
    %p108 = scmp.ne.s32.totalorder %s96, %s97
    %p109 = scmp.eq.s32.totalorder %s24, 7
    %p110 = por %p108, %p109
    %p112 = scmp.ne.s32.totalorder %s97, %s111
    %p113 = scmp.eq.s32.totalorder %s24, 0
    %p114 = por %p112, %p113
    %s116 = sadd.s32 %s115, 1
    %p119 = scmp.eq.s32.totalorder %s18, 7
    %p120 = scmp.ne.s32.totalorder %s115, %s117
    %p121 = scmp.eq.s32.totalorder %s18, 0
    %p122 = por %p120, %p121
    %p123 = scmp.ne.s32.totalorder %s115, %s117
    %p124 = scmp.eq.s32.totalorder %s23, 7
    %p125 = por %p123, %p124
    %p126 = scmp.ne.s32.totalorder %s117, %s118
    %p127 = scmp.eq.s32.totalorder %s23, 0
    %p128 = por %p126, %p127
    %p129 = scmp.ne.s32.totalorder %s117, %s118
    %p130 = scmp.eq.s32.totalorder %s24, 7
    %p131 = por %p129, %p130
    %p133 = scmp.ne.s32.totalorder %s118, %s132
    %p134 = scmp.eq.s32.totalorder %s24, 0
    %p135 = por %p133, %p134
    %s137 = sadd.s32 %s136, 1
    %p140 = scmp.eq.s32.totalorder %s18, 7
    %p141 = scmp.ne.s32.totalorder %s136, %s138
    %p142 = scmp.eq.s32.totalorder %s18, 0
    %p143 = por %p141, %p142
    %p144 = scmp.ne.s32.totalorder %s136, %s138
    %p145 = scmp.eq.s32.totalorder %s23, 7
    %p146 = por %p144, %p145
    %p147 = scmp.ne.s32.totalorder %s138, %s139
    %p148 = scmp.eq.s32.totalorder %s23, 0
    %p149 = por %p147, %p148
    %p150 = scmp.ne.s32.totalorder %s138, %s139
    %p151 = scmp.eq.s32.totalorder %s24, 7
    %p152 = por %p150, %p151
    %p154 = scmp.ne.s32.totalorder %s139, %s153
    %p155 = scmp.eq.s32.totalorder %s24, 0
    %p156 = por %p154, %p155
    %s158 = sadd.s32 %s157, 1
    %p161 = scmp.eq.s32.totalorder %s18, 7
    %p162 = scmp.ne.s32.totalorder %s157, %s159
    %p163 = scmp.eq.s32.totalorder %s18, 0
    %p164 = por %p162, %p163
    %p165 = scmp.ne.s32.totalorder %s157, %s159
    %p166 = scmp.eq.s32.totalorder %s23, 7
    %p167 = por %p165, %p166
    %p168 = scmp.ne.s32.totalorder %s159, %s160
    %p169 = scmp.eq.s32.totalorder %s23, 0
    %p170 = por %p168, %p169
    %p171 = scmp.ne.s32.totalorder %s159, %s160
    %p172 = scmp.eq.s32.totalorder %s24, 7
    %p173 = por %p171, %p172
    %p175 = scmp.ne.s32.totalorder %s160, %s174
    %p176 = scmp.eq.s32.totalorder %s24, 0
    %p177 = por %p175, %p176
    %s179 = sadd.s32 %s178, 1
    %p182 = scmp.eq.s32.totalorder %s18, 7
    %p183 = scmp.ne.s32.totalorder %s178, %s180
    %p184 = scmp.eq.s32.totalorder %s18, 0
    %p185 = por %p183, %p184
    %p186 = scmp.ne.s32.totalorder %s178, %s180
    %p187 = scmp.eq.s32.totalorder %s23, 7
    %p188 = por %p186, %p187
    %p189 = scmp.ne.s32.totalorder %s180, %s181
    %p190 = scmp.eq.s32.totalorder %s23, 0
    %p191 = por %p189, %p190
    %p192 = scmp.ne.s32.totalorder %s180, %s181
    %p193 = scmp.eq.s32.totalorder %s24, 7
    %p194 = por %p192, %p193
    %p196 = scmp.ne.s32.totalorder %s181, %s195
    %p197 = scmp.eq.s32.totalorder %s24, 0
    %p198 = por %p196, %p197
    %s200 = sadd.s32 %s199, 1
    %p203 = scmp.eq.s32.totalorder %s18, 7
    %p204 = scmp.ne.s32.totalorder %s199, %s201
    %p205 = scmp.eq.s32.totalorder %s18, 0
    %p206 = por %p204, %p205
    %p207 = scmp.ne.s32.totalorder %s199, %s201
    %p208 = scmp.eq.s32.totalorder %s23, 7
    %p209 = por %p207, %p208
    %p210 = scmp.ne.s32.totalorder %s201, %s202
    %p211 = scmp.eq.s32.totalorder %s23, 0
    %p212 = por %p210, %p211
    %p213 = scmp.ne.s32.totalorder %s201, %s202
    %p214 = scmp.eq.s32.totalorder %s24, 7
    %p215 = por %p213, %p214
    %p217 = scmp.ne.s32.totalorder %s202, %s216
    %p218 = scmp.eq.s32.totalorder %s24, 0
    %p219 = por %p217, %p218
    %s221 = sadd.s32 %s220, 1
    %p224 = scmp.eq.s32.totalorder %s18, 7
    %p225 = scmp.ne.s32.totalorder %s220, %s222
    %p226 = scmp.eq.s32.totalorder %s18, 0
    %p227 = por %p225, %p226
    %p228 = scmp.ne.s32.totalorder %s220, %s222
    %p229 = scmp.eq.s32.totalorder %s23, 7
    %p230 = por %p228, %p229
    %p231 = scmp.ne.s32.totalorder %s222, %s223
    %p232 = scmp.eq.s32.totalorder %s23, 0
    %p233 = por %p231, %p232
    %p234 = scmp.ne.s32.totalorder %s222, %s223
    %p235 = scmp.eq.s32.totalorder %s24, 7
    %p236 = por %p234, %p235
    %p238 = scmp.ne.s32.totalorder %s223, %s237
    %p239 = scmp.eq.s32.totalorder %s24, 0
    %p240 = por %p238, %p239
    %s242 = sadd.s32 %s241, 1
    %p245 = scmp.eq.s32.totalorder %s18, 7
    %p246 = scmp.ne.s32.totalorder %s241, %s243
    %p247 = scmp.eq.s32.totalorder %s18, 0
    %p248 = por %p246, %p247
    %p249 = scmp.ne.s32.totalorder %s241, %s243
    %p250 = scmp.eq.s32.totalorder %s23, 7
    %p251 = por %p249, %p250
    %p252 = scmp.ne.s32.totalorder %s243, %s244
    %p253 = scmp.eq.s32.totalorder %s23, 0
    %p254 = por %p252, %p253
    %p255 = scmp.ne.s32.totalorder %s243, %s244
    %p256 = scmp.eq.s32.totalorder %s24, 7
    %p257 = por %p255, %p256
    %p259 = scmp.ne.s32.totalorder %s244, %s258
    %p260 = scmp.eq.s32.totalorder %s24, 0
    %p261 = por %p259, %p260
    %s263 = sadd.s32 %s262, 1
    %p266 = scmp.eq.s32.totalorder %s18, 7
    %p267 = scmp.ne.s32.totalorder %s262, %s264
    %p268 = scmp.eq.s32.totalorder %s18, 0
    %p269 = por %p267, %p268
    %p270 = scmp.ne.s32.totalorder %s262, %s264
    %p271 = scmp.eq.s32.totalorder %s23, 7
    %p272 = por %p270, %p271
    %p273 = scmp.ne.s32.totalorder %s264, %s265
    %p274 = scmp.eq.s32.totalorder %s23, 0
    %p275 = por %p273, %p274
    %p276 = scmp.ne.s32.totalorder %s264, %s265
    %p277 = scmp.eq.s32.totalorder %s24, 7
    %p278 = por %p276, %p277
    %p280 = scmp.ne.s32.totalorder %s265, %s279
    %p281 = scmp.eq.s32.totalorder %s24, 0
    %p282 = por %p280, %p281
    %s283 = ssub.s32 %s18, %s25
    %p284 = scmp.eq.s32.totalorder %s283, 0
    %s286 = sadd.s32 %s285, 1
    %s287 = scalar_select %p284, %s285, %s286
    %p290 = pneg %p284
    %p291 = scmp.eq.s32.totalorder %s18, 7
    %p292 = por %p290, %p291
    %p293 = scmp.ne.s32.totalorder %s285, %s288
    %p294 = scmp.eq.s32.totalorder %s18, 0
    %p295 = por %p293, %p294
    %p296 = scmp.ne.s32.totalorder %s285, %s288
    %p297 = scmp.eq.s32.totalorder %s23, 7
    %p298 = por %p296, %p297
    %p299 = scmp.ne.s32.totalorder %s288, %s289
    %p300 = scmp.eq.s32.totalorder %s23, 0
    %p301 = por %p299, %p300
    %p302 = scmp.ne.s32.totalorder %s288, %s289
    %p303 = scmp.eq.s32.totalorder %s24, 7
    %p304 = por %p302, %p303
    %p306 = scmp.ne.s32.totalorder %s289, %s305
    %p307 = scmp.eq.s32.totalorder %s24, 0
    %p308 = por %p306, %p307
    %p309 = scmp.le.s32.totalorder 1, %s18
    %p310 = scmp.lt.s32.totalorder %s18, 9
    %p311 = pnand %p309, %p310
    %p312 = pneg %p311
    // Predicated region
    $region9: #{forward.2} parent=5 // pred_check
      _
    $region10: #{forward.2} parent=5 // pred_check_branch
      %314 = sbr.rel (%p311) target = $region12
    $region11: #{forward.2} parent=5 // pred_region
      %s315 = ssub.s32 %s18, 1
      // Predicated region
      $region13: #{forward.2} parent=11 // pred_check
        %p316 = pneg %p65
      $region14: #{forward.2} parent=11 // pred_check_branch
        %318 = sbr.rel (%p316) target = $region16
      $region15: #{forward.2} parent=11 // pred_region
        _
      $region16: #{forward.2} parent=11 // pred_fallthru
        _
      // Predicated region
      $region17: #{forward.2} parent=11 // pred_check
        %p319 = pneg %p86
      $region18: #{forward.2} parent=11 // pred_check_branch
        %321 = sbr.rel (%p319) target = $region20
      $region19: #{forward.2} parent=11 // pred_region
        _
      $region20: #{forward.2} parent=11 // pred_fallthru
        _
      // Predicated region
      $region21: #{forward.2} parent=11 // pred_check
        %p322 = pneg %p107
      $region22: #{forward.2} parent=11 // pred_check_branch
        %324 = sbr.rel (%p322) target = $region24
      $region23: #{forward.2} parent=11 // pred_region
        _
      $region24: #{forward.2} parent=11 // pred_fallthru
        _
      // Predicated region
      $region25: #{forward.2} parent=11 // pred_check
        %p325 = pneg %p128
      $region26: #{forward.2} parent=11 // pred_check_branch
        %327 = sbr.rel (%p325) target = $region28
      $region27: #{forward.2} parent=11 // pred_region
        _
      $region28: #{forward.2} parent=11 // pred_fallthru
        _
      // Predicated region
      $region29: #{forward.2} parent=11 // pred_check
        %p328 = pneg %p149
      $region30: #{forward.2} parent=11 // pred_check_branch
        %330 = sbr.rel (%p328) target = $region32
      $region31: #{forward.2} parent=11 // pred_region
        _
      $region32: #{forward.2} parent=11 // pred_fallthru
        _
      // Predicated region
      $region33: #{forward.2} parent=11 // pred_check
        %p331 = pneg %p170
      $region34: #{forward.2} parent=11 // pred_check_branch
        %333 = sbr.rel (%p331) target = $region36
      $region35: #{forward.2} parent=11 // pred_region
        _
      $region36: #{forward.2} parent=11 // pred_fallthru
        _
      // Predicated region
      $region37: #{forward.2} parent=11 // pred_check
        %p334 = pneg %p191
      $region38: #{forward.2} parent=11 // pred_check_branch
        %336 = sbr.rel (%p334) target = $region40
      $region39: #{forward.2} parent=11 // pred_region
        _
      $region40: #{forward.2} parent=11 // pred_fallthru
        _
      // Predicated region
      $region41: #{forward.2} parent=11 // pred_check
        %p337 = pneg %p212
      $region42: #{forward.2} parent=11 // pred_check_branch
        %339 = sbr.rel (%p337) target = $region44
      $region43: #{forward.2} parent=11 // pred_region
        _
      $region44: #{forward.2} parent=11 // pred_fallthru
        _
      // Predicated region
      $region45: #{forward.2} parent=11 // pred_check
        %p340 = pneg %p233
      $region46: #{forward.2} parent=11 // pred_check_branch
        %342 = sbr.rel (%p340) target = $region48
      $region47: #{forward.2} parent=11 // pred_region
        _
      $region48: #{forward.2} parent=11 // pred_fallthru
        _
      // Predicated region
      $region49: #{forward.2} parent=11 // pred_check
        %p343 = pneg %p254
      $region50: #{forward.2} parent=11 // pred_check_branch
        %345 = sbr.rel (%p343) target = $region52
      $region51: #{forward.2} parent=11 // pred_region
        _
      $region52: #{forward.2} parent=11 // pred_fallthru
        _
      // Predicated region
      $region53: #{forward.2} parent=11 // pred_check
        %p346 = pneg %p275
      $region54: #{forward.2} parent=11 // pred_check_branch
        %348 = sbr.rel (%p346) target = $region56
      $region55: #{forward.2} parent=11 // pred_region
        _
      $region56: #{forward.2} parent=11 // pred_fallthru
        _
    $region12: #{forward.2} parent=5 // pred_fallthru
      _
    %p349 = scmp.lt.s32.totalorder %s18, 8
    // Predicated region
    $region57: #{forward.2} parent=5 // pred_check
      %p350 = pneg %p349
    $region58: #{forward.2} parent=5 // pred_check_branch
      %352 = sbr.rel (%p350) target = $region60
    $region59: #{forward.2} parent=5 // pred_region
      // Predicated region
      $region61: #{forward.2} parent=59 // pred_check
        %p353 = pneg %p38
      $region62: #{forward.2} parent=59 // pred_check_branch
        %355 = sbr.rel (%p353) target = $region64
      $region63: #{forward.2} parent=59 // pred_region
        %p356 = scmp.lt.s32.totalorder %s18, 7
        %s357 = scalar_select %p356, %s18, 7
        %s358 = smul.addr %s357, 16
        %s359 = smul.addr %s358, 4
        %s360 = scalar_lea.vmem %s0, %s359
      $region64: #{forward.2} parent=59 // pred_fallthru
        _
    $region60: #{forward.2} parent=5 // pred_fallthru
      _
    %p361 = scmp.le.s32.totalorder 1, %s18
    %p362 = scmp.lt.s32.totalorder %s18, 9
    %p363 = pnand %p361, %p362
    %p364 = pneg %p363
    // Predicated region
    $region65: #{forward.2} parent=5 // pred_check
      _
    $region66: #{forward.2} parent=5 // pred_check_branch
      %366 = sbr.rel (%p363) target = $region68
    $region67: #{forward.2} parent=5 // pred_region
      %s367 = ssub.s32 %s18, 1
      %p368 = scmp.lt.s32.totalorder %s23, 7
      %s369 = scalar_select %p368, %s23, 7
      %s370 = smul.addr %s369, 16
      %s371 = smul.addr %s370, 4
      %s372 = scalar_lea.vmem %s0, %s371
      %p373 = pneg %p44
      %p374 = pneg %p41
      %p375 = pneg %p65
      %p376 = pneg %p62
      %p377 = pneg %p86
      %p378 = pneg %p83
      %p379 = pneg %p107
      %p380 = pneg %p104
      %p381 = pneg %p128
      %p382 = pneg %p125
      %p383 = pneg %p149
      %p384 = pneg %p146
      %p385 = pneg %p170
      %p386 = pneg %p167
      %p387 = pneg %p191
      %p388 = pneg %p188
      %p389 = pneg %p212
      %p390 = pneg %p209
      %p391 = pneg %p233
      %p392 = pneg %p230
      %p393 = pneg %p254
      %p394 = pneg %p251
      %p395 = pneg %p275
      %p396 = pneg %p272
      %p397 = pneg %p301
      %p398 = pneg %p298
      %p399 = scmp.lt.s32.totalorder %s23, 7
      %s400 = scalar_select %p399, %s23, 7
      %s401 = scalar_lea.vmem %s12, %s400
      %p402 = scmp.lt.s32.totalorder %s23, 7
      %s403 = scalar_select %p402, %s23, 7
      %s404 = smul.addr %s403, 16
      %s405 = smul.addr %s404, 4
      %s406 = scalar_lea.vmem %s0, %s405
      %p407 = scmp.lt.s32.totalorder %s23, 7
      %s408 = scalar_select %p407, %s23, 7
      %s409 = scalar_lea.vmem %s12, %s408
      %v411 = vld [vmem:[%s406] sm:$0xff]
      %v412 = vld [vmem:[%s406 + $0x8] sm:$0xff]
      %v413 = vld [vmem:[%s406 + $0x10] sm:$0xff]
      %v414 = vld [vmem:[%s406 + $0x18] sm:$0xff]
      %v415 = vld [vmem:[%s406 + $0x20] sm:$0xff]
      %v416 = vld [vmem:[%s406 + $0x28] sm:$0xff]
      %v417 = vld [vmem:[%s406 + $0x30] sm:$0xff]
      %v418 = vld [vmem:[%s406 + $0x38] sm:$0xff]
      %v419 = vld [vmem:[%s1] sm:$0xf]
      %v420 = vld [vmem:[%s1 + $0x4] sm:$0xf]
      %v421 = vld [vmem:[%s1 + $0x8] sm:$0xf]
      %v422 = vld [vmem:[%s1 + $0xc] sm:$0xf]
      %v423 = vld [vmem:[%s1 + $0x10] sm:$0xf]
      %v424 = vld [vmem:[%s1 + $0x14] sm:$0xf]
      %v425 = vld [vmem:[%s1 + $0x18] sm:$0xf]
      %v426 = vld [vmem:[%s1 + $0x1c] sm:$0xf]
      %v427 = vld [vmem:[%s1 + $0x20] sm:$0xf]
      %v428 = vld [vmem:[%s1 + $0x24] sm:$0xf]
      %v429 = vld [vmem:[%s1 + $0x28] sm:$0xf]
      %v430 = vld [vmem:[%s1 + $0x2c] sm:$0xf]
      %v431 = vld [vmem:[%s1 + $0x30] sm:$0xf]
      %v432 = vld [vmem:[%s1 + $0x34] sm:$0xf]
      %v433 = vld [vmem:[%s1 + $0x38] sm:$0xf]
      %v434 = vld [vmem:[%s1 + $0x3c] sm:$0xf]
      %v435 = vld [vmem:[%s1 + $0x40] sm:$0xf]
      %v436 = vld [vmem:[%s1 + $0x44] sm:$0xf]
      %v437 = vld [vmem:[%s1 + $0x48] sm:$0xf]
      %v438 = vld [vmem:[%s1 + $0x4c] sm:$0xf]
      %v439 = vld [vmem:[%s1 + $0x50] sm:$0xf]
      %v440 = vld [vmem:[%s1 + $0x54] sm:$0xf]
      %v441 = vld [vmem:[%s1 + $0x58] sm:$0xf]
      %v442 = vld [vmem:[%s1 + $0x5c] sm:$0xf]
      %v443 = vld [vmem:[%s1 + $0x60] sm:$0xf]
      %v444 = vld [vmem:[%s1 + $0x64] sm:$0xf]
      %v445 = vld [vmem:[%s1 + $0x68] sm:$0xf]
      %v446 = vld [vmem:[%s1 + $0x6c] sm:$0xf]
      %v447 = vld [vmem:[%s1 + $0x70] sm:$0xf]
      %v448 = vld [vmem:[%s1 + $0x74] sm:$0xf]
      %v449 = vld [vmem:[%s1 + $0x78] sm:$0xf]
      %v450 = vld [vmem:[%s1 + $0x7c] sm:$0xf]
      %v459 = vunpack.c.l.b16 %v411
      %v460 = vunpack.c.h.b16 %v411
      %v461 = vunpack.c.l.b16 %v412
      %v462 = vunpack.c.h.b16 %v412
      %v463 = vunpack.c.l.b16 %v413
      %v464 = vunpack.c.h.b16 %v413
      %v465 = vunpack.c.l.b16 %v414
      %v466 = vunpack.c.h.b16 %v414
      %v467 = vunpack.c.l.b16 %v415
      %v468 = vunpack.c.h.b16 %v415
      %v469 = vunpack.c.l.b16 %v416
      %v470 = vunpack.c.h.b16 %v416
      %v471 = vunpack.c.l.b16 %v417
      %v472 = vunpack.c.h.b16 %v417
      %v473 = vunpack.c.l.b16 %v418
      %v474 = vunpack.c.h.b16 %v418
      %v475 = vpack.c.b16 %v461, %v459
      %v476 = vpack.c.b16 %v462, %v460
      %v477 = vpack.c.b16 %v465, %v463
      %v478 = vpack.c.b16 %v466, %v464
      %v479 = vpack.c.b16 %v469, %v467
      %v480 = vpack.c.b16 %v470, %v468
      %v481 = vpack.c.b16 %v473, %v471
      %v482 = vpack.c.b16 %v474, %v472
      %v523 = vunpack.c.l.b16 %v419
      %v524 = vunpack.c.l.b16 %v420
      %v525 = vunpack.c.l.b16 %v421
      %v526 = vunpack.c.l.b16 %v422
      %v527 = vunpack.c.l.b16 %v423
      %v528 = vunpack.c.l.b16 %v424
      %v529 = vunpack.c.l.b16 %v425
      %v530 = vunpack.c.l.b16 %v426
      %v531 = vunpack.c.l.b16 %v427
      %v532 = vunpack.c.l.b16 %v428
      %v533 = vunpack.c.l.b16 %v429
      %v534 = vunpack.c.l.b16 %v430
      %v535 = vunpack.c.l.b16 %v431
      %v536 = vunpack.c.l.b16 %v432
      %v537 = vunpack.c.l.b16 %v433
      %v538 = vunpack.c.l.b16 %v434
      %v539 = vunpack.c.l.b16 %v435
      %v540 = vunpack.c.l.b16 %v436
      %v541 = vunpack.c.l.b16 %v437
      %v542 = vunpack.c.l.b16 %v438
      %v543 = vunpack.c.l.b16 %v439
      %v544 = vunpack.c.l.b16 %v440
      %v545 = vunpack.c.l.b16 %v441
      %v546 = vunpack.c.l.b16 %v442
      %v547 = vunpack.c.l.b16 %v443
      %v548 = vunpack.c.l.b16 %v444
      %v549 = vunpack.c.l.b16 %v445
      %v550 = vunpack.c.l.b16 %v446
      %v551 = vunpack.c.l.b16 %v447
      %v552 = vunpack.c.l.b16 %v448
      %v553 = vunpack.c.l.b16 %v449
      %v554 = vunpack.c.l.b16 %v450
      %v555 = vpack.c.b16 %v524, %v523
      %v556 = vpack.c.b16 %v526, %v525
      %v557 = vpack.c.b16 %v528, %v527
      %v558 = vpack.c.b16 %v530, %v529
      %v559 = vpack.c.b16 %v532, %v531
      %v560 = vpack.c.b16 %v534, %v533
      %v561 = vpack.c.b16 %v536, %v535
      %v562 = vpack.c.b16 %v538, %v537
      %v563 = vpack.c.b16 %v540, %v539
      %v564 = vpack.c.b16 %v542, %v541
      %v565 = vpack.c.b16 %v544, %v543
      %v566 = vpack.c.b16 %v546, %v545
      %v567 = vpack.c.b16 %v548, %v547
      %v568 = vpack.c.b16 %v550, %v549
      %v569 = vpack.c.b16 %v552, %v551
      %v570 = vpack.c.b16 %v554, %v553
      %587 = vmatpush.bf16.msra.mxu0 %v562
      %588 = vmatpush.bf16.msra.mxu0 %v561
      %589 = vmatpush.bf16.msra.mxu0 %v560
      %590 = vmatpush.bf16.msra.mxu0 %v559
      %591 = vmatpush.bf16.msra.mxu0 %v558
      %592 = vmatpush.bf16.msra.mxu0 %v557
      %593 = vmatpush.bf16.msra.mxu0 %v556
      %594 = vmatpush.bf16.msra.mxu0 %v555
      %595 = vmatmul.bf16.gmra.mxu0 %v475
      %v596 = vpop.f32.mrf.mxu0
      %v597 = vadd.f32 0.0, %v596
      %v598 = vpop.f32.mrf.mxu0
      %v599 = vadd.f32 0.0, %v598
      %600 = vmatmul.bf16.gmra.mxu0 %v477
      %v601 = vpop.f32.mrf.mxu0
      %v602 = vadd.f32 0.0, %v601
      %v603 = vpop.f32.mrf.mxu0
      %v604 = vadd.f32 0.0, %v603
      %605 = vmatmul.bf16.gmra.mxu0 %v479
      %v606 = vpop.f32.mrf.mxu0
      %v607 = vadd.f32 0.0, %v606
      %v608 = vpop.f32.mrf.mxu0
      %v609 = vadd.f32 0.0, %v608
      %610 = vmatmul.bf16.gmra.mxu0 %v481
      %v611 = vpop.f32.mrf.mxu0
      %v612 = vadd.f32 0.0, %v611
      %v613 = vpop.f32.mrf.mxu0
      %v614 = vadd.f32 0.0, %v613
      %615 = vdwg.mxu0
      %616 = vmatpush.bf16.msra.mxu0 %v570
      %617 = vmatpush.bf16.msra.mxu0 %v569
      %618 = vmatpush.bf16.msra.mxu0 %v568
      %619 = vmatpush.bf16.msra.mxu0 %v567
      %620 = vmatpush.bf16.msra.mxu0 %v566
      %621 = vmatpush.bf16.msra.mxu0 %v565
      %622 = vmatpush.bf16.msra.mxu0 %v564
      %623 = vmatpush.bf16.msra.mxu0 %v563
      %624 = vmatmul.bf16.gmra.mxu0 %v476
      %v625 = vpop.f32.mrf.mxu0
      %v626 = vadd.f32 %v597, %v625
      %v627 = vpop.f32.mrf.mxu0
      %v628 = vadd.f32 %v599, %v627
      %629 = vmatmul.bf16.gmra.mxu0 %v478
      %v630 = vpop.f32.mrf.mxu0
      %v631 = vadd.f32 %v602, %v630
      %v632 = vpop.f32.mrf.mxu0
      %v633 = vadd.f32 %v604, %v632
      %634 = vmatmul.bf16.gmra.mxu0 %v480
      %v635 = vpop.f32.mrf.mxu0
      %v636 = vadd.f32 %v607, %v635
      %v637 = vpop.f32.mrf.mxu0
      %v638 = vadd.f32 %v609, %v637
      %639 = vmatmul.bf16.gmra.mxu0 %v482
      %v640 = vpop.f32.mrf.mxu0
      %v641 = vadd.f32 %v612, %v640
      %v642 = vpop.f32.mrf.mxu0
      %v643 = vadd.f32 %v614, %v642
      %644 = vdwg.mxu0
      %v645 = vld [vmem:[%s2] sm:$0x1]
      %v647 = vperm.slane %v645, 0
      %v649 = vmul.f32 %v626, %v647
      %v650 = vmul.f32 %v628, %v647
      %v651 = vmul.f32 %v631, %v647
      %v652 = vmul.f32 %v633, %v647
      %v653 = vmul.f32 %v636, %v647
      %v654 = vmul.f32 %v638, %v647
      %v655 = vmul.f32 %v641, %v647
      %v656 = vmul.f32 %v643, %v647
      %v657 = vld [vmem:[%s3] sm:$0x1]
      %v659 = vperm.slane %v657, 0
      %v661 = vadd.f32 %v649, %v659
      %v662 = vadd.f32 %v650, %v659
      %v663 = vadd.f32 %v651, %v659
      %v664 = vadd.f32 %v652, %v659
      %v665 = vadd.f32 %v653, %v659
      %v666 = vadd.f32 %v654, %v659
      %v667 = vadd.f32 %v655, %v659
      %v668 = vadd.f32 %v656, %v659
      %v669 = vmax.f32 %v661, 0.0
      %v670 = vmax.f32 %v662, 0.0
      %v671 = vmax.f32 %v663, 0.0
      %v672 = vmax.f32 %v664, 0.0
      %v673 = vmax.f32 %v665, 0.0
      %v674 = vmax.f32 %v666, 0.0
      %v675 = vmax.f32 %v667, 0.0
      %v676 = vmax.f32 %v668, 0.0
      %v677 = vpack.c.bf16 %v670, %v669
      %v678 = vpack.c.bf16 %v672, %v671
      %v679 = vpack.c.bf16 %v674, %v673
      %v680 = vpack.c.bf16 %v676, %v675
      %v681 = vld [vmem:[%s4] sm:$0xf]
      %v682 = vld [vmem:[%s4 + $0x4] sm:$0xf]
      %v683 = vld [vmem:[%s4 + $0x8] sm:$0xf]
      %v684 = vld [vmem:[%s4 + $0xc] sm:$0xf]
      %v685 = vld [vmem:[%s4 + $0x10] sm:$0xf]
      %v686 = vld [vmem:[%s4 + $0x14] sm:$0xf]
      %v687 = vld [vmem:[%s4 + $0x18] sm:$0xf]
      %v688 = vld [vmem:[%s4 + $0x1c] sm:$0xf]
      %v689 = vld [vmem:[%s4 + $0x20] sm:$0xf]
      %v690 = vld [vmem:[%s4 + $0x24] sm:$0xf]
      %v691 = vld [vmem:[%s4 + $0x28] sm:$0xf]
      %v692 = vld [vmem:[%s4 + $0x2c] sm:$0xf]
      %v693 = vld [vmem:[%s4 + $0x30] sm:$0xf]
      %v694 = vld [vmem:[%s4 + $0x34] sm:$0xf]
      %v695 = vld [vmem:[%s4 + $0x38] sm:$0xf]
      %v696 = vld [vmem:[%s4 + $0x3c] sm:$0xf]
      %v697 = vld [vmem:[%s4 + $0x40] sm:$0xf]
      %v698 = vld [vmem:[%s4 + $0x44] sm:$0xf]
      %v699 = vld [vmem:[%s4 + $0x48] sm:$0xf]
      %v700 = vld [vmem:[%s4 + $0x4c] sm:$0xf]
      %v701 = vld [vmem:[%s4 + $0x50] sm:$0xf]
      %v702 = vld [vmem:[%s4 + $0x54] sm:$0xf]
      %v703 = vld [vmem:[%s4 + $0x58] sm:$0xf]
      %v704 = vld [vmem:[%s4 + $0x5c] sm:$0xf]
      %v705 = vld [vmem:[%s4 + $0x60] sm:$0xf]
      %v706 = vld [vmem:[%s4 + $0x64] sm:$0xf]
      %v707 = vld [vmem:[%s4 + $0x68] sm:$0xf]
      %v708 = vld [vmem:[%s4 + $0x6c] sm:$0xf]
      %v709 = vld [vmem:[%s4 + $0x70] sm:$0xf]
      %v710 = vld [vmem:[%s4 + $0x74] sm:$0xf]
      %v711 = vld [vmem:[%s4 + $0x78] sm:$0xf]
      %v712 = vld [vmem:[%s4 + $0x7c] sm:$0xf]
      %v745 = vunpack.c.l.b16 %v681
      %v746 = vunpack.c.l.b16 %v682
      %v747 = vunpack.c.l.b16 %v683
      %v748 = vunpack.c.l.b16 %v684
      %v749 = vunpack.c.l.b16 %v685
      %v750 = vunpack.c.l.b16 %v686
      %v751 = vunpack.c.l.b16 %v687
      %v752 = vunpack.c.l.b16 %v688
      %v753 = vunpack.c.l.b16 %v689
      %v754 = vunpack.c.l.b16 %v690
      %v755 = vunpack.c.l.b16 %v691
      %v756 = vunpack.c.l.b16 %v692
      %v757 = vunpack.c.l.b16 %v693
      %v758 = vunpack.c.l.b16 %v694
      %v759 = vunpack.c.l.b16 %v695
      %v760 = vunpack.c.l.b16 %v696
      %v761 = vunpack.c.l.b16 %v697
      %v762 = vunpack.c.l.b16 %v698
      %v763 = vunpack.c.l.b16 %v699
      %v764 = vunpack.c.l.b16 %v700
      %v765 = vunpack.c.l.b16 %v701
      %v766 = vunpack.c.l.b16 %v702
      %v767 = vunpack.c.l.b16 %v703
      %v768 = vunpack.c.l.b16 %v704
      %v769 = vunpack.c.l.b16 %v705
      %v770 = vunpack.c.l.b16 %v706
      %v771 = vunpack.c.l.b16 %v707
      %v772 = vunpack.c.l.b16 %v708
      %v773 = vunpack.c.l.b16 %v709
      %v774 = vunpack.c.l.b16 %v710
      %v775 = vunpack.c.l.b16 %v711
      %v776 = vunpack.c.l.b16 %v712
      %v777 = vpack.c.b16 %v746, %v745
      %v778 = vpack.c.b16 %v748, %v747
      %v779 = vpack.c.b16 %v750, %v749
      %v780 = vpack.c.b16 %v752, %v751
      %v781 = vpack.c.b16 %v754, %v753
      %v782 = vpack.c.b16 %v756, %v755
      %v783 = vpack.c.b16 %v758, %v757
      %v784 = vpack.c.b16 %v760, %v759
      %v785 = vpack.c.b16 %v762, %v761
      %v786 = vpack.c.b16 %v764, %v763
      %v787 = vpack.c.b16 %v766, %v765
      %v788 = vpack.c.b16 %v768, %v767
      %v789 = vpack.c.b16 %v770, %v769
      %v790 = vpack.c.b16 %v772, %v771
      %v791 = vpack.c.b16 %v774, %v773
      %v792 = vpack.c.b16 %v776, %v775
      %vm793 = vcmask 523264
      %v795 = vsel %vm793, %v777, 0
      %v798 = vsel %vm793, %v778, 0
      %v801 = vsel %vm793, %v779, 0
      %v804 = vsel %vm793, %v780, 0
      %v807 = vsel %vm793, %v781, 0
      %v810 = vsel %vm793, %v782, 0
      %v813 = vsel %vm793, %v783, 0
      %v816 = vsel %vm793, %v784, 0
      %v819 = vsel %vm793, %v785, 0
      %v822 = vsel %vm793, %v786, 0
      %v825 = vsel %vm793, %v787, 0
      %v828 = vsel %vm793, %v788, 0
      %v831 = vsel %vm793, %v789, 0
      %v834 = vsel %vm793, %v790, 0
      %v837 = vsel %vm793, %v791, 0
      %v840 = vsel %vm793, %v792, 0
      %842 = vmatpush.bf16.msra.mxu0 0
      %843 = vmatpush.bf16.msra.mxu0 0
      %844 = vmatpush.bf16.msra.mxu0 0
      %845 = vmatpush.bf16.msra.mxu0 0
      %846 = vmatpush.bf16.msra.mxu0 %v680
      %847 = vmatpush.bf16.msra.mxu0 %v679
      %848 = vmatpush.bf16.msra.mxu0 %v678
      %849 = vmatpush.bf16.msra.mxu0 %v677
      %850 = vmatmul.bf16.gmra.mxu0 %v795
      %v851 = vpop.f32.mrf.mxu0
      %v852 = vadd.f32 0.0, %v851
      %v853 = vpop.f32.mrf.mxu0
      %v854 = vadd.f32 0.0, %v853
      %855 = vmatmul.bf16.gmra.mxu0 %v798
      %v856 = vpop.f32.mrf.mxu0
      %v857 = vadd.f32 0.0, %v856
      %v858 = vpop.f32.mrf.mxu0
      %v859 = vadd.f32 0.0, %v858
      %860 = vmatmul.bf16.gmra.mxu0 %v801
      %v861 = vpop.f32.mrf.mxu0
      %v862 = vadd.f32 0.0, %v861
      %v863 = vpop.f32.mrf.mxu0
      %v864 = vadd.f32 0.0, %v863
      %865 = vmatmul.bf16.gmra.mxu0 %v804
      %v866 = vpop.f32.mrf.mxu0
      %v867 = vadd.f32 0.0, %v866
      %v868 = vpop.f32.mrf.mxu0
      %v869 = vadd.f32 0.0, %v868
      %870 = vmatmul.bf16.gmra.mxu0 %v807
      %v871 = vpop.f32.mrf.mxu0
      %v872 = vadd.f32 0.0, %v871
      %v873 = vpop.f32.mrf.mxu0
      %v874 = vadd.f32 0.0, %v873
      %875 = vmatmul.bf16.gmra.mxu0 %v810
      %v876 = vpop.f32.mrf.mxu0
      %v877 = vadd.f32 0.0, %v876
      %v878 = vpop.f32.mrf.mxu0
      %v879 = vadd.f32 0.0, %v878
      %880 = vmatmul.bf16.gmra.mxu0 %v813
      %v881 = vpop.f32.mrf.mxu0
      %v882 = vadd.f32 0.0, %v881
      %v883 = vpop.f32.mrf.mxu0
      %v884 = vadd.f32 0.0, %v883
      %885 = vmatmul.bf16.gmra.mxu0 %v816
      %v886 = vpop.f32.mrf.mxu0
      %v887 = vadd.f32 0.0, %v886
      %v888 = vpop.f32.mrf.mxu0
      %v889 = vadd.f32 0.0, %v888
      %890 = vmatmul.bf16.gmra.mxu0 %v819
      %v891 = vpop.f32.mrf.mxu0
      %v892 = vadd.f32 0.0, %v891
      %v893 = vpop.f32.mrf.mxu0
      %v894 = vadd.f32 0.0, %v893
      %895 = vmatmul.bf16.gmra.mxu0 %v822
      %v896 = vpop.f32.mrf.mxu0
      %v897 = vadd.f32 0.0, %v896
      %v898 = vpop.f32.mrf.mxu0
      %v899 = vadd.f32 0.0, %v898
      %900 = vmatmul.bf16.gmra.mxu0 %v825
      %v901 = vpop.f32.mrf.mxu0
      %v902 = vadd.f32 0.0, %v901
      %v903 = vpop.f32.mrf.mxu0
      %v904 = vadd.f32 0.0, %v903
      %905 = vmatmul.bf16.gmra.mxu0 %v828
      %v906 = vpop.f32.mrf.mxu0
      %v907 = vadd.f32 0.0, %v906
      %v908 = vpop.f32.mrf.mxu0
      %v909 = vadd.f32 0.0, %v908
      %910 = vmatmul.bf16.gmra.mxu0 %v831
      %v911 = vpop.f32.mrf.mxu0
      %v912 = vadd.f32 0.0, %v911
      %v913 = vpop.f32.mrf.mxu0
      %v914 = vadd.f32 0.0, %v913
      %915 = vmatmul.bf16.gmra.mxu0 %v834
      %v916 = vpop.f32.mrf.mxu0
      %v917 = vadd.f32 0.0, %v916
      %v918 = vpop.f32.mrf.mxu0
      %v919 = vadd.f32 0.0, %v918
      %920 = vmatmul.bf16.gmra.mxu0 %v837
      %v921 = vpop.f32.mrf.mxu0
      %v922 = vadd.f32 0.0, %v921
      %v923 = vpop.f32.mrf.mxu0
      %v924 = vadd.f32 0.0, %v923
      %925 = vmatmul.bf16.gmra.mxu0 %v840
      %v926 = vpop.f32.mrf.mxu0
      %v927 = vadd.f32 0.0, %v926
      %v928 = vpop.f32.mrf.mxu0
      %v929 = vadd.f32 0.0, %v928
      %930 = vdwg.mxu0
      %v931 = vpack.c.bf16 %v852, %v852
      %v932 = vpack.c.bf16 %v854, %v854
      %v933 = vpack.c.bf16 %v857, %v857
      %v934 = vpack.c.bf16 %v859, %v859
      %v935 = vpack.c.bf16 %v862, %v862
      %v936 = vpack.c.bf16 %v864, %v864
      %v937 = vpack.c.bf16 %v867, %v867
      %v938 = vpack.c.bf16 %v869, %v869
      %v939 = vpack.c.bf16 %v872, %v872
      %v940 = vpack.c.bf16 %v874, %v874
      %v941 = vpack.c.bf16 %v877, %v877
      %v942 = vpack.c.bf16 %v879, %v879
      %v943 = vpack.c.bf16 %v882, %v882
      %v944 = vpack.c.bf16 %v884, %v884
      %v945 = vpack.c.bf16 %v887, %v887
      %v946 = vpack.c.bf16 %v889, %v889
      %v947 = vpack.c.bf16 %v892, %v892
      %v948 = vpack.c.bf16 %v894, %v894
      %v949 = vpack.c.bf16 %v897, %v897
      %v950 = vpack.c.bf16 %v899, %v899
      %v951 = vpack.c.bf16 %v902, %v902
      %v952 = vpack.c.bf16 %v904, %v904
      %v953 = vpack.c.bf16 %v907, %v907
      %v954 = vpack.c.bf16 %v909, %v909
      %v955 = vpack.c.bf16 %v912, %v912
      %v956 = vpack.c.bf16 %v914, %v914
      %v957 = vpack.c.bf16 %v917, %v917
      %v958 = vpack.c.bf16 %v919, %v919
      %v959 = vpack.c.bf16 %v922, %v922
      %v960 = vpack.c.bf16 %v924, %v924
      %v961 = vpack.c.bf16 %v927, %v927
      %v962 = vpack.c.bf16 %v929, %v929
      %v963 = vld [vmem:[%s5] sm:$0xf]
      %v964 = vld [vmem:[%s5 + $0x4] sm:$0xf]
      %s965 = scalar_lea.vmem %s5, 8
      %v966 = vld [vmem:[%s965] sm:$0xf]
      %v967 = vld [vmem:[%s965 + $0x4] sm:$0xf]
      %v970 = vunpack.c.l.b16 %v933
      %v971 = vunpack.c.l.b16 %v934
      %v972 = vpack.c.b16 %v971, %v970
      %v975 = vunpack.c.l.b16 %v966
      %v976 = vunpack.c.l.b16 %v967
      %v977 = vpack.c.b16 %v976, %v975
      %vm979 = vcmask 130048
      %v981 = vsel %vm979, %v972, 0
      %983 = vmatpush.bf16.msra.mxu0 0
      %984 = vmatpush.bf16.msra.mxu0 0
      %985 = vmatpush.bf16.msra.mxu0 0
      %986 = vmatpush.bf16.msra.mxu0 0
      %987 = vmatpush.bf16.msra.mxu0 0
      %988 = vmatpush.bf16.msra.mxu0 0
      %989 = vmatpush.bf16.msra.mxu0 0
      %990 = vmatpush.bf16.msra.mxu0 %v977
      %991 = vmatmul.bf16.gmra.mxu0 %v981
      %v992 = vpop.f32.mrf.mxu0
      %v993 = vadd.f32 0.0, %v992
      %v994 = vpop.f32.mrf.mxu0
      %v995 = vadd.f32 0.0, %v994
      %996 = vdwg.mxu0
      %v999 = vunpack.c.l.b16 %v931
      %v1000 = vunpack.c.l.b16 %v932
      %v1001 = vpack.c.b16 %v1000, %v999
      %v1004 = vunpack.c.l.b16 %v963
      %v1005 = vunpack.c.l.b16 %v964
      %v1006 = vpack.c.b16 %v1005, %v1004
      %v1009 = vsel %vm979, %v1001, 0
      %1011 = vmatpush.bf16.msra.mxu0 0
      %1012 = vmatpush.bf16.msra.mxu0 0
      %1013 = vmatpush.bf16.msra.mxu0 0
      %1014 = vmatpush.bf16.msra.mxu0 0
      %1015 = vmatpush.bf16.msra.mxu0 0
      %1016 = vmatpush.bf16.msra.mxu0 0
      %1017 = vmatpush.bf16.msra.mxu0 0
      %1018 = vmatpush.bf16.msra.mxu0 %v1006
      %1019 = vmatmul.bf16.gmra.mxu0 %v1009
      %v1020 = vpop.f32.mrf.mxu0
      %v1021 = vadd.f32 %v993, %v1020
      %v1022 = vpop.f32.mrf.mxu0
      %v1023 = vadd.f32 %v995, %v1022
      %1024 = vdwg.mxu0
      %s1025 = scalar_lea.vmem %s5, 16
      %v1026 = vld [vmem:[%s1025] sm:$0xf]
      %v1027 = vld [vmem:[%s1025 + $0x4] sm:$0xf]
      %v1030 = vunpack.c.l.b16 %v935
      %v1031 = vunpack.c.l.b16 %v936
      %v1032 = vpack.c.b16 %v1031, %v1030
      %v1035 = vunpack.c.l.b16 %v1026
      %v1036 = vunpack.c.l.b16 %v1027
      %v1037 = vpack.c.b16 %v1036, %v1035
      %v1040 = vsel %vm979, %v1032, 0
      %1042 = vmatpush.bf16.msra.mxu0 0
      %1043 = vmatpush.bf16.msra.mxu0 0
      %1044 = vmatpush.bf16.msra.mxu0 0
      %1045 = vmatpush.bf16.msra.mxu0 0
      %1046 = vmatpush.bf16.msra.mxu0 0
      %1047 = vmatpush.bf16.msra.mxu0 0
      %1048 = vmatpush.bf16.msra.mxu0 0
      %1049 = vmatpush.bf16.msra.mxu0 %v1037
      %1050 = vmatmul.bf16.gmra.mxu0 %v1040
      %v1051 = vpop.f32.mrf.mxu0
      %v1052 = vadd.f32 0.0, %v1051
      %v1053 = vpop.f32.mrf.mxu0
      %v1054 = vadd.f32 0.0, %v1053
      %1055 = vdwg.mxu0
      %v1056 = vadd.f32 %v1021, %v1052
      %v1057 = vadd.f32 %v1023, %v1054
      %s1058 = scalar_lea.vmem %s5, 24
      %v1059 = vld [vmem:[%s1058] sm:$0xf]
      %v1060 = vld [vmem:[%s1058 + $0x4] sm:$0xf]
      %v1063 = vunpack.c.l.b16 %v937
      %v1064 = vunpack.c.l.b16 %v938
      %v1065 = vpack.c.b16 %v1064, %v1063
      %v1068 = vunpack.c.l.b16 %v1059
      %v1069 = vunpack.c.l.b16 %v1060
      %v1070 = vpack.c.b16 %v1069, %v1068
      %v1073 = vsel %vm979, %v1065, 0
      %1075 = vmatpush.bf16.msra.mxu0 0
      %1076 = vmatpush.bf16.msra.mxu0 0
      %1077 = vmatpush.bf16.msra.mxu0 0
      %1078 = vmatpush.bf16.msra.mxu0 0
      %1079 = vmatpush.bf16.msra.mxu0 0
      %1080 = vmatpush.bf16.msra.mxu0 0
      %1081 = vmatpush.bf16.msra.mxu0 0
      %1082 = vmatpush.bf16.msra.mxu0 %v1070
      %1083 = vmatmul.bf16.gmra.mxu0 %v1073
      %v1084 = vpop.f32.mrf.mxu0
      %v1085 = vadd.f32 0.0, %v1084
      %v1086 = vpop.f32.mrf.mxu0
      %v1087 = vadd.f32 0.0, %v1086
      %1088 = vdwg.mxu0
      %v1089 = vadd.f32 %v1056, %v1085
      %v1090 = vadd.f32 %v1057, %v1087
      %s1091 = scalar_lea.vmem %s5, 32
      %v1092 = vld [vmem:[%s1091] sm:$0xf]
      %v1093 = vld [vmem:[%s1091 + $0x4] sm:$0xf]
      %v1096 = vunpack.c.l.b16 %v939
      %v1097 = vunpack.c.l.b16 %v940
      %v1098 = vpack.c.b16 %v1097, %v1096
      %v1101 = vunpack.c.l.b16 %v1092
      %v1102 = vunpack.c.l.b16 %v1093
      %v1103 = vpack.c.b16 %v1102, %v1101
      %v1106 = vsel %vm979, %v1098, 0
      %1108 = vmatpush.bf16.msra.mxu0 0
      %1109 = vmatpush.bf16.msra.mxu0 0
      %1110 = vmatpush.bf16.msra.mxu0 0
      %1111 = vmatpush.bf16.msra.mxu0 0
      %1112 = vmatpush.bf16.msra.mxu0 0
      %1113 = vmatpush.bf16.msra.mxu0 0
      %1114 = vmatpush.bf16.msra.mxu0 0
      %1115 = vmatpush.bf16.msra.mxu0 %v1103
      %1116 = vmatmul.bf16.gmra.mxu0 %v1106
      %v1117 = vpop.f32.mrf.mxu0
      %v1118 = vadd.f32 0.0, %v1117
      %v1119 = vpop.f32.mrf.mxu0
      %v1120 = vadd.f32 0.0, %v1119
      %1121 = vdwg.mxu0
      %v1122 = vadd.f32 %v1089, %v1118
      %v1123 = vadd.f32 %v1090, %v1120
      %s1124 = scalar_lea.vmem %s5, 40
      %v1125 = vld [vmem:[%s1124] sm:$0xf]
      %v1126 = vld [vmem:[%s1124 + $0x4] sm:$0xf]
      %v1129 = vunpack.c.l.b16 %v941
      %v1130 = vunpack.c.l.b16 %v942
      %v1131 = vpack.c.b16 %v1130, %v1129
      %v1134 = vunpack.c.l.b16 %v1125
      %v1135 = vunpack.c.l.b16 %v1126
      %v1136 = vpack.c.b16 %v1135, %v1134
      %v1139 = vsel %vm979, %v1131, 0
      %1141 = vmatpush.bf16.msra.mxu0 0
      %1142 = vmatpush.bf16.msra.mxu0 0
      %1143 = vmatpush.bf16.msra.mxu0 0
      %1144 = vmatpush.bf16.msra.mxu0 0
      %1145 = vmatpush.bf16.msra.mxu0 0
      %1146 = vmatpush.bf16.msra.mxu0 0
      %1147 = vmatpush.bf16.msra.mxu0 0
      %1148 = vmatpush.bf16.msra.mxu0 %v1136
      %1149 = vmatmul.bf16.gmra.mxu0 %v1139
      %v1150 = vpop.f32.mrf.mxu0
      %v1151 = vadd.f32 0.0, %v1150
      %v1152 = vpop.f32.mrf.mxu0
      %v1153 = vadd.f32 0.0, %v1152
      %1154 = vdwg.mxu0
      %v1155 = vadd.f32 %v1122, %v1151
      %v1156 = vadd.f32 %v1123, %v1153
      %s1157 = scalar_lea.vmem %s5, 48
      %v1158 = vld [vmem:[%s1157] sm:$0xf]
      %v1159 = vld [vmem:[%s1157 + $0x4] sm:$0xf]
      %v1162 = vunpack.c.l.b16 %v943
      %v1163 = vunpack.c.l.b16 %v944
      %v1164 = vpack.c.b16 %v1163, %v1162
      %v1167 = vunpack.c.l.b16 %v1158
      %v1168 = vunpack.c.l.b16 %v1159
      %v1169 = vpack.c.b16 %v1168, %v1167
      %v1172 = vsel %vm979, %v1164, 0
      %1174 = vmatpush.bf16.msra.mxu0 0
      %1175 = vmatpush.bf16.msra.mxu0 0
      %1176 = vmatpush.bf16.msra.mxu0 0
      %1177 = vmatpush.bf16.msra.mxu0 0
      %1178 = vmatpush.bf16.msra.mxu0 0
      %1179 = vmatpush.bf16.msra.mxu0 0
      %1180 = vmatpush.bf16.msra.mxu0 0
      %1181 = vmatpush.bf16.msra.mxu0 %v1169
      %1182 = vmatmul.bf16.gmra.mxu0 %v1172
      %v1183 = vpop.f32.mrf.mxu0
      %v1184 = vadd.f32 0.0, %v1183
      %v1185 = vpop.f32.mrf.mxu0
      %v1186 = vadd.f32 0.0, %v1185
      %1187 = vdwg.mxu0
      %v1188 = vadd.f32 %v1155, %v1184
      %v1189 = vadd.f32 %v1156, %v1186
      %s1190 = scalar_lea.vmem %s5, 56
      %v1191 = vld [vmem:[%s1190] sm:$0xf]
      %v1192 = vld [vmem:[%s1190 + $0x4] sm:$0xf]
      %v1195 = vunpack.c.l.b16 %v945
      %v1196 = vunpack.c.l.b16 %v946
      %v1197 = vpack.c.b16 %v1196, %v1195
      %v1200 = vunpack.c.l.b16 %v1191
      %v1201 = vunpack.c.l.b16 %v1192
      %v1202 = vpack.c.b16 %v1201, %v1200
      %v1205 = vsel %vm979, %v1197, 0
      %1207 = vmatpush.bf16.msra.mxu0 0
      %1208 = vmatpush.bf16.msra.mxu0 0
      %1209 = vmatpush.bf16.msra.mxu0 0
      %1210 = vmatpush.bf16.msra.mxu0 0
      %1211 = vmatpush.bf16.msra.mxu0 0
      %1212 = vmatpush.bf16.msra.mxu0 0
      %1213 = vmatpush.bf16.msra.mxu0 0
      %1214 = vmatpush.bf16.msra.mxu0 %v1202
      %1215 = vmatmul.bf16.gmra.mxu0 %v1205
      %v1216 = vpop.f32.mrf.mxu0
      %v1217 = vadd.f32 0.0, %v1216
      %v1218 = vpop.f32.mrf.mxu0
      %v1219 = vadd.f32 0.0, %v1218
      %1220 = vdwg.mxu0
      %v1221 = vadd.f32 %v1188, %v1217
      %v1222 = vadd.f32 %v1189, %v1219
      %s1223 = scalar_lea.vmem %s5, 64
      %v1224 = vld [vmem:[%s1223] sm:$0xf]
      %v1225 = vld [vmem:[%s1223 + $0x4] sm:$0xf]
      %v1228 = vunpack.c.l.b16 %v947
      %v1229 = vunpack.c.l.b16 %v948
      %v1230 = vpack.c.b16 %v1229, %v1228
      %v1233 = vunpack.c.l.b16 %v1224
      %v1234 = vunpack.c.l.b16 %v1225
      %v1235 = vpack.c.b16 %v1234, %v1233
      %v1238 = vsel %vm979, %v1230, 0
      %1240 = vmatpush.bf16.msra.mxu0 0
      %1241 = vmatpush.bf16.msra.mxu0 0
      %1242 = vmatpush.bf16.msra.mxu0 0
      %1243 = vmatpush.bf16.msra.mxu0 0
      %1244 = vmatpush.bf16.msra.mxu0 0
      %1245 = vmatpush.bf16.msra.mxu0 0
      %1246 = vmatpush.bf16.msra.mxu0 0
      %1247 = vmatpush.bf16.msra.mxu0 %v1235
      %1248 = vmatmul.bf16.gmra.mxu0 %v1238
      %v1249 = vpop.f32.mrf.mxu0
      %v1250 = vadd.f32 0.0, %v1249
      %v1251 = vpop.f32.mrf.mxu0
      %v1252 = vadd.f32 0.0, %v1251
      %1253 = vdwg.mxu0
      %v1254 = vadd.f32 %v1221, %v1250
      %v1255 = vadd.f32 %v1222, %v1252
      %s1256 = scalar_lea.vmem %s5, 72
      %v1257 = vld [vmem:[%s1256] sm:$0xf]
      %v1258 = vld [vmem:[%s1256 + $0x4] sm:$0xf]
      %v1261 = vunpack.c.l.b16 %v949
      %v1262 = vunpack.c.l.b16 %v950
      %v1263 = vpack.c.b16 %v1262, %v1261
      %v1266 = vunpack.c.l.b16 %v1257
      %v1267 = vunpack.c.l.b16 %v1258
      %v1268 = vpack.c.b16 %v1267, %v1266
      %v1271 = vsel %vm979, %v1263, 0
      %1273 = vmatpush.bf16.msra.mxu0 0
      %1274 = vmatpush.bf16.msra.mxu0 0
      %1275 = vmatpush.bf16.msra.mxu0 0
      %1276 = vmatpush.bf16.msra.mxu0 0
      %1277 = vmatpush.bf16.msra.mxu0 0
      %1278 = vmatpush.bf16.msra.mxu0 0
      %1279 = vmatpush.bf16.msra.mxu0 0
      %1280 = vmatpush.bf16.msra.mxu0 %v1268
      %1281 = vmatmul.bf16.gmra.mxu0 %v1271
      %v1282 = vpop.f32.mrf.mxu0
      %v1283 = vadd.f32 0.0, %v1282
      %v1284 = vpop.f32.mrf.mxu0
      %v1285 = vadd.f32 0.0, %v1284
      %1286 = vdwg.mxu0
      %v1287 = vadd.f32 %v1254, %v1283
      %v1288 = vadd.f32 %v1255, %v1285
      %s1289 = scalar_lea.vmem %s5, 80
      %v1290 = vld [vmem:[%s1289] sm:$0xf]
      %v1291 = vld [vmem:[%s1289 + $0x4] sm:$0xf]
      %v1294 = vunpack.c.l.b16 %v951
      %v1295 = vunpack.c.l.b16 %v952
      %v1296 = vpack.c.b16 %v1295, %v1294
      %v1299 = vunpack.c.l.b16 %v1290
      %v1300 = vunpack.c.l.b16 %v1291
      %v1301 = vpack.c.b16 %v1300, %v1299
      %v1304 = vsel %vm979, %v1296, 0
      %1306 = vmatpush.bf16.msra.mxu0 0
      %1307 = vmatpush.bf16.msra.mxu0 0
      %1308 = vmatpush.bf16.msra.mxu0 0
      %1309 = vmatpush.bf16.msra.mxu0 0
      %1310 = vmatpush.bf16.msra.mxu0 0
      %1311 = vmatpush.bf16.msra.mxu0 0
      %1312 = vmatpush.bf16.msra.mxu0 0
      %1313 = vmatpush.bf16.msra.mxu0 %v1301
      %1314 = vmatmul.bf16.gmra.mxu0 %v1304
      %v1315 = vpop.f32.mrf.mxu0
      %v1316 = vadd.f32 0.0, %v1315
      %v1317 = vpop.f32.mrf.mxu0
      %v1318 = vadd.f32 0.0, %v1317
      %1319 = vdwg.mxu0
      %v1320 = vadd.f32 %v1287, %v1316
      %v1321 = vadd.f32 %v1288, %v1318
      %s1322 = scalar_lea.vmem %s5, 88
      %v1323 = vld [vmem:[%s1322] sm:$0xf]
      %v1324 = vld [vmem:[%s1322 + $0x4] sm:$0xf]
      %v1327 = vunpack.c.l.b16 %v953
      %v1328 = vunpack.c.l.b16 %v954
      %v1329 = vpack.c.b16 %v1328, %v1327
      %v1332 = vunpack.c.l.b16 %v1323
      %v1333 = vunpack.c.l.b16 %v1324
      %v1334 = vpack.c.b16 %v1333, %v1332
      %v1337 = vsel %vm979, %v1329, 0
      %1339 = vmatpush.bf16.msra.mxu0 0
      %1340 = vmatpush.bf16.msra.mxu0 0
      %1341 = vmatpush.bf16.msra.mxu0 0
      %1342 = vmatpush.bf16.msra.mxu0 0
      %1343 = vmatpush.bf16.msra.mxu0 0
      %1344 = vmatpush.bf16.msra.mxu0 0
      %1345 = vmatpush.bf16.msra.mxu0 0
      %1346 = vmatpush.bf16.msra.mxu0 %v1334
      %1347 = vmatmul.bf16.gmra.mxu0 %v1337
      %v1348 = vpop.f32.mrf.mxu0
      %v1349 = vadd.f32 0.0, %v1348
      %v1350 = vpop.f32.mrf.mxu0
      %v1351 = vadd.f32 0.0, %v1350
      %1352 = vdwg.mxu0
      %v1353 = vadd.f32 %v1320, %v1349
      %v1354 = vadd.f32 %v1321, %v1351
      %s1355 = scalar_lea.vmem %s5, 96
      %v1356 = vld [vmem:[%s1355] sm:$0xf]
      %v1357 = vld [vmem:[%s1355 + $0x4] sm:$0xf]
      %v1360 = vunpack.c.l.b16 %v955
      %v1361 = vunpack.c.l.b16 %v956
      %v1362 = vpack.c.b16 %v1361, %v1360
      %v1365 = vunpack.c.l.b16 %v1356
      %v1366 = vunpack.c.l.b16 %v1357
      %v1367 = vpack.c.b16 %v1366, %v1365
      %v1370 = vsel %vm979, %v1362, 0
      %1372 = vmatpush.bf16.msra.mxu0 0
      %1373 = vmatpush.bf16.msra.mxu0 0
      %1374 = vmatpush.bf16.msra.mxu0 0
      %1375 = vmatpush.bf16.msra.mxu0 0
      %1376 = vmatpush.bf16.msra.mxu0 0
      %1377 = vmatpush.bf16.msra.mxu0 0
      %1378 = vmatpush.bf16.msra.mxu0 0
      %1379 = vmatpush.bf16.msra.mxu0 %v1367
      %1380 = vmatmul.bf16.gmra.mxu0 %v1370
      %v1381 = vpop.f32.mrf.mxu0
      %v1382 = vadd.f32 0.0, %v1381
      %v1383 = vpop.f32.mrf.mxu0
      %v1384 = vadd.f32 0.0, %v1383
      %1385 = vdwg.mxu0
      %v1386 = vadd.f32 %v1353, %v1382
      %v1387 = vadd.f32 %v1354, %v1384
      %s1388 = scalar_lea.vmem %s5, 104
      %v1389 = vld [vmem:[%s1388] sm:$0xf]
      %v1390 = vld [vmem:[%s1388 + $0x4] sm:$0xf]
      %v1393 = vunpack.c.l.b16 %v957
      %v1394 = vunpack.c.l.b16 %v958
      %v1395 = vpack.c.b16 %v1394, %v1393
      %v1398 = vunpack.c.l.b16 %v1389
      %v1399 = vunpack.c.l.b16 %v1390
      %v1400 = vpack.c.b16 %v1399, %v1398
      %v1403 = vsel %vm979, %v1395, 0
      %1405 = vmatpush.bf16.msra.mxu0 0
      %1406 = vmatpush.bf16.msra.mxu0 0
      %1407 = vmatpush.bf16.msra.mxu0 0
      %1408 = vmatpush.bf16.msra.mxu0 0
      %1409 = vmatpush.bf16.msra.mxu0 0
      %1410 = vmatpush.bf16.msra.mxu0 0
      %1411 = vmatpush.bf16.msra.mxu0 0
      %1412 = vmatpush.bf16.msra.mxu0 %v1400
      %1413 = vmatmul.bf16.gmra.mxu0 %v1403
      %v1414 = vpop.f32.mrf.mxu0
      %v1415 = vadd.f32 0.0, %v1414
      %v1416 = vpop.f32.mrf.mxu0
      %v1417 = vadd.f32 0.0, %v1416
      %1418 = vdwg.mxu0
      %v1419 = vadd.f32 %v1386, %v1415
      %v1420 = vadd.f32 %v1387, %v1417
      %s1421 = scalar_lea.vmem %s5, 112
      %v1422 = vld [vmem:[%s1421] sm:$0xf]
      %v1423 = vld [vmem:[%s1421 + $0x4] sm:$0xf]
      %v1426 = vunpack.c.l.b16 %v959
      %v1427 = vunpack.c.l.b16 %v960
      %v1428 = vpack.c.b16 %v1427, %v1426
      %v1431 = vunpack.c.l.b16 %v1422
      %v1432 = vunpack.c.l.b16 %v1423
      %v1433 = vpack.c.b16 %v1432, %v1431
      %v1436 = vsel %vm979, %v1428, 0
      %1438 = vmatpush.bf16.msra.mxu0 0
      %1439 = vmatpush.bf16.msra.mxu0 0
      %1440 = vmatpush.bf16.msra.mxu0 0
      %1441 = vmatpush.bf16.msra.mxu0 0
      %1442 = vmatpush.bf16.msra.mxu0 0
      %1443 = vmatpush.bf16.msra.mxu0 0
      %1444 = vmatpush.bf16.msra.mxu0 0
      %1445 = vmatpush.bf16.msra.mxu0 %v1433
      %1446 = vmatmul.bf16.gmra.mxu0 %v1436
      %v1447 = vpop.f32.mrf.mxu0
      %v1448 = vadd.f32 0.0, %v1447
      %v1449 = vpop.f32.mrf.mxu0
      %v1450 = vadd.f32 0.0, %v1449
      %1451 = vdwg.mxu0
      %v1452 = vadd.f32 %v1419, %v1448
      %v1453 = vadd.f32 %v1420, %v1450
      %s1454 = scalar_lea.vmem %s5, 120
      %v1455 = vld [vmem:[%s1454] sm:$0xf]
      %v1456 = vld [vmem:[%s1454 + $0x4] sm:$0xf]
      %v1459 = vunpack.c.l.b16 %v961
      %v1460 = vunpack.c.l.b16 %v962
      %v1461 = vpack.c.b16 %v1460, %v1459
      %v1464 = vunpack.c.l.b16 %v1455
      %v1465 = vunpack.c.l.b16 %v1456
      %v1466 = vpack.c.b16 %v1465, %v1464
      %v1469 = vsel %vm979, %v1461, 0
      %1471 = vmatpush.bf16.msra.mxu0 0
      %1472 = vmatpush.bf16.msra.mxu0 0
      %1473 = vmatpush.bf16.msra.mxu0 0
      %1474 = vmatpush.bf16.msra.mxu0 0
      %1475 = vmatpush.bf16.msra.mxu0 0
      %1476 = vmatpush.bf16.msra.mxu0 0
      %1477 = vmatpush.bf16.msra.mxu0 0
      %1478 = vmatpush.bf16.msra.mxu0 %v1466
      %1479 = vmatmul.bf16.gmra.mxu0 %v1469
      %v1480 = vpop.f32.mrf.mxu0
      %v1481 = vadd.f32 0.0, %v1480
      %v1482 = vpop.f32.mrf.mxu0
      %v1483 = vadd.f32 0.0, %v1482
      %1484 = vdwg.mxu0
      %v1485 = vadd.f32 %v1452, %v1481
      %v1486 = vadd.f32 %v1453, %v1483
      %v1487 = vld [vmem:[%s6] sm:$0x1]
      %v1489 = vperm.slane %v1487, 0
      %v1491 = vmul.f32 %v1485, %v1489
      %v1492 = vmul.f32 %v1486, %v1489
      %v1493 = vld [vmem:[%s7] sm:$0x1]
      %v1495 = vperm.slane %v1493, 0
      %v1497 = vadd.f32 %v1491, %v1495
      %v1498 = vadd.f32 %v1492, %v1495
      %v1499 = vmax.f32 %v1497, 0.0
      %v1500 = vmax.f32 %v1498, 0.0
      %v1501 = vpack.c.bf16 %v1500, %v1499
      %v1502 = vld [vmem:[%s8] sm:$0xf]
      %v1503 = vld [vmem:[%s8 + $0x4] sm:$0xf]
      %v1504 = vld [vmem:[%s8 + $0x8] sm:$0xf]
      %v1505 = vld [vmem:[%s8 + $0xc] sm:$0xf]
      %v1506 = vld [vmem:[%s8 + $0x10] sm:$0xf]
      %v1507 = vld [vmem:[%s8 + $0x14] sm:$0xf]
      %v1508 = vld [vmem:[%s8 + $0x18] sm:$0xf]
      %v1509 = vld [vmem:[%s8 + $0x1c] sm:$0xf]
      %v1510 = vld [vmem:[%s8 + $0x20] sm:$0xf]
      %v1511 = vld [vmem:[%s8 + $0x24] sm:$0xf]
      %v1512 = vld [vmem:[%s8 + $0x28] sm:$0xf]
      %v1513 = vld [vmem:[%s8 + $0x2c] sm:$0xf]
      %v1514 = vld [vmem:[%s8 + $0x30] sm:$0xf]
      %v1515 = vld [vmem:[%s8 + $0x34] sm:$0xf]
      %v1516 = vld [vmem:[%s8 + $0x38] sm:$0xf]
      %v1517 = vld [vmem:[%s8 + $0x3c] sm:$0xf]
      %v1518 = vld [vmem:[%s8 + $0x40] sm:$0xf]
      %v1519 = vld [vmem:[%s8 + $0x44] sm:$0xf]
      %v1538 = vunpack.c.l.b16 %v1502
      %v1539 = vunpack.c.l.b16 %v1503
      %v1540 = vunpack.c.l.b16 %v1504
      %v1541 = vunpack.c.l.b16 %v1505
      %v1542 = vunpack.c.l.b16 %v1506
      %v1543 = vunpack.c.l.b16 %v1507
      %v1544 = vunpack.c.l.b16 %v1508
      %v1545 = vunpack.c.l.b16 %v1509
      %v1546 = vunpack.c.l.b16 %v1510
      %v1547 = vunpack.c.l.b16 %v1511
      %v1548 = vunpack.c.l.b16 %v1512
      %v1549 = vunpack.c.l.b16 %v1513
      %v1550 = vunpack.c.l.b16 %v1514
      %v1551 = vunpack.c.l.b16 %v1515
      %v1552 = vunpack.c.l.b16 %v1516
      %v1553 = vunpack.c.l.b16 %v1517
      %v1554 = vunpack.c.l.b16 %v1518
      %v1555 = vunpack.c.l.b16 %v1519
      %v1556 = vpack.c.b16 %v1539, %v1538
      %v1557 = vpack.c.b16 %v1541, %v1540
      %v1558 = vpack.c.b16 %v1543, %v1542
      %v1559 = vpack.c.b16 %v1545, %v1544
      %v1560 = vpack.c.b16 %v1547, %v1546
      %v1561 = vpack.c.b16 %v1549, %v1548
      %v1562 = vpack.c.b16 %v1551, %v1550
      %v1563 = vpack.c.b16 %v1553, %v1552
      %v1564 = vpack.c.b16 %v1555, %v1554
      %v1566 = vsel %vm979, %v1556, 0
      %v1569 = vsel %vm979, %v1557, 0
      %v1572 = vsel %vm979, %v1558, 0
      %v1575 = vsel %vm979, %v1559, 0
      %v1578 = vsel %vm979, %v1560, 0
      %v1581 = vsel %vm979, %v1561, 0
      %v1584 = vsel %vm979, %v1562, 0
      %v1587 = vsel %vm979, %v1563, 0
      %v1590 = vsel %vm979, %v1564, 0
      %1592 = vmatpush.bf16.msra.mxu0 0
      %1593 = vmatpush.bf16.msra.mxu0 0
      %1594 = vmatpush.bf16.msra.mxu0 0
      %1595 = vmatpush.bf16.msra.mxu0 0
      %1596 = vmatpush.bf16.msra.mxu0 0
      %1597 = vmatpush.bf16.msra.mxu0 0
      %1598 = vmatpush.bf16.msra.mxu0 0
      %1599 = vmatpush.bf16.msra.mxu0 %v1501
      %1600 = vmatmul.bf16.gmra.mxu0 %v1566
      %v1601 = vpop.f32.mrf.mxu0
      %v1602 = vadd.f32 0.0, %v1601
      %v1603 = vpop.f32.mrf.mxu0
      %v1604 = vadd.f32 0.0, %v1603
      %1605 = vmatmul.bf16.gmra.mxu0 %v1569
      %v1606 = vpop.f32.mrf.mxu0
      %v1607 = vadd.f32 0.0, %v1606
      %v1608 = vpop.f32.mrf.mxu0
      %v1609 = vadd.f32 0.0, %v1608
      %1610 = vmatmul.bf16.gmra.mxu0 %v1572
      %v1611 = vpop.f32.mrf.mxu0
      %v1612 = vadd.f32 0.0, %v1611
      %v1613 = vpop.f32.mrf.mxu0
      %v1614 = vadd.f32 0.0, %v1613
      %1615 = vmatmul.bf16.gmra.mxu0 %v1575
      %v1616 = vpop.f32.mrf.mxu0
      %v1617 = vadd.f32 0.0, %v1616
      %v1618 = vpop.f32.mrf.mxu0
      %v1619 = vadd.f32 0.0, %v1618
      %1620 = vmatmul.bf16.gmra.mxu0 %v1578
      %v1621 = vpop.f32.mrf.mxu0
      %v1622 = vadd.f32 0.0, %v1621
      %v1623 = vpop.f32.mrf.mxu0
      %v1624 = vadd.f32 0.0, %v1623
      %1625 = vmatmul.bf16.gmra.mxu0 %v1581
      %v1626 = vpop.f32.mrf.mxu0
      %v1627 = vadd.f32 0.0, %v1626
      %v1628 = vpop.f32.mrf.mxu0
      %v1629 = vadd.f32 0.0, %v1628
      %1630 = vmatmul.bf16.gmra.mxu0 %v1584
      %v1631 = vpop.f32.mrf.mxu0
      %v1632 = vadd.f32 0.0, %v1631
      %v1633 = vpop.f32.mrf.mxu0
      %v1634 = vadd.f32 0.0, %v1633
      %1635 = vmatmul.bf16.gmra.mxu0 %v1587
      %v1636 = vpop.f32.mrf.mxu0
      %v1637 = vadd.f32 0.0, %v1636
      %v1638 = vpop.f32.mrf.mxu0
      %v1639 = vadd.f32 0.0, %v1638
      %1640 = vmatmul.bf16.gmra.mxu0 %v1590
      %v1641 = vpop.f32.mrf.mxu0
      %v1642 = vadd.f32 0.0, %v1641
      %v1643 = vpop.f32.mrf.mxu0
      %v1644 = vadd.f32 0.0, %v1643
      %1645 = vdwg.mxu0
      %v1646 = vpack.c.bf16 %v1602, %v1602
      %v1647 = vpack.c.bf16 %v1604, %v1604
      %v1648 = vpack.c.bf16 %v1607, %v1607
      %v1649 = vpack.c.bf16 %v1609, %v1609
      %v1650 = vpack.c.bf16 %v1612, %v1612
      %v1651 = vpack.c.bf16 %v1614, %v1614
      %v1652 = vpack.c.bf16 %v1617, %v1617
      %v1653 = vpack.c.bf16 %v1619, %v1619
      %v1654 = vpack.c.bf16 %v1622, %v1622
      %v1655 = vpack.c.bf16 %v1624, %v1624
      %v1656 = vpack.c.bf16 %v1627, %v1627
      %v1657 = vpack.c.bf16 %v1629, %v1629
      %v1658 = vpack.c.bf16 %v1632, %v1632
      %v1659 = vpack.c.bf16 %v1634, %v1634
      %v1660 = vpack.c.bf16 %v1637, %v1637
      %v1661 = vpack.c.bf16 %v1639, %v1639
      %v1662 = vpack.c.bf16 %v1642, %v1642
      %v1663 = vpack.c.bf16 %v1644, %v1644
      %v1664 = vld [vmem:[%s9] sm:$0xf]
      %v1665 = vld [vmem:[%s9 + $0x4] sm:$0xf]
      %v1666 = vld [vmem:[%s9 + $0x8] sm:$0xf]
      %v1667 = vld [vmem:[%s9 + $0xc] sm:$0xf]
      %s1668 = scalar_lea.vmem %s9, 16
      %v1669 = vld [vmem:[%s1668] sm:$0xf]
      %v1670 = vld [vmem:[%s1668 + $0x4] sm:$0xf]
      %v1671 = vld [vmem:[%s1668 + $0x8] sm:$0xf]
      %v1672 = vld [vmem:[%s1668 + $0xc] sm:$0xf]
      %v1675 = vunpack.c.l.b16 %v1648
      %v1676 = vunpack.c.l.b16 %v1649
      %v1677 = vpack.c.b16 %v1676, %v1675
      %v1682 = vunpack.c.l.b16 %v1669
      %v1683 = vunpack.c.l.b16 %v1670
      %v1684 = vunpack.c.l.b16 %v1671
      %v1685 = vunpack.c.l.b16 %v1672
      %v1686 = vpack.c.b16 %v1683, %v1682
      %v1687 = vpack.c.b16 %v1685, %v1684
      %vm1690 = vcmask 261120
      %v1692 = vsel %vm1690, %v1677, 0
      %1694 = vmatpush.bf16.msra.mxu0 0
      %1695 = vmatpush.bf16.msra.mxu0 0
      %1696 = vmatpush.bf16.msra.mxu0 0
      %1697 = vmatpush.bf16.msra.mxu0 0
      %1698 = vmatpush.bf16.msra.mxu0 0
      %1699 = vmatpush.bf16.msra.mxu0 0
      %1700 = vmatpush.bf16.msra.mxu0 %v1687
      %1701 = vmatpush.bf16.msra.mxu0 %v1686
      %1702 = vmatmul.bf16.gmra.mxu0 %v1692
      %v1703 = vpop.f32.mrf.mxu0
      %v1704 = vadd.f32 0.0, %v1703
      %v1705 = vpop.f32.mrf.mxu0
      %v1706 = vadd.f32 0.0, %v1705
      %1707 = vdwg.mxu0
      %v1710 = vunpack.c.l.b16 %v1646
      %v1711 = vunpack.c.l.b16 %v1647
      %v1712 = vpack.c.b16 %v1711, %v1710
      %v1717 = vunpack.c.l.b16 %v1664
      %v1718 = vunpack.c.l.b16 %v1665
      %v1719 = vunpack.c.l.b16 %v1666
      %v1720 = vunpack.c.l.b16 %v1667
      %v1721 = vpack.c.b16 %v1718, %v1717
      %v1722 = vpack.c.b16 %v1720, %v1719
      %v1726 = vsel %vm1690, %v1712, 0
      %1728 = vmatpush.bf16.msra.mxu0 0
      %1729 = vmatpush.bf16.msra.mxu0 0
      %1730 = vmatpush.bf16.msra.mxu0 0
      %1731 = vmatpush.bf16.msra.mxu0 0
      %1732 = vmatpush.bf16.msra.mxu0 0
      %1733 = vmatpush.bf16.msra.mxu0 0
      %1734 = vmatpush.bf16.msra.mxu0 %v1722
      %1735 = vmatpush.bf16.msra.mxu0 %v1721
      %1736 = vmatmul.bf16.gmra.mxu0 %v1726
      %v1737 = vpop.f32.mrf.mxu0
      %v1738 = vadd.f32 %v1704, %v1737
      %v1739 = vpop.f32.mrf.mxu0
      %v1740 = vadd.f32 %v1706, %v1739
      %1741 = vdwg.mxu0
      %s1742 = scalar_lea.vmem %s9, 32
      %v1743 = vld [vmem:[%s1742] sm:$0xf]
      %v1744 = vld [vmem:[%s1742 + $0x4] sm:$0xf]
      %v1745 = vld [vmem:[%s1742 + $0x8] sm:$0xf]
      %v1746 = vld [vmem:[%s1742 + $0xc] sm:$0xf]
      %v1749 = vunpack.c.l.b16 %v1650
      %v1750 = vunpack.c.l.b16 %v1651
      %v1751 = vpack.c.b16 %v1750, %v1749
      %v1756 = vunpack.c.l.b16 %v1743
      %v1757 = vunpack.c.l.b16 %v1744
      %v1758 = vunpack.c.l.b16 %v1745
      %v1759 = vunpack.c.l.b16 %v1746
      %v1760 = vpack.c.b16 %v1757, %v1756
      %v1761 = vpack.c.b16 %v1759, %v1758
      %v1765 = vsel %vm1690, %v1751, 0
      %1767 = vmatpush.bf16.msra.mxu0 0
      %1768 = vmatpush.bf16.msra.mxu0 0
      %1769 = vmatpush.bf16.msra.mxu0 0
      %1770 = vmatpush.bf16.msra.mxu0 0
      %1771 = vmatpush.bf16.msra.mxu0 0
      %1772 = vmatpush.bf16.msra.mxu0 0
      %1773 = vmatpush.bf16.msra.mxu0 %v1761
      %1774 = vmatpush.bf16.msra.mxu0 %v1760
      %1775 = vmatmul.bf16.gmra.mxu0 %v1765
      %v1776 = vpop.f32.mrf.mxu0
      %v1777 = vadd.f32 0.0, %v1776
      %v1778 = vpop.f32.mrf.mxu0
      %v1779 = vadd.f32 0.0, %v1778
      %1780 = vdwg.mxu0
      %v1781 = vadd.f32 %v1738, %v1777
      %v1782 = vadd.f32 %v1740, %v1779
      %s1783 = scalar_lea.vmem %s9, 48
      %v1784 = vld [vmem:[%s1783] sm:$0xf]
      %v1785 = vld [vmem:[%s1783 + $0x4] sm:$0xf]
      %v1786 = vld [vmem:[%s1783 + $0x8] sm:$0xf]
      %v1787 = vld [vmem:[%s1783 + $0xc] sm:$0xf]
      %v1790 = vunpack.c.l.b16 %v1652
      %v1791 = vunpack.c.l.b16 %v1653
      %v1792 = vpack.c.b16 %v1791, %v1790
      %v1797 = vunpack.c.l.b16 %v1784
      %v1798 = vunpack.c.l.b16 %v1785
      %v1799 = vunpack.c.l.b16 %v1786
      %v1800 = vunpack.c.l.b16 %v1787
      %v1801 = vpack.c.b16 %v1798, %v1797
      %v1802 = vpack.c.b16 %v1800, %v1799
      %v1806 = vsel %vm1690, %v1792, 0
      %1808 = vmatpush.bf16.msra.mxu0 0
      %1809 = vmatpush.bf16.msra.mxu0 0
      %1810 = vmatpush.bf16.msra.mxu0 0
      %1811 = vmatpush.bf16.msra.mxu0 0
      %1812 = vmatpush.bf16.msra.mxu0 0
      %1813 = vmatpush.bf16.msra.mxu0 0
      %1814 = vmatpush.bf16.msra.mxu0 %v1802
      %1815 = vmatpush.bf16.msra.mxu0 %v1801
      %1816 = vmatmul.bf16.gmra.mxu0 %v1806
      %v1817 = vpop.f32.mrf.mxu0
      %v1818 = vadd.f32 0.0, %v1817
      %v1819 = vpop.f32.mrf.mxu0
      %v1820 = vadd.f32 0.0, %v1819
      %1821 = vdwg.mxu0
      %v1822 = vadd.f32 %v1781, %v1818
      %v1823 = vadd.f32 %v1782, %v1820
      %s1824 = scalar_lea.vmem %s9, 64
      %v1825 = vld [vmem:[%s1824] sm:$0xf]
      %v1826 = vld [vmem:[%s1824 + $0x4] sm:$0xf]
      %v1827 = vld [vmem:[%s1824 + $0x8] sm:$0xf]
      %v1828 = vld [vmem:[%s1824 + $0xc] sm:$0xf]
      %v1831 = vunpack.c.l.b16 %v1654
      %v1832 = vunpack.c.l.b16 %v1655
      %v1833 = vpack.c.b16 %v1832, %v1831
      %v1838 = vunpack.c.l.b16 %v1825
      %v1839 = vunpack.c.l.b16 %v1826
      %v1840 = vunpack.c.l.b16 %v1827
      %v1841 = vunpack.c.l.b16 %v1828
      %v1842 = vpack.c.b16 %v1839, %v1838
      %v1843 = vpack.c.b16 %v1841, %v1840
      %v1847 = vsel %vm1690, %v1833, 0
      %1849 = vmatpush.bf16.msra.mxu0 0
      %1850 = vmatpush.bf16.msra.mxu0 0
      %1851 = vmatpush.bf16.msra.mxu0 0
      %1852 = vmatpush.bf16.msra.mxu0 0
      %1853 = vmatpush.bf16.msra.mxu0 0
      %1854 = vmatpush.bf16.msra.mxu0 0
      %1855 = vmatpush.bf16.msra.mxu0 %v1843
      %1856 = vmatpush.bf16.msra.mxu0 %v1842
      %1857 = vmatmul.bf16.gmra.mxu0 %v1847
      %v1858 = vpop.f32.mrf.mxu0
      %v1859 = vadd.f32 0.0, %v1858
      %v1860 = vpop.f32.mrf.mxu0
      %v1861 = vadd.f32 0.0, %v1860
      %1862 = vdwg.mxu0
      %v1863 = vadd.f32 %v1822, %v1859
      %v1864 = vadd.f32 %v1823, %v1861
      %s1865 = scalar_lea.vmem %s9, 80
      %v1866 = vld [vmem:[%s1865] sm:$0xf]
      %v1867 = vld [vmem:[%s1865 + $0x4] sm:$0xf]
      %v1868 = vld [vmem:[%s1865 + $0x8] sm:$0xf]
      %v1869 = vld [vmem:[%s1865 + $0xc] sm:$0xf]
      %v1872 = vunpack.c.l.b16 %v1656
      %v1873 = vunpack.c.l.b16 %v1657
      %v1874 = vpack.c.b16 %v1873, %v1872
      %v1879 = vunpack.c.l.b16 %v1866
      %v1880 = vunpack.c.l.b16 %v1867
      %v1881 = vunpack.c.l.b16 %v1868
      %v1882 = vunpack.c.l.b16 %v1869
      %v1883 = vpack.c.b16 %v1880, %v1879
      %v1884 = vpack.c.b16 %v1882, %v1881
      %v1888 = vsel %vm1690, %v1874, 0
      %1890 = vmatpush.bf16.msra.mxu0 0
      %1891 = vmatpush.bf16.msra.mxu0 0
      %1892 = vmatpush.bf16.msra.mxu0 0
      %1893 = vmatpush.bf16.msra.mxu0 0
      %1894 = vmatpush.bf16.msra.mxu0 0
      %1895 = vmatpush.bf16.msra.mxu0 0
      %1896 = vmatpush.bf16.msra.mxu0 %v1884
      %1897 = vmatpush.bf16.msra.mxu0 %v1883
      %1898 = vmatmul.bf16.gmra.mxu0 %v1888
      %v1899 = vpop.f32.mrf.mxu0
      %v1900 = vadd.f32 0.0, %v1899
      %v1901 = vpop.f32.mrf.mxu0
      %v1902 = vadd.f32 0.0, %v1901
      %1903 = vdwg.mxu0
      %v1904 = vadd.f32 %v1863, %v1900
      %v1905 = vadd.f32 %v1864, %v1902
      %s1906 = scalar_lea.vmem %s9, 96
      %v1907 = vld [vmem:[%s1906] sm:$0xf]
      %v1908 = vld [vmem:[%s1906 + $0x4] sm:$0xf]
      %v1909 = vld [vmem:[%s1906 + $0x8] sm:$0xf]
      %v1910 = vld [vmem:[%s1906 + $0xc] sm:$0xf]
      %v1913 = vunpack.c.l.b16 %v1658
      %v1914 = vunpack.c.l.b16 %v1659
      %v1915 = vpack.c.b16 %v1914, %v1913
      %v1920 = vunpack.c.l.b16 %v1907
      %v1921 = vunpack.c.l.b16 %v1908
      %v1922 = vunpack.c.l.b16 %v1909
      %v1923 = vunpack.c.l.b16 %v1910
      %v1924 = vpack.c.b16 %v1921, %v1920
      %v1925 = vpack.c.b16 %v1923, %v1922
      %v1929 = vsel %vm1690, %v1915, 0
      %1931 = vmatpush.bf16.msra.mxu0 0
      %1932 = vmatpush.bf16.msra.mxu0 0
      %1933 = vmatpush.bf16.msra.mxu0 0
      %1934 = vmatpush.bf16.msra.mxu0 0
      %1935 = vmatpush.bf16.msra.mxu0 0
      %1936 = vmatpush.bf16.msra.mxu0 0
      %1937 = vmatpush.bf16.msra.mxu0 %v1925
      %1938 = vmatpush.bf16.msra.mxu0 %v1924
      %1939 = vmatmul.bf16.gmra.mxu0 %v1929
      %v1940 = vpop.f32.mrf.mxu0
      %v1941 = vadd.f32 0.0, %v1940
      %v1942 = vpop.f32.mrf.mxu0
      %v1943 = vadd.f32 0.0, %v1942
      %1944 = vdwg.mxu0
      %v1945 = vadd.f32 %v1904, %v1941
      %v1946 = vadd.f32 %v1905, %v1943
      %s1947 = scalar_lea.vmem %s9, 112
      %v1948 = vld [vmem:[%s1947] sm:$0xf]
      %v1949 = vld [vmem:[%s1947 + $0x4] sm:$0xf]
      %v1950 = vld [vmem:[%s1947 + $0x8] sm:$0xf]
      %v1951 = vld [vmem:[%s1947 + $0xc] sm:$0xf]
      %v1954 = vunpack.c.l.b16 %v1660
      %v1955 = vunpack.c.l.b16 %v1661
      %v1956 = vpack.c.b16 %v1955, %v1954
      %v1961 = vunpack.c.l.b16 %v1948
      %v1962 = vunpack.c.l.b16 %v1949
      %v1963 = vunpack.c.l.b16 %v1950
      %v1964 = vunpack.c.l.b16 %v1951
      %v1965 = vpack.c.b16 %v1962, %v1961
      %v1966 = vpack.c.b16 %v1964, %v1963
      %v1970 = vsel %vm1690, %v1956, 0
      %1972 = vmatpush.bf16.msra.mxu0 0
      %1973 = vmatpush.bf16.msra.mxu0 0
      %1974 = vmatpush.bf16.msra.mxu0 0
      %1975 = vmatpush.bf16.msra.mxu0 0
      %1976 = vmatpush.bf16.msra.mxu0 0
      %1977 = vmatpush.bf16.msra.mxu0 0
      %1978 = vmatpush.bf16.msra.mxu0 %v1966
      %1979 = vmatpush.bf16.msra.mxu0 %v1965
      %1980 = vmatmul.bf16.gmra.mxu0 %v1970
      %v1981 = vpop.f32.mrf.mxu0
      %v1982 = vadd.f32 0.0, %v1981
      %v1983 = vpop.f32.mrf.mxu0
      %v1984 = vadd.f32 0.0, %v1983
      %1985 = vdwg.mxu0
      %v1986 = vadd.f32 %v1945, %v1982
      %v1987 = vadd.f32 %v1946, %v1984
      %s1988 = scalar_lea.vmem %s9, 128
      %v1989 = vld [vmem:[%s1988] sm:$0xf]
      %v1990 = vld [vmem:[%s1988 + $0x4] sm:$0xf]
      %v1991 = vld [vmem:[%s1988 + $0x8] sm:$0xf]
      %v1992 = vld [vmem:[%s1988 + $0xc] sm:$0xf]
      %v1995 = vunpack.c.l.b16 %v1662
      %v1996 = vunpack.c.l.b16 %v1663
      %v1997 = vpack.c.b16 %v1996, %v1995
      %v2002 = vunpack.c.l.b16 %v1989
      %v2003 = vunpack.c.l.b16 %v1990
      %v2004 = vunpack.c.l.b16 %v1991
      %v2005 = vunpack.c.l.b16 %v1992
      %v2006 = vpack.c.b16 %v2003, %v2002
      %v2007 = vpack.c.b16 %v2005, %v2004
      %v2011 = vsel %vm1690, %v1997, 0
      %2013 = vmatpush.bf16.msra.mxu0 0
      %2014 = vmatpush.bf16.msra.mxu0 0
      %2015 = vmatpush.bf16.msra.mxu0 0
      %2016 = vmatpush.bf16.msra.mxu0 0
      %2017 = vmatpush.bf16.msra.mxu0 0
      %2018 = vmatpush.bf16.msra.mxu0 0
      %2019 = vmatpush.bf16.msra.mxu0 %v2007
      %2020 = vmatpush.bf16.msra.mxu0 %v2006
      %2021 = vmatmul.bf16.gmra.mxu0 %v2011
      %v2022 = vpop.f32.mrf.mxu0
      %v2023 = vadd.f32 0.0, %v2022
      %v2024 = vpop.f32.mrf.mxu0
      %v2025 = vadd.f32 0.0, %v2024
      %2026 = vdwg.mxu0
      %v2027 = vadd.f32 %v1986, %v2023
      %v2028 = vadd.f32 %v1987, %v2025
      %v2029 = vsel %vm793, %v2027, 0.0
      %v2030 = vsel %vm793, %v2028, 0.0
      %v2031 = vadd.f32 %v2029, %v2030
      %v2032 = vrot.slane %v2031, 4
      %v2033 = vadd.f32 %v2031, %v2032
      %v2034 = vrot.slane %v2033, 2
      %v2035 = vadd.f32 %v2033, %v2034
      %v2036 = vrot.slane %v2035, 1
      %v2037 = vadd.f32 %v2035, %v2036
      %v2038 = vld [vmem:[%s10] sm:$0x1]
      %v2039 = vmul.f32 %v2037, %v2038
      %v2040 = vld [vmem:[%s11] sm:$0x1]
      %v2041 = vadd.f32 %v2039, %v2040
      %v2042 = vmax.f32 %v2041, 0.0
      %v2043 = vpack.c.bf16 %v2042, %v2042
      %vm2044 = vcmask 516096
      %vm2045 = vsmask.f32 256
      %vm2046 = vmand %vm2044, %vm2045
      %v2047 = vld [vmem:[%s409] sm:$0x1]
      %v2048 = vsel %vm2046, %v2043, %v2047
      %2049 = vst [vmem:[%s409] sm:$0x1] %v2048
      %p2050 = scmp.lt.s32.totalorder %s23, 7
      %s2051 = scalar_select %p2050, %s23, 7
      %s2052 = scalar_lea.vmem %s12, %s2051
      // Predicated region
      $region69: #{forward.2} parent=67 // pred_check
        %p2053 = pneg %p298
      $region70: #{forward.2} parent=67 // pred_check_branch
        %2055 = sbr.rel (%p2053) target = $region72
      $region71: #{forward.2} parent=67 // pred_region
        _
      $region72: #{forward.2} parent=67 // pred_fallthru
        _
    $region68: #{forward.2} parent=5 // pred_fallthru
      _
    %p2056 = scmp.le.s32.totalorder 2, %s18
    // Predicated region
    $region73: #{forward.2} parent=5 // pred_check
      %p2057 = pneg %p2056
    $region74: #{forward.2} parent=5 // pred_check_branch
      %2059 = sbr.rel (%p2057) target = $region76
    $region75: #{forward.2} parent=5 // pred_region
      %s2060 = ssub.s32 %s18, 2
      // Predicated region
      $region77: #{forward.2} parent=75 // pred_check
        %p2061 = pneg %p304
      $region78: #{forward.2} parent=75 // pred_check_branch
        %2063 = sbr.rel (%p2061) target = $region80
      $region79: #{forward.2} parent=75 // pred_region
        %p2064 = scmp.lt.s32.totalorder %s24, 7
        %s2065 = scalar_select %p2064, %s24, 7
        %s2066 = scalar_lea.vmem %s12, %s2065
      $region80: #{forward.2} parent=75 // pred_fallthru
        _
    $region76: #{forward.2} parent=5 // pred_fallthru
      _
  $region6: #{forward.2} parent=0 // loop_footer
    %s22 = sadd.s32 1, %s18
  $region7: #{forward.2} parent=0 // loop_footer_branch
    %17 = sbr.rel target = $region3
  $region8: #{forward.2} parent=0 // loop_exit
    _

</llo_original>
